<compile_context>
chip_gen: v7x
topology: tpu7x:2x2x1
jax: 0.10.0
libtpu: 0.0.40
codegen_flags: <defaults>
</compile_context>

<pallas_src>
import functools
import math

import jax
import jax.numpy as jnp
from jax.experimental import pallas as pl
from jax.experimental.pallas import tpu as pltpu


def _layernorm(x, gamma, beta, eps=1e-5):
    mu = jnp.mean(x, axis=-1, keepdims=True)
    var = jnp.mean(jnp.square(x - mu), axis=-1, keepdims=True)
    return (x - mu) * jax.lax.rsqrt(var + eps) * gamma + beta


def encoder_kernel(tok_ref, emb_ref, pe_ref,
                   wqkv_ref, wo_ref,
                   ln1_g_ref, ln1_b_ref,
                   w1_ref, b1_ref, w2_ref, b2_ref,
                   ln2_g_ref, ln2_b_ref,
                   o_ref, x_ref, *, head_num):
    layer = pl.program_id(1)
    n_layers = pl.num_programs(1)
    seq, dim = x_ref.shape
    hd = dim // head_num
    vocab = emb_ref.shape[0]
    inv_scale = 1.0 / math.sqrt(hd)          # QK / sqrt(dim // head_num)
    f32, bf16 = jnp.float32, jnp.bfloat16

    # ---- layer 0: embedding (one-hot matmul, sqrt(dim) pre-folded) + PE[batch] --------
    @pl.when(layer == 0)
    def _embed():
        tok = tok_ref[...]                                            # (S, 1) int32
        ids = jax.lax.broadcasted_iota(jnp.int32, (seq, vocab), 1)
        onehot = (tok == ids).astype(f32)                             # (S, V)
        emb = jnp.dot(onehot, emb_ref[...], preferred_element_type=f32)
        x_ref[...] = emb + pe_ref[0]          # PE row of this *batch*, broadcast over seq

    x = x_ref[...]                                                    # (S, D) f32
    x16 = x.astype(bf16)

    # ---- multi-head attention -----------------------------------------------------------
    wq = wqkv_ref[0, 0]                                               # (D, D) bf16
    wk = wqkv_ref[0, 1]
    wv = wqkv_ref[0, 2]
    q = jnp.dot(x16, wq, preferred_element_type=f32)                  # (S, D) f32
    k = jnp.dot(x16, wk, preferred_element_type=f32)
    v = jnp.dot(x16, wv, preferred_element_type=f32)

    # Contiguous-column head split expressed as a (H, D) 0/1 mask -> no lane slicing.
    col = jax.lax.broadcasted_iota(jnp.int32, (head_num, dim), 1)
    row = jax.lax.broadcasted_iota(jnp.int32, (head_num, dim), 0)
    head_mask = jnp.logical_and(col >= row * hd, col < (row + 1) * hd)
    mask_f = head_mask.astype(f32)                                    # (H, D)

    qh = q.astype(bf16)[None, :, :] * head_mask.astype(bf16)[:, None, :]   # (H, S, D)
    kh = jnp.broadcast_to(k.astype(bf16)[None, :, :], (head_num, seq, dim))
    vh = jnp.broadcast_to(v.astype(bf16)[None, :, :], (head_num, seq, dim))

    s = jnp.einsum('hsd,htd->hst', qh, kh,
                   preferred_element_type=f32) * inv_scale            # (H, S, S) f32
    s = s - jnp.max(s, axis=-1, keepdims=True)                        # softmax over keys
    p = jnp.exp(s)
    p = p * pl.reciprocal(jnp.sum(p, axis=-1, keepdims=True), approx=False)
    ctx = jnp.einsum('hst,htd->hsd', p.astype(bf16), vh,
                     preferred_element_type=f32)                      # (H, S, D) f32
    # concat_head == keep each head's own columns and sum over heads (VPU only).
    ctx_cat = jnp.sum(ctx * mask_f[:, None, :], axis=0)               # (S, D) f32
    attn = jnp.dot(ctx_cat.astype(bf16), wo_ref[0],
                   preferred_element_type=f32)                        # (S, D) f32

    # residual + layernorm 1 (dropout == identity in eval mode)
    x1 = _layernorm(attn + x, ln1_g_ref[0], ln1_b_ref[0])

    # FeedForward: dim -> hidden -> dim, ReLU
    h1 = jnp.dot(x1.astype(bf16), w1_ref[0], preferred_element_type=f32) + b1_ref[0]
    h1 = jnp.maximum(h1, 0.0)
    ff = jnp.dot(h1.astype(bf16), w2_ref[0], preferred_element_type=f32) + b2_ref[0]

    # residual + layernorm 2
    x2 = _layernorm(ff + x1, ln2_g_ref[0], ln2_b_ref[0])
    x_ref[...] = x2

    @pl.when(layer == n_layers - 1)
    def _store():
        o_ref[...] = x2.astype(o_ref.dtype)


def encoder_forward(tokens, params, *, head_num):
    B, S = tokens.shape
    V, D = params['embed'].shape
    L = params['wqkv'].shape[0]
    hidden = params['w1'].shape[2]
    tok2d = tokens.reshape(B * S, 1).astype(jnp.int32)

    out = pl.pallas_call(
        functools.partial(encoder_kernel, head_num=head_num),
        out_shape=jax.ShapeDtypeStruct((B * S, D), jnp.float32),
        grid_spec=pltpu.PrefetchScalarGridSpec(
            num_scalar_prefetch=0,
            grid=(B, L),                                    # (batch: parallel, layer: arbitrary)
            in_specs=[
                pl.BlockSpec((S, 1), lambda b, l: (b, 0)),              # token ids of batch b
                pl.BlockSpec((V, D), lambda b, l: (0, 0)),              # embedding table (resident)
                pl.BlockSpec((1, 1, D), lambda b, l: (b, 0, 0)),        # PE row (batch-indexed!)
                pl.BlockSpec((1, 3, D, D), lambda b, l: (l, 0, 0, 0)),  # packed Wq/Wk/Wv (streamed)
                pl.BlockSpec((1, D, D), lambda b, l: (l, 0, 0)),        # Wo
                pl.BlockSpec((1, 1, D), lambda b, l: (l, 0, 0)),        # LN1 gamma
                pl.BlockSpec((1, 1, D), lambda b, l: (l, 0, 0)),        # LN1 beta
                pl.BlockSpec((1, D, hidden), lambda b, l: (l, 0, 0)),   # FF W1
                pl.BlockSpec((1, 1, hidden), lambda b, l: (l, 0, 0)),   # FF b1
                pl.BlockSpec((1, hidden, D), lambda b, l: (l, 0, 0)),   # FF W2
                pl.BlockSpec((1, 1, D), lambda b, l: (l, 0, 0)),        # FF b2
                pl.BlockSpec((1, 1, D), lambda b, l: (l, 0, 0)),        # LN2 gamma
                pl.BlockSpec((1, 1, D), lambda b, l: (l, 0, 0)),        # LN2 beta
            ],
            out_specs=pl.BlockSpec((S, D), lambda b, l: (b, 0)),
            scratch_shapes=[pltpu.VMEM((S, D), jnp.float32)],           # resident activation
        ),
        compiler_params=pltpu.CompilerParams(
            dimension_semantics=("parallel", "arbitrary")),
    )(tok2d, params['embed'], params['pe'],
      params['wqkv'], params['wo'],
      params['ln1_g'], params['ln1_b'],
      params['w1'], params['b1'], params['w2'], params['b2'],
      params['ln2_g'], params['ln2_b'])
    return out.reshape(B, S, D)


def init_params(key, vocab, dim, head_num, hidden=2048, max_len=64, n_blocks=6):
    keys = iter(jax.random.split(key, 8 * n_blocks + 4))

    def w(shape, scale=0.02):
        return (scale * jax.random.normal(next(keys), shape)).astype(jnp.float32)

    # Embedding table, with the * sqrt(dim) scale folded in at init time.
    embed = (jax.random.normal(next(keys), (vocab, dim)) * math.sqrt(dim)).astype(jnp.float32)

    # PositionalEncoding buffer: pe[max_len, 1, dim] with interleaved sin/cos.
    position = jnp.arange(max_len, dtype=jnp.float32)[:, None]
    div_term = jnp.exp(jnp.arange(0, dim, 2, dtype=jnp.float32)
                       * (-math.log(10000.0) / dim))
    pe = jnp.zeros((max_len, 1, dim), jnp.float32)
    pe = pe.at[:, 0, 0::2].set(jnp.sin(position * div_term))
    pe = pe.at[:, 0, 1::2].set(jnp.cos(position * div_term))

    wqkv, wo, w1s, w2s = [], [], [], []
    for _ in range(n_blocks):
        wqkv.append(jnp.stack([w((dim, dim)), w((dim, dim)), w((dim, dim))], axis=0))
        wo.append(w((dim, dim)))
        w1s.append(w((dim, hidden)))
        w2s.append(w((hidden, dim)))

    params = dict(
        embed=embed,
        pe=pe,
        # Matmul operands stored in bf16 (MXU-native); biases / LN params stay f32.
        wqkv=jnp.stack(wqkv).astype(jnp.bfloat16),          # (L, 3, D, D)
        wo=jnp.stack(wo).astype(jnp.bfloat16),              # (L, D, D)
        w1=jnp.stack(w1s).astype(jnp.bfloat16),             # (L, D, hidden)
        b1=jnp.zeros((n_blocks, 1, hidden), jnp.float32),
        w2=jnp.stack(w2s).astype(jnp.bfloat16),             # (L, hidden, D)
        b2=jnp.zeros((n_blocks, 1, dim), jnp.float32),
        ln1_g=jnp.ones((n_blocks, 1, dim), jnp.float32),
        ln1_b=jnp.zeros((n_blocks, 1, dim), jnp.float32),
        ln2_g=jnp.ones((n_blocks, 1, dim), jnp.float32),
        ln2_b=jnp.zeros((n_blocks, 1, dim), jnp.float32),
    )
    return params


if __name__ == "__main__":
    VOCAB, DIM, HEADS = 50, 32, 4
    B, S = 2, 8

    key = jax.random.PRNGKey(0)
    k_tok, k_par = jax.random.split(key)
    tokens = jax.random.randint(k_tok, (B, S), 0, VOCAB, dtype=jnp.int32)
    params = init_params(k_par, VOCAB, DIM, HEADS)

    fwd = jax.jit(encoder_forward, static_argnames=("head_num",))
    out = fwd(tokens, params, head_num=HEADS)
    jax.block_until_ready(out)
    assert out.shape == (B, S, DIM) and out.dtype == jnp.float32
    assert bool(jnp.all(jnp.isfinite(out)))
    print("KERNEL_OK")
</pallas_src>

<mosaic_0001>
module attributes {stable_mosaic.version = 11 : i64} {
  func.func @encoder_kernel(%arg0: i32, %arg1: i32, %arg2: memref<8x1xi32, #tpu.memory_space<vmem>>, %arg3: memref<50x32xf32, #tpu.memory_space<vmem>>, %arg4: memref<1x1x32xf32, #tpu.memory_space<vmem>>, %arg5: memref<1x3x32x32xbf16, #tpu.memory_space<vmem>>, %arg6: memref<1x32x32xbf16, #tpu.memory_space<vmem>>, %arg7: memref<1x1x32xf32, #tpu.memory_space<vmem>>, %arg8: memref<1x1x32xf32, #tpu.memory_space<vmem>>, %arg9: memref<1x32x2048xbf16, #tpu.memory_space<vmem>>, %arg10: memref<1x1x2048xf32, #tpu.memory_space<vmem>>, %arg11: memref<1x2048x32xbf16, #tpu.memory_space<vmem>>, %arg12: memref<1x1x32xf32, #tpu.memory_space<vmem>>, %arg13: memref<1x1x32xf32, #tpu.memory_space<vmem>>, %arg14: memref<1x1x32xf32, #tpu.memory_space<vmem>>, %arg15: memref<8x32xf32, #tpu.memory_space<vmem>>, %arg16: memref<8x32xf32, #tpu.memory_space<vmem>>) attributes {dimension_semantics = [#tpu.dimension_semantics<parallel>, #tpu.dimension_semantics<arbitrary>], iteration_bounds = array<i64: 2, 6>, scalar_prefetch = 0 : i64, scratch_operands = 1 : i64, tpu.core_type = #tpu.core_type<tc>, window_params = [{transform_indices = @transform_0, window_bounds = array<i64: 8, 1>}, {pipeline_mode = #tpu.pipeline_mode<synchronous>, transform_indices = @transform_1, window_bounds = array<i64: 50, 32>}, {transform_indices = @transform_2, window_bounds = array<i64: 1, 1, 32>}, {transform_indices = @transform_3, window_bounds = array<i64: 1, 3, 32, 32>}, {transform_indices = @transform_4, window_bounds = array<i64: 1, 32, 32>}, {transform_indices = @transform_5, window_bounds = array<i64: 1, 1, 32>}, {transform_indices = @transform_6, window_bounds = array<i64: 1, 1, 32>}, {transform_indices = @transform_7, window_bounds = array<i64: 1, 32, 2048>}, {transform_indices = @transform_8, window_bounds = array<i64: 1, 1, 2048>}, {transform_indices = @transform_9, window_bounds = array<i64: 1, 2048, 32>}, {transform_indices = @transform_10, window_bounds = array<i64: 1, 1, 32>}, {transform_indices = @transform_11, window_bounds = array<i64: 1, 1, 32>}, {transform_indices = @transform_12, window_bounds = array<i64: 1, 1, 32>}, {transform_indices = @transform_13, window_bounds = array<i64: 8, 32>}]} {
    %c0_i32 = arith.constant 0 : i32
    %0 = arith.cmpi eq, %arg1, %c0_i32 : i32
    %1 = arith.extui %0 : i1 to i32
    %c0_i32_0 = arith.constant 0 : i32
    %2 = arith.cmpi ne, %1, %c0_i32_0 : i32
    scf.if %2 {
      %c0_65 = arith.constant 0 : index
      %c0_66 = arith.constant 0 : index
      %143 = vector.load %arg2[%c0_65, %c0_66] : memref<8x1xi32, #tpu.memory_space<vmem>>, vector<8x1xi32>
      %144 = tpu.iota {dimensions = array<i32: 1>} : vector<8x50xi32>
      %145 = vector.broadcast %143 : vector<8x1xi32> to vector<8x50xi32>
      %146 = arith.cmpi eq, %145, %144 : vector<8x50xi32>
      %147 = arith.extui %146 : vector<8x50xi1> to vector<8x50xi32>
      %148 = arith.sitofp %147 : vector<8x50xi32> to vector<8x50xf32>
      %c0_67 = arith.constant 0 : index
      %c0_68 = arith.constant 0 : index
      %149 = vector.load %arg3[%c0_67, %c0_68] : memref<50x32xf32, #tpu.memory_space<vmem>>, vector<50x32xf32>
      %cst_69 = arith.constant dense<0.000000e+00> : vector<8x32xf32>
      %150 = tpu.matmul %148, %149, %cst_69 {dimension_numbers = #tpu.dot_dimension_numbers<[1], [0], [0], [1], [0, 0, 1, 1], [], []>} : vector<8x50xf32>, vector<50x32xf32>, vector<8x32xf32> -> vector<8x32xf32>
      %c0_70 = arith.constant 0 : index
      %c0_71 = arith.constant 0 : index
      %c0_72 = arith.constant 0 : index
      %151 = vector.load %arg4[%c0_70, %c0_71, %c0_72] : memref<1x1x32xf32, #tpu.memory_space<vmem>>, vector<1x1x32xf32>
      %152 = vector.shape_cast %151 : vector<1x1x32xf32> to vector<1x32xf32>
      %153 = vector.broadcast %152 : vector<1x32xf32> to vector<8x32xf32>
      %154 = arith.addf %150, %153 : vector<8x32xf32>
      %c0_73 = arith.constant 0 : index
      %c0_74 = arith.constant 0 : index
      %155 = vector.load %arg16[%c0_73, %c0_74] : memref<8x32xf32, #tpu.memory_space<vmem>>, vector<8x32xf32>
      tpu.vector_store %arg16[%c0_73, %c0_74], %154 {strides = array<i32>} : memref<8x32xf32, #tpu.memory_space<vmem>>, vector<8x32xf32>,
    } else {
    }
    %c0 = arith.constant 0 : index
    %c0_1 = arith.constant 0 : index
    %3 = vector.load %arg16[%c0, %c0_1] : memref<8x32xf32, #tpu.memory_space<vmem>>, vector<8x32xf32>
    %4 = arith.truncf %3 : vector<8x32xf32> to vector<8x32xbf16>
    %c0_2 = arith.constant 0 : index
    %c0_3 = arith.constant 0 : index
    %c0_4 = arith.constant 0 : index
    %c0_5 = arith.constant 0 : index
    %5 = vector.load %arg5[%c0_2, %c0_3, %c0_4, %c0_5] : memref<1x3x32x32xbf16, #tpu.memory_space<vmem>>, vector<1x1x32x32xbf16>
    %6 = vector.shape_cast %5 : vector<1x1x32x32xbf16> to vector<32x32xbf16>
    %c0_6 = arith.constant 0 : index
    %c1 = arith.constant 1 : index
    %c0_7 = arith.constant 0 : index
    %c0_8 = arith.constant 0 : index
    %7 = vector.load %arg5[%c0_6, %c1, %c0_7, %c0_8] : memref<1x3x32x32xbf16, #tpu.memory_space<vmem>>, vector<1x1x32x32xbf16>
    %8 = vector.shape_cast %7 : vector<1x1x32x32xbf16> to vector<32x32xbf16>
    %c0_9 = arith.constant 0 : index
    %c2 = arith.constant 2 : index
    %c0_10 = arith.constant 0 : index
    %c0_11 = arith.constant 0 : index
    %9 = vector.load %arg5[%c0_9, %c2, %c0_10, %c0_11] : memref<1x3x32x32xbf16, #tpu.memory_space<vmem>>, vector<1x1x32x32xbf16>
    %10 = vector.shape_cast %9 : vector<1x1x32x32xbf16> to vector<32x32xbf16>
    %cst = arith.constant dense<0.000000e+00> : vector<8x32xf32>
    %11 = tpu.matmul %4, %6, %cst {dimension_numbers = #tpu.dot_dimension_numbers<[1], [0], [0], [1], [0, 0, 1, 1], [], []>} : vector<8x32xbf16>, vector<32x32xbf16>, vector<8x32xf32> -> vector<8x32xf32>
    %cst_12 = arith.constant dense<0.000000e+00> : vector<8x32xf32>
    %12 = tpu.matmul %4, %8, %cst_12 {dimension_numbers = #tpu.dot_dimension_numbers<[1], [0], [0], [1], [0, 0, 1, 1], [], []>} : vector<8x32xbf16>, vector<32x32xbf16>, vector<8x32xf32> -> vector<8x32xf32>
    %cst_13 = arith.constant dense<0.000000e+00> : vector<8x32xf32>
    %13 = tpu.matmul %4, %10, %cst_13 {dimension_numbers = #tpu.dot_dimension_numbers<[1], [0], [0], [1], [0, 0, 1, 1], [], []>} : vector<8x32xbf16>, vector<32x32xbf16>, vector<8x32xf32> -> vector<8x32xf32>
    %14 = tpu.iota {dimensions = array<i32: 1>} : vector<4x32xi32>
    %15 = tpu.iota {dimensions = array<i32: 0>} : vector<4x32xi32>
    %c8_i32 = arith.constant 8 : i32
    %16 = vector.broadcast %c8_i32 : i32 to vector<4x32xi32>
    %17 = arith.muli %15, %16 : vector<4x32xi32>
    %18 = arith.cmpi sge, %14, %17 : vector<4x32xi32>
    %c1_i32 = arith.constant 1 : i32
    %19 = vector.broadcast %c1_i32 : i32 to vector<4x32xi32>
    %20 = arith.addi %15, %19 : vector<4x32xi32>
    %c8_i32_14 = arith.constant 8 : i32
    %21 = vector.broadcast %c8_i32_14 : i32 to vector<4x32xi32>
    %22 = arith.muli %20, %21 : vector<4x32xi32>
    %23 = arith.cmpi slt, %14, %22 : vector<4x32xi32>
    %24 = arith.andi %18, %23 : vector<4x32xi1>
    %25 = arith.extui %24 : vector<4x32xi1> to vector<4x32xi32>
    %26 = arith.sitofp %25 : vector<4x32xi32> to vector<4x32xf32>
    %27 = arith.truncf %11 : vector<8x32xf32> to vector<8x32xbf16>
    %28 = vector.shape_cast %27 : vector<8x32xbf16> to vector<1x8x32xbf16>
    %29 = arith.extui %24 : vector<4x32xi1> to vector<4x32xi32>
    %30 = arith.sitofp %29 : vector<4x32xi32> to vector<4x32xf32>
    %31 = arith.truncf %30 : vector<4x32xf32> to vector<4x32xbf16>
    %32 = vector.shape_cast %31 : vector<4x32xbf16> to vector<4x1x32xbf16>
    %33 = vector.broadcast %28 : vector<1x8x32xbf16> to vector<4x8x32xbf16>
    %34 = vector.broadcast %32 : vector<4x1x32xbf16> to vector<4x8x32xbf16>
    %35 = arith.mulf %33, %34 : vector<4x8x32xbf16>
    %36 = arith.truncf %12 : vector<8x32xf32> to vector<8x32xbf16>
    %37 = vector.shape_cast %36 : vector<8x32xbf16> to vector<1x8x32xbf16>
    %38 = vector.shape_cast %37 : vector<1x8x32xbf16> to vector<1x8x32xbf16>
    %39 = vector.broadcast %38 : vector<1x8x32xbf16> to vector<4x8x32xbf16>
    %40 = arith.truncf %13 : vector<8x32xf32> to vector<8x32xbf16>
    %41 = vector.shape_cast %40 : vector<8x32xbf16> to vector<1x8x32xbf16>
    %42 = vector.shape_cast %41 : vector<1x8x32xbf16> to vector<1x8x32xbf16>
    %43 = vector.broadcast %42 : vector<1x8x32xbf16> to vector<4x8x32xbf16>
    "tpu.trace_start"() <{level = 10 : i32, message = "hsd,htd->hst"}> : () -> ()
    %cst_15 = arith.constant dense<0.000000e+00> : vector<4x8x8xf32>
    %44 = tpu.matmul %35, %39, %cst_15 {dimension_numbers = #tpu.dot_dimension_numbers<[2], [2], [1], [1], [0, 0, 0, 1, 1, 1], [0], [0]>} : vector<4x8x32xbf16>, vector<4x8x32xbf16>, vector<4x8x8xf32> -> vector<4x8x8xf32>
    "tpu.trace_stop"() : () -> ()
    %cst_16 = arith.constant 0.353553385 : f32
    %45 = vector.broadcast %cst_16 : f32 to vector<4x8x8xf32>
    %46 = arith.mulf %44, %45 : vector<4x8x8xf32>
    %cst_17 = arith.constant dense<0xFF800000> : vector<4x8xf32>
    %47 = vector.multi_reduction <maximumf>, %46, %cst_17 [2] : vector<4x8x8xf32> to vector<4x8xf32>
    %48 = vector.shape_cast %47 : vector<4x8xf32> to vector<4x8x1xf32>
    %49 = vector.broadcast %48 : vector<4x8x1xf32> to vector<4x8x8xf32>
    %50 = arith.subf %46, %49 : vector<4x8x8xf32>
    %51 = math.exp %50 : vector<4x8x8xf32>
    %cst_18 = arith.constant dense<0.000000e+00> : vector<4x8xf32>
    %52 = vector.multi_reduction <add>, %51, %cst_18 [2] : vector<4x8x8xf32> to vector<4x8xf32>
    %53 = vector.shape_cast %52 : vector<4x8xf32> to vector<4x8x1xf32>
    %54 = tpu.reciprocal %53 : vector<4x8x1xf32> -> vector<4x8x1xf32>
    %55 = vector.broadcast %54 : vector<4x8x1xf32> to vector<4x8x8xf32>
    %56 = arith.mulf %51, %55 : vector<4x8x8xf32>
    %57 = arith.truncf %56 : vector<4x8x8xf32> to vector<4x8x8xbf16>
    "tpu.trace_start"() <{level = 10 : i32, message = "hst,htd->hsd"}> : () -> ()
    %cst_19 = arith.constant dense<0.000000e+00> : vector<4x8x32xf32>
    %58 = tpu.matmul %57, %43, %cst_19 {dimension_numbers = #tpu.dot_dimension_numbers<[2], [1], [1], [2], [0, 0, 0, 1, 1, 2], [0], [0]>} : vector<4x8x8xbf16>, vector<4x8x32xbf16>, vector<4x8x32xf32> -> vector<4x8x32xf32>
    "tpu.trace_stop"() : () -> ()
    %59 = vector.shape_cast %26 : vector<4x32xf32> to vector<4x1x32xf32>
    %60 = vector.broadcast %59 : vector<4x1x32xf32> to vector<4x8x32xf32>
    %61 = arith.mulf %58, %60 : vector<4x8x32xf32>
    %cst_20 = arith.constant dense<0.000000e+00> : vector<8x32xf32>
    %62 = vector.multi_reduction <add>, %61, %cst_20 [0] : vector<4x8x32xf32> to vector<8x32xf32>
    %63 = arith.truncf %62 : vector<8x32xf32> to vector<8x32xbf16>
    %c0_21 = arith.constant 0 : index
    %c0_22 = arith.constant 0 : index
    %c0_23 = arith.constant 0 : index
    %64 = vector.load %arg6[%c0_21, %c0_22, %c0_23] : memref<1x32x32xbf16, #tpu.memory_space<vmem>>, vector<1x32x32xbf16>
    %65 = vector.shape_cast %64 : vector<1x32x32xbf16> to vector<32x32xbf16>
    %cst_24 = arith.constant dense<0.000000e+00> : vector<8x32xf32>
    %66 = tpu.matmul %63, %65, %cst_24 {dimension_numbers = #tpu.dot_dimension_numbers<[1], [0], [0], [1], [0, 0, 1, 1], [], []>} : vector<8x32xbf16>, vector<32x32xbf16>, vector<8x32xf32> -> vector<8x32xf32>
    %67 = arith.addf %66, %3 : vector<8x32xf32>
    %c0_25 = arith.constant 0 : index
    %c0_26 = arith.constant 0 : index
    %c0_27 = arith.constant 0 : index
    %68 = vector.load %arg7[%c0_25, %c0_26, %c0_27] : memref<1x1x32xf32, #tpu.memory_space<vmem>>, vector<1x1x32xf32>
    %69 = vector.shape_cast %68 : vector<1x1x32xf32> to vector<1x32xf32>
    %c0_28 = arith.constant 0 : index
    %c0_29 = arith.constant 0 : index
    %c0_30 = arith.constant 0 : index
    %70 = vector.load %arg8[%c0_28, %c0_29, %c0_30] : memref<1x1x32xf32, #tpu.memory_space<vmem>>, vector<1x1x32xf32>
    %71 = vector.shape_cast %70 : vector<1x1x32xf32> to vector<1x32xf32>
    %cst_31 = arith.constant dense<0.000000e+00> : vector<8xf32>
    %72 = vector.multi_reduction <add>, %67, %cst_31 [1] : vector<8x32xf32> to vector<8xf32>
    %73 = vector.shape_cast %72 : vector<8xf32> to vector<8x1xf32>
    %cst_32 = arith.constant 3.200000e+01 : f32
    %74 = vector.broadcast %cst_32 : f32 to vector<8x1xf32>
    %75 = arith.divf %73, %74 : vector<8x1xf32>
    %76 = vector.broadcast %75 : vector<8x1xf32> to vector<8x32xf32>
    %77 = arith.subf %67, %76 : vector<8x32xf32>
    %78 = arith.mulf %77, %77 : vector<8x32xf32>
    %cst_33 = arith.constant dense<0.000000e+00> : vector<8xf32>
    %79 = vector.multi_reduction <add>, %78, %cst_33 [1] : vector<8x32xf32> to vector<8xf32>
    %80 = vector.shape_cast %79 : vector<8xf32> to vector<8x1xf32>
    %cst_34 = arith.constant 3.200000e+01 : f32
    %81 = vector.broadcast %cst_34 : f32 to vector<8x1xf32>
    %82 = arith.divf %80, %81 : vector<8x1xf32>
    %83 = vector.broadcast %75 : vector<8x1xf32> to vector<8x32xf32>
    %84 = arith.subf %67, %83 : vector<8x32xf32>
    %cst_35 = arith.constant 9.99999974E-6 : f32
    %85 = vector.broadcast %cst_35 : f32 to vector<8x1xf32>
    %86 = arith.addf %82, %85 : vector<8x1xf32>
    %87 = math.rsqrt %86 : vector<8x1xf32>
    %88 = vector.broadcast %87 : vector<8x1xf32> to vector<8x32xf32>
    %89 = arith.mulf %84, %88 : vector<8x32xf32>
    %90 = vector.broadcast %69 : vector<1x32xf32> to vector<8x32xf32>
    %91 = arith.mulf %89, %90 : vector<8x32xf32>
    %92 = vector.broadcast %71 : vector<1x32xf32> to vector<8x32xf32>
    %93 = arith.addf %91, %92 : vector<8x32xf32>
    %94 = arith.truncf %93 : vector<8x32xf32> to vector<8x32xbf16>
    %c0_36 = arith.constant 0 : index
    %c0_37 = arith.constant 0 : index
    %c0_38 = arith.constant 0 : index
    %95 = vector.load %arg9[%c0_36, %c0_37, %c0_38] : memref<1x32x2048xbf16, #tpu.memory_space<vmem>>, vector<1x32x2048xbf16>
    %96 = vector.shape_cast %95 : vector<1x32x2048xbf16> to vector<32x2048xbf16>
    %cst_39 = arith.constant dense<0.000000e+00> : vector<8x2048xf32>
    %97 = tpu.matmul %94, %96, %cst_39 {dimension_numbers = #tpu.dot_dimension_numbers<[1], [0], [0], [1], [0, 0, 1, 1], [], []>} : vector<8x32xbf16>, vector<32x2048xbf16>, vector<8x2048xf32> -> vector<8x2048xf32>
    %c0_40 = arith.constant 0 : index
    %c0_41 = arith.constant 0 : index
    %c0_42 = arith.constant 0 : index
    %98 = vector.load %arg10[%c0_40, %c0_41, %c0_42] : memref<1x1x2048xf32, #tpu.memory_space<vmem>>, vector<1x1x2048xf32>
    %99 = vector.shape_cast %98 : vector<1x1x2048xf32> to vector<1x2048xf32>
    %100 = vector.broadcast %99 : vector<1x2048xf32> to vector<8x2048xf32>
    %101 = arith.addf %97, %100 : vector<8x2048xf32>
    %cst_43 = arith.constant 0.000000e+00 : f32
    %102 = vector.broadcast %cst_43 : f32 to vector<8x2048xf32>
    %103 = arith.maximumf %101, %102 : vector<8x2048xf32>
    %104 = arith.truncf %103 : vector<8x2048xf32> to vector<8x2048xbf16>
    %c0_44 = arith.constant 0 : index
    %c0_45 = arith.constant 0 : index
    %c0_46 = arith.constant 0 : index
    %105 = vector.load %arg11[%c0_44, %c0_45, %c0_46] : memref<1x2048x32xbf16, #tpu.memory_space<vmem>>, vector<1x2048x32xbf16>
    %106 = vector.shape_cast %105 : vector<1x2048x32xbf16> to vector<2048x32xbf16>
    %cst_47 = arith.constant dense<0.000000e+00> : vector<8x32xf32>
    %107 = tpu.matmul %104, %106, %cst_47 {dimension_numbers = #tpu.dot_dimension_numbers<[1], [0], [0], [1], [0, 0, 1, 1], [], []>} : vector<8x2048xbf16>, vector<2048x32xbf16>, vector<8x32xf32> -> vector<8x32xf32>
    %c0_48 = arith.constant 0 : index
    %c0_49 = arith.constant 0 : index
    %c0_50 = arith.constant 0 : index
    %108 = vector.load %arg12[%c0_48, %c0_49, %c0_50] : memref<1x1x32xf32, #tpu.memory_space<vmem>>, vector<1x1x32xf32>
    %109 = vector.shape_cast %108 : vector<1x1x32xf32> to vector<1x32xf32>
    %110 = vector.broadcast %109 : vector<1x32xf32> to vector<8x32xf32>
    %111 = arith.addf %107, %110 : vector<8x32xf32>
    %112 = arith.addf %111, %93 : vector<8x32xf32>
    %c0_51 = arith.constant 0 : index
    %c0_52 = arith.constant 0 : index
    %c0_53 = arith.constant 0 : index
    %113 = vector.load %arg13[%c0_51, %c0_52, %c0_53] : memref<1x1x32xf32, #tpu.memory_space<vmem>>, vector<1x1x32xf32>
    %114 = vector.shape_cast %113 : vector<1x1x32xf32> to vector<1x32xf32>
    %c0_54 = arith.constant 0 : index
    %c0_55 = arith.constant 0 : index
    %c0_56 = arith.constant 0 : index
    %115 = vector.load %arg14[%c0_54, %c0_55, %c0_56] : memref<1x1x32xf32, #tpu.memory_space<vmem>>, vector<1x1x32xf32>
    %116 = vector.shape_cast %115 : vector<1x1x32xf32> to vector<1x32xf32>
    %cst_57 = arith.constant dense<0.000000e+00> : vector<8xf32>
    %117 = vector.multi_reduction <add>, %112, %cst_57 [1] : vector<8x32xf32> to vector<8xf32>
    %118 = vector.shape_cast %117 : vector<8xf32> to vector<8x1xf32>
    %cst_58 = arith.constant 3.200000e+01 : f32
    %119 = vector.broadcast %cst_58 : f32 to vector<8x1xf32>
    %120 = arith.divf %118, %119 : vector<8x1xf32>
    %121 = vector.broadcast %120 : vector<8x1xf32> to vector<8x32xf32>
    %122 = arith.subf %112, %121 : vector<8x32xf32>
    %123 = arith.mulf %122, %122 : vector<8x32xf32>
    %cst_59 = arith.constant dense<0.000000e+00> : vector<8xf32>
    %124 = vector.multi_reduction <add>, %123, %cst_59 [1] : vector<8x32xf32> to vector<8xf32>
    %125 = vector.shape_cast %124 : vector<8xf32> to vector<8x1xf32>
    %cst_60 = arith.constant 3.200000e+01 : f32
    %126 = vector.broadcast %cst_60 : f32 to vector<8x1xf32>
    %127 = arith.divf %125, %126 : vector<8x1xf32>
    %128 = vector.broadcast %120 : vector<8x1xf32> to vector<8x32xf32>
    %129 = arith.subf %112, %128 : vector<8x32xf32>
    %cst_61 = arith.constant 9.99999974E-6 : f32
    %130 = vector.broadcast %cst_61 : f32 to vector<8x1xf32>
    %131 = arith.addf %127, %130 : vector<8x1xf32>
    %132 = math.rsqrt %131 : vector<8x1xf32>
    %133 = vector.broadcast %132 : vector<8x1xf32> to vector<8x32xf32>
    %134 = arith.mulf %129, %133 : vector<8x32xf32>
    %135 = vector.broadcast %114 : vector<1x32xf32> to vector<8x32xf32>
    %136 = arith.mulf %134, %135 : vector<8x32xf32>
    %137 = vector.broadcast %116 : vector<1x32xf32> to vector<8x32xf32>
    %138 = arith.addf %136, %137 : vector<8x32xf32>
    %c0_62 = arith.constant 0 : index
    %c0_63 = arith.constant 0 : index
    %139 = vector.load %arg16[%c0_62, %c0_63] : memref<8x32xf32, #tpu.memory_space<vmem>>, vector<8x32xf32>
    tpu.vector_store %arg16[%c0_62, %c0_63], %138 {strides = array<i32>} : memref<8x32xf32, #tpu.memory_space<vmem>>, vector<8x32xf32>,
    %c5_i32 = arith.constant 5 : i32
    %140 = arith.cmpi eq, %arg1, %c5_i32 : i32
    %141 = arith.extui %140 : i1 to i32
    %c0_i32_64 = arith.constant 0 : i32
    %142 = arith.cmpi ne, %141, %c0_i32_64 : i32
    scf.if %142 {
      %c0_65 = arith.constant 0 : index
      %c0_66 = arith.constant 0 : index
      %143 = vector.load %arg15[%c0_65, %c0_66] : memref<8x32xf32, #tpu.memory_space<vmem>>, vector<8x32xf32>
      tpu.vector_store %arg15[%c0_65, %c0_66], %138 {strides = array<i32>} : memref<8x32xf32, #tpu.memory_space<vmem>>, vector<8x32xf32>,
    } else {
    }
    return
  }
  func.func @transform_0(%arg0: i32, %arg1: i32) -> (i32, i32) {
    %c0_i32 = arith.constant 0 : i32
    %c0_i32_0 = arith.constant 0 : i32
    return %arg0, %c0_i32 : i32, i32
  }
  func.func @transform_1(%arg0: i32, %arg1: i32) -> (i32, i32) {
    %c0_i32 = arith.constant 0 : i32
    %c0_i32_0 = arith.constant 0 : i32
    %c0_i32_1 = arith.constant 0 : i32
    return %c0_i32, %c0_i32_0 : i32, i32
  }
  func.func @transform_2(%arg0: i32, %arg1: i32) -> (i32, i32, i32) {
    %c0_i32 = arith.constant 0 : i32
    %c0_i32_0 = arith.constant 0 : i32
    %c0_i32_1 = arith.constant 0 : i32
    return %arg0, %c0_i32, %c0_i32_0 : i32, i32, i32
  }
  func.func @transform_3(%arg0: i32, %arg1: i32) -> (i32, i32, i32, i32) {
    %c0_i32 = arith.constant 0 : i32
    %c0_i32_0 = arith.constant 0 : i32
    %c0_i32_1 = arith.constant 0 : i32
    %c0_i32_2 = arith.constant 0 : i32
    return %arg1, %c0_i32, %c0_i32_0, %c0_i32_1 : i32, i32, i32, i32
  }
  func.func @transform_4(%arg0: i32, %arg1: i32) -> (i32, i32, i32) {
    %c0_i32 = arith.constant 0 : i32
    %c0_i32_0 = arith.constant 0 : i32
    %c0_i32_1 = arith.constant 0 : i32
    return %arg1, %c0_i32, %c0_i32_0 : i32, i32, i32
  }
  func.func @transform_5(%arg0: i32, %arg1: i32) -> (i32, i32, i32) {
    %c0_i32 = arith.constant 0 : i32
    %c0_i32_0 = arith.constant 0 : i32
    %c0_i32_1 = arith.constant 0 : i32
    return %arg1, %c0_i32, %c0_i32_0 : i32, i32, i32
  }
  func.func @transform_6(%arg0: i32, %arg1: i32) -> (i32, i32, i32) {
    %c0_i32 = arith.constant 0 : i32
    %c0_i32_0 = arith.constant 0 : i32
    %c0_i32_1 = arith.constant 0 : i32
    return %arg1, %c0_i32, %c0_i32_0 : i32, i32, i32
  }
  func.func @transform_7(%arg0: i32, %arg1: i32) -> (i32, i32, i32) {
    %c0_i32 = arith.constant 0 : i32
    %c0_i32_0 = arith.constant 0 : i32
    %c0_i32_1 = arith.constant 0 : i32
    return %arg1, %c0_i32, %c0_i32_0 : i32, i32, i32
  }
  func.func @transform_8(%arg0: i32, %arg1: i32) -> (i32, i32, i32) {
    %c0_i32 = arith.constant 0 : i32
    %c0_i32_0 = arith.constant 0 : i32
    %c0_i32_1 = arith.constant 0 : i32
    return %arg1, %c0_i32, %c0_i32_0 : i32, i32, i32
  }
  func.func @transform_9(%arg0: i32, %arg1: i32) -> (i32, i32, i32) {
    %c0_i32 = arith.constant 0 : i32
    %c0_i32_0 = arith.constant 0 : i32
    %c0_i32_1 = arith.constant 0 : i32
    return %arg1, %c0_i32, %c0_i32_0 : i32, i32, i32
  }
  func.func @transform_10(%arg0: i32, %arg1: i32) -> (i32, i32, i32) {
    %c0_i32 = arith.constant 0 : i32
    %c0_i32_0 = arith.constant 0 : i32
    %c0_i32_1 = arith.constant 0 : i32
    return %arg1, %c0_i32, %c0_i32_0 : i32, i32, i32
  }
  func.func @transform_11(%arg0: i32, %arg1: i32) -> (i32, i32, i32) {
    %c0_i32 = arith.constant 0 : i32
    %c0_i32_0 = arith.constant 0 : i32
    %c0_i32_1 = arith.constant 0 : i32
    return %arg1, %c0_i32, %c0_i32_0 : i32, i32, i32
  }
  func.func @transform_12(%arg0: i32, %arg1: i32) -> (i32, i32, i32) {
    %c0_i32 = arith.constant 0 : i32
    %c0_i32_0 = arith.constant 0 : i32
    %c0_i32_1 = arith.constant 0 : i32
    return %arg1, %c0_i32, %c0_i32_0 : i32, i32, i32
  }
  func.func @transform_13(%arg0: i32, %arg1: i32) -> (i32, i32) {
    %c0_i32 = arith.constant 0 : i32
    %c0_i32_0 = arith.constant 0 : i32
    return %arg0, %c0_i32 : i32, i32
  }
}

</mosaic_0001>

<llo_original>
// kernel: encoder_forward.1
$region0: #{encoder_forward.1}
  #allocation0 [shape = 'u32[]', space=smem, size = 0x4, offset = 0x4, fixed_abs, tag = 'smem constant byte address 0x4 - core index']
  #allocation1 [shape = 'u32[144,128]{1,0:T(1,128)}', space=vmem, size = 0x12000, scoped, tag = 'internal scratch']
  #allocation2 [shape = 'f32[8,32]{1,0:T(8,128)}', space=vmem, size = 0x1000, scoped, tag = 'scratch operand']
  %s0 = inlined_call_operand.vmem [shape: s32[16,1], index: 0, kind: input, shape index: {}]
  %s1 = inlined_call_operand.vmem [shape: f32[50,32], index: 1, kind: input, shape index: {}]
  %s2 = inlined_call_operand.vmem [shape: f32[64,1,32], index: 2, kind: input, shape index: {}]
  %s3 = inlined_call_operand.vmem [shape: bf16[6,3,32,32], index: 3, kind: input, shape index: {}]
  %s4 = inlined_call_operand.vmem [shape: bf16[6,32,32], index: 4, kind: input, shape index: {}]
  %s5 = inlined_call_operand.vmem [shape: f32[6,1,32], index: 5, kind: input, shape index: {}]
  %s6 = inlined_call_operand.vmem [shape: f32[6,1,32], index: 6, kind: input, shape index: {}]
  %s7 = inlined_call_operand.vmem [shape: bf16[6,32,2048], index: 7, kind: input, shape index: {}]
  %s8 = inlined_call_operand.vmem [shape: f32[6,1,2048], index: 8, kind: input, shape index: {}]
  %s9 = inlined_call_operand.vmem [shape: bf16[6,2048,32], index: 9, kind: input, shape index: {}]
  %s10 = inlined_call_operand.vmem [shape: f32[6,1,32], index: 10, kind: input, shape index: {}]
  %s11 = inlined_call_operand.vmem [shape: f32[6,1,32], index: 11, kind: input, shape index: {}]
  %s12 = inlined_call_operand.vmem [shape: f32[6,1,32], index: 12, kind: input, shape index: {}]
  %s13 = inlined_call_operand.hbm [shape: f32[16,32], index: 13, kind: output, shape index: {}]
  %s14 = sld [smem:[#allocation0]]
  $region93: #{encoder_forward.1} parent=0
    _
  %s16 = ssub.s32 1, %s14
  %s17 = scalar_select 0, %s16, %s14
  $region1: #{encoder_forward.1} parent=0
    #allocation3 [shape = 'u8[8192]{0}', space=vmem, size = 0x2000, scoped, tag = 'output window, operand 0']
    #allocation4 [shape = 's32[2]{0}', space=sflag, size = 0x8, scoped, tag = 'scoped memory for encoder_forward.1']
    %18 = vsyncpa [#allocation4], 0
    %s19 = scalar_lea.sflag [#allocation4], 1
    %20 = vsyncpa %s19, 0
    loop: start=0, step=1, limit=14
    $region2: #{encoder_forward.1} parent=1 // loop_pre_header
      _
    $region3: #{encoder_forward.1} parent=1 // loop_header
      %s22 = sphi 0, %s26
      %p23 = scmp.ge.s32.totalorder %s22, 14
      %s29 = sphi 0, %s41
      %s30 = sphi 0, %s37
      %s31 = sphi 0, %s29
      %s32 = sphi 0, %s30
      %s33 = sphi 0, %s31
      %s34 = sphi 0, %s32
      %s44 = sphi 0, %s46
      %s47 = sphi 0, %s44
      %s48 = sphi 0, %s47
      %s64 = sphi 0, %s48
      %s68 = sphi 0, %s68
      %s70 = sphi 0, %s68
      %s71 = sphi 0, %s70
      %s85 = sphi 0, %s71
      %s91 = sphi 0, %s93
      %s94 = sphi 0, %s91
      %s95 = sphi 0, %s94
      %s111 = sphi 0, %s95
      %s117 = sphi 0, %s119
      %s120 = sphi 0, %s117
      %s121 = sphi 0, %s120
      %s137 = sphi 0, %s121
      %s143 = sphi 0, %s145
      %s146 = sphi 0, %s143
      %s147 = sphi 0, %s146
      %s163 = sphi 0, %s147
      %s169 = sphi 0, %s171
      %s172 = sphi 0, %s169
      %s173 = sphi 0, %s172
      %s189 = sphi 0, %s173
      %s195 = sphi 0, %s197
      %s198 = sphi 0, %s195
      %s199 = sphi 0, %s198
      %s215 = sphi 0, %s199
      %s221 = sphi 0, %s223
      %s224 = sphi 0, %s221
      %s225 = sphi 0, %s224
      %s241 = sphi 0, %s225
      %s247 = sphi 0, %s249
      %s250 = sphi 0, %s247
      %s251 = sphi 0, %s250
      %s267 = sphi 0, %s251
      %s273 = sphi 0, %s275
      %s276 = sphi 0, %s273
      %s277 = sphi 0, %s276
      %s293 = sphi 0, %s277
      %s299 = sphi 0, %s301
      %s302 = sphi 0, %s299
      %s303 = sphi 0, %s302
      %s319 = sphi 0, %s303
      %s325 = sphi 0, %s327
      %s328 = sphi 0, %s325
      %s329 = sphi 0, %s328
      %s345 = sphi 0, %s329
      %s351 = sphi 0, %s353
      %s354 = sphi 0, %s351
      %s355 = sphi 0, %s354
      %s371 = sphi 0, %s355
      %s377 = sphi 0, %s379
      %s380 = sphi 0, %s377
      %s381 = sphi 0, %s380
      %s397 = sphi 0, %s381
    $region4: #{encoder_forward.1} parent=1 // loop_header_branch
      %25 = sbr.rel (%p23) target = $region8
    $region5: #{encoder_forward.1} parent=1 // loop_body
      %s27 = ssub.s32 %s22, 1
      %s28 = ssub.s32 %s22, 2
      %s35 = sadd.s32 1, %s30
      %p36 = scmp.ge.s32.totalorder %s35, 6
      %s37 = scalar_select %p36, 0, %s35
      %s38 = sadd.s32 1, %s29
      %s39 = scalar_select %p36, %s38, %s29
      %p40 = scmp.ge.s32.totalorder %s39, 2
      %s41 = scalar_select %p40, 0, %s39
      %s42 = ssub.s32 %s29, %s41
      %p43 = scmp.eq.s32.totalorder %s42, 0
      %s45 = sadd.s32 %s44, 1
      %s46 = scalar_select %p43, %s44, %s45
      %p49 = pneg %p43
      %p50 = scmp.eq.s32.totalorder %s22, 11
      %p51 = por %p49, %p50
      %p52 = scmp.ne.s32.totalorder %s44, %s47
      %p53 = scmp.eq.s32.totalorder %s22, 0
      %p54 = por %p52, %p53
      %p55 = scmp.ne.s32.totalorder %s44, %s47
      %p56 = scmp.eq.s32.totalorder %s27, 11
      %p57 = por %p55, %p56
      %p58 = scmp.ne.s32.totalorder %s47, %s48
      %p59 = scmp.eq.s32.totalorder %s27, 0
      %p60 = por %p58, %p59
      %p61 = scmp.ne.s32.totalorder %s47, %s48
      %p62 = scmp.eq.s32.totalorder %s28, 11
      %p63 = por %p61, %p62
      %p65 = scmp.ne.s32.totalorder %s48, %s64
      %p66 = scmp.eq.s32.totalorder %s28, 0
      %p67 = por %p65, %p66
      %s69 = sadd.s32 %s68, 1
      %p72 = scmp.eq.s32.totalorder %s22, 11
      %p73 = scmp.ne.s32.totalorder %s68, %s70
      %p74 = scmp.eq.s32.totalorder %s22, 0
      %p75 = por %p73, %p74
      %p76 = scmp.ne.s32.totalorder %s68, %s70
      %p77 = scmp.eq.s32.totalorder %s27, 11
      %p78 = por %p76, %p77
      %p79 = scmp.ne.s32.totalorder %s70, %s71
      %p80 = scmp.eq.s32.totalorder %s27, 0
      %p81 = por %p79, %p80
      %p82 = scmp.ne.s32.totalorder %s70, %s71
      %p83 = scmp.eq.s32.totalorder %s28, 11
      %p84 = por %p82, %p83
      %p86 = scmp.ne.s32.totalorder %s71, %s85
      %p87 = scmp.eq.s32.totalorder %s28, 0
      %p88 = por %p86, %p87
      %s89 = ssub.s32 %s29, %s41
      %p90 = scmp.eq.s32.totalorder %s89, 0
      %s92 = sadd.s32 %s91, 1
      %s93 = scalar_select %p90, %s91, %s92
      %p96 = pneg %p90
      %p97 = scmp.eq.s32.totalorder %s22, 11
      %p98 = por %p96, %p97
      %p99 = scmp.ne.s32.totalorder %s91, %s94
      %p100 = scmp.eq.s32.totalorder %s22, 0
      %p101 = por %p99, %p100
      %p102 = scmp.ne.s32.totalorder %s91, %s94
      %p103 = scmp.eq.s32.totalorder %s27, 11
      %p104 = por %p102, %p103
      %p105 = scmp.ne.s32.totalorder %s94, %s95
      %p106 = scmp.eq.s32.totalorder %s27, 0
      %p107 = por %p105, %p106
      %p108 = scmp.ne.s32.totalorder %s94, %s95
      %p109 = scmp.eq.s32.totalorder %s28, 11
      %p110 = por %p108, %p109
      %p112 = scmp.ne.s32.totalorder %s95, %s111
      %p113 = scmp.eq.s32.totalorder %s28, 0
      %p114 = por %p112, %p113
      %s115 = ssub.s32 %s30, %s37
      %p116 = scmp.eq.s32.totalorder %s115, 0
      %s118 = sadd.s32 %s117, 1
      %s119 = scalar_select %p116, %s117, %s118
      %p122 = pneg %p116
      %p123 = scmp.eq.s32.totalorder %s22, 11
      %p124 = por %p122, %p123
      %p125 = scmp.ne.s32.totalorder %s117, %s120
      %p126 = scmp.eq.s32.totalorder %s22, 0
      %p127 = por %p125, %p126
      %p128 = scmp.ne.s32.totalorder %s117, %s120
      %p129 = scmp.eq.s32.totalorder %s27, 11
      %p130 = por %p128, %p129
      %p131 = scmp.ne.s32.totalorder %s120, %s121
      %p132 = scmp.eq.s32.totalorder %s27, 0
      %p133 = por %p131, %p132
      %p134 = scmp.ne.s32.totalorder %s120, %s121
      %p135 = scmp.eq.s32.totalorder %s28, 11
      %p136 = por %p134, %p135
      %p138 = scmp.ne.s32.totalorder %s121, %s137
      %p139 = scmp.eq.s32.totalorder %s28, 0
      %p140 = por %p138, %p139
      %s141 = ssub.s32 %s30, %s37
      %p142 = scmp.eq.s32.totalorder %s141, 0
      %s144 = sadd.s32 %s143, 1
      %s145 = scalar_select %p142, %s143, %s144
      %p148 = pneg %p142
      %p149 = scmp.eq.s32.totalorder %s22, 11
      %p150 = por %p148, %p149
      %p151 = scmp.ne.s32.totalorder %s143, %s146
      %p152 = scmp.eq.s32.totalorder %s22, 0
      %p153 = por %p151, %p152
      %p154 = scmp.ne.s32.totalorder %s143, %s146
      %p155 = scmp.eq.s32.totalorder %s27, 11
      %p156 = por %p154, %p155
      %p157 = scmp.ne.s32.totalorder %s146, %s147
      %p158 = scmp.eq.s32.totalorder %s27, 0
      %p159 = por %p157, %p158
      %p160 = scmp.ne.s32.totalorder %s146, %s147
      %p161 = scmp.eq.s32.totalorder %s28, 11
      %p162 = por %p160, %p161
      %p164 = scmp.ne.s32.totalorder %s147, %s163
      %p165 = scmp.eq.s32.totalorder %s28, 0
      %p166 = por %p164, %p165
      %s167 = ssub.s32 %s30, %s37
      %p168 = scmp.eq.s32.totalorder %s167, 0
      %s170 = sadd.s32 %s169, 1
      %s171 = scalar_select %p168, %s169, %s170
      %p174 = pneg %p168
      %p175 = scmp.eq.s32.totalorder %s22, 11
      %p176 = por %p174, %p175
      %p177 = scmp.ne.s32.totalorder %s169, %s172
      %p178 = scmp.eq.s32.totalorder %s22, 0
      %p179 = por %p177, %p178
      %p180 = scmp.ne.s32.totalorder %s169, %s172
      %p181 = scmp.eq.s32.totalorder %s27, 11
      %p182 = por %p180, %p181
      %p183 = scmp.ne.s32.totalorder %s172, %s173
      %p184 = scmp.eq.s32.totalorder %s27, 0
      %p185 = por %p183, %p184
      %p186 = scmp.ne.s32.totalorder %s172, %s173
      %p187 = scmp.eq.s32.totalorder %s28, 11
      %p188 = por %p186, %p187
      %p190 = scmp.ne.s32.totalorder %s173, %s189
      %p191 = scmp.eq.s32.totalorder %s28, 0
      %p192 = por %p190, %p191
      %s193 = ssub.s32 %s30, %s37
      %p194 = scmp.eq.s32.totalorder %s193, 0
      %s196 = sadd.s32 %s195, 1
      %s197 = scalar_select %p194, %s195, %s196
      %p200 = pneg %p194
      %p201 = scmp.eq.s32.totalorder %s22, 11
      %p202 = por %p200, %p201
      %p203 = scmp.ne.s32.totalorder %s195, %s198
      %p204 = scmp.eq.s32.totalorder %s22, 0
      %p205 = por %p203, %p204
      %p206 = scmp.ne.s32.totalorder %s195, %s198
      %p207 = scmp.eq.s32.totalorder %s27, 11
      %p208 = por %p206, %p207
      %p209 = scmp.ne.s32.totalorder %s198, %s199
      %p210 = scmp.eq.s32.totalorder %s27, 0
      %p211 = por %p209, %p210
      %p212 = scmp.ne.s32.totalorder %s198, %s199
      %p213 = scmp.eq.s32.totalorder %s28, 11
      %p214 = por %p212, %p213
      %p216 = scmp.ne.s32.totalorder %s199, %s215
      %p217 = scmp.eq.s32.totalorder %s28, 0
      %p218 = por %p216, %p217
      %s219 = ssub.s32 %s30, %s37
      %p220 = scmp.eq.s32.totalorder %s219, 0
      %s222 = sadd.s32 %s221, 1
      %s223 = scalar_select %p220, %s221, %s222
      %p226 = pneg %p220
      %p227 = scmp.eq.s32.totalorder %s22, 11
      %p228 = por %p226, %p227
      %p229 = scmp.ne.s32.totalorder %s221, %s224
      %p230 = scmp.eq.s32.totalorder %s22, 0
      %p231 = por %p229, %p230
      %p232 = scmp.ne.s32.totalorder %s221, %s224
      %p233 = scmp.eq.s32.totalorder %s27, 11
      %p234 = por %p232, %p233
      %p235 = scmp.ne.s32.totalorder %s224, %s225
      %p236 = scmp.eq.s32.totalorder %s27, 0
      %p237 = por %p235, %p236
      %p238 = scmp.ne.s32.totalorder %s224, %s225
      %p239 = scmp.eq.s32.totalorder %s28, 11
      %p240 = por %p238, %p239
      %p242 = scmp.ne.s32.totalorder %s225, %s241
      %p243 = scmp.eq.s32.totalorder %s28, 0
      %p244 = por %p242, %p243
      %s245 = ssub.s32 %s30, %s37
      %p246 = scmp.eq.s32.totalorder %s245, 0
      %s248 = sadd.s32 %s247, 1
      %s249 = scalar_select %p246, %s247, %s248
      %p252 = pneg %p246
      %p253 = scmp.eq.s32.totalorder %s22, 11
      %p254 = por %p252, %p253
      %p255 = scmp.ne.s32.totalorder %s247, %s250
      %p256 = scmp.eq.s32.totalorder %s22, 0
      %p257 = por %p255, %p256
      %p258 = scmp.ne.s32.totalorder %s247, %s250
      %p259 = scmp.eq.s32.totalorder %s27, 11
      %p260 = por %p258, %p259
      %p261 = scmp.ne.s32.totalorder %s250, %s251
      %p262 = scmp.eq.s32.totalorder %s27, 0
      %p263 = por %p261, %p262
      %p264 = scmp.ne.s32.totalorder %s250, %s251
      %p265 = scmp.eq.s32.totalorder %s28, 11
      %p266 = por %p264, %p265
      %p268 = scmp.ne.s32.totalorder %s251, %s267
      %p269 = scmp.eq.s32.totalorder %s28, 0
      %p270 = por %p268, %p269
      %s271 = ssub.s32 %s30, %s37
      %p272 = scmp.eq.s32.totalorder %s271, 0
      %s274 = sadd.s32 %s273, 1
      %s275 = scalar_select %p272, %s273, %s274
      %p278 = pneg %p272
      %p279 = scmp.eq.s32.totalorder %s22, 11
      %p280 = por %p278, %p279
      %p281 = scmp.ne.s32.totalorder %s273, %s276
      %p282 = scmp.eq.s32.totalorder %s22, 0
      %p283 = por %p281, %p282
      %p284 = scmp.ne.s32.totalorder %s273, %s276
      %p285 = scmp.eq.s32.totalorder %s27, 11
      %p286 = por %p284, %p285
      %p287 = scmp.ne.s32.totalorder %s276, %s277
      %p288 = scmp.eq.s32.totalorder %s27, 0
      %p289 = por %p287, %p288
      %p290 = scmp.ne.s32.totalorder %s276, %s277
      %p291 = scmp.eq.s32.totalorder %s28, 11
      %p292 = por %p290, %p291
      %p294 = scmp.ne.s32.totalorder %s277, %s293
      %p295 = scmp.eq.s32.totalorder %s28, 0
      %p296 = por %p294, %p295
      %s297 = ssub.s32 %s30, %s37
      %p298 = scmp.eq.s32.totalorder %s297, 0
      %s300 = sadd.s32 %s299, 1
      %s301 = scalar_select %p298, %s299, %s300
      %p304 = pneg %p298
      %p305 = scmp.eq.s32.totalorder %s22, 11
      %p306 = por %p304, %p305
      %p307 = scmp.ne.s32.totalorder %s299, %s302
      %p308 = scmp.eq.s32.totalorder %s22, 0
      %p309 = por %p307, %p308
      %p310 = scmp.ne.s32.totalorder %s299, %s302
      %p311 = scmp.eq.s32.totalorder %s27, 11
      %p312 = por %p310, %p311
      %p313 = scmp.ne.s32.totalorder %s302, %s303
      %p314 = scmp.eq.s32.totalorder %s27, 0
      %p315 = por %p313, %p314
      %p316 = scmp.ne.s32.totalorder %s302, %s303
      %p317 = scmp.eq.s32.totalorder %s28, 11
      %p318 = por %p316, %p317
      %p320 = scmp.ne.s32.totalorder %s303, %s319
      %p321 = scmp.eq.s32.totalorder %s28, 0
      %p322 = por %p320, %p321
      %s323 = ssub.s32 %s30, %s37
      %p324 = scmp.eq.s32.totalorder %s323, 0
      %s326 = sadd.s32 %s325, 1
      %s327 = scalar_select %p324, %s325, %s326
      %p330 = pneg %p324
      %p331 = scmp.eq.s32.totalorder %s22, 11
      %p332 = por %p330, %p331
      %p333 = scmp.ne.s32.totalorder %s325, %s328
      %p334 = scmp.eq.s32.totalorder %s22, 0
      %p335 = por %p333, %p334
      %p336 = scmp.ne.s32.totalorder %s325, %s328
      %p337 = scmp.eq.s32.totalorder %s27, 11
      %p338 = por %p336, %p337
      %p339 = scmp.ne.s32.totalorder %s328, %s329
      %p340 = scmp.eq.s32.totalorder %s27, 0
      %p341 = por %p339, %p340
      %p342 = scmp.ne.s32.totalorder %s328, %s329
      %p343 = scmp.eq.s32.totalorder %s28, 11
      %p344 = por %p342, %p343
      %p346 = scmp.ne.s32.totalorder %s329, %s345
      %p347 = scmp.eq.s32.totalorder %s28, 0
      %p348 = por %p346, %p347
      %s349 = ssub.s32 %s30, %s37
      %p350 = scmp.eq.s32.totalorder %s349, 0
      %s352 = sadd.s32 %s351, 1
      %s353 = scalar_select %p350, %s351, %s352
      %p356 = pneg %p350
      %p357 = scmp.eq.s32.totalorder %s22, 11
      %p358 = por %p356, %p357
      %p359 = scmp.ne.s32.totalorder %s351, %s354
      %p360 = scmp.eq.s32.totalorder %s22, 0
      %p361 = por %p359, %p360
      %p362 = scmp.ne.s32.totalorder %s351, %s354
      %p363 = scmp.eq.s32.totalorder %s27, 11
      %p364 = por %p362, %p363
      %p365 = scmp.ne.s32.totalorder %s354, %s355
      %p366 = scmp.eq.s32.totalorder %s27, 0
      %p367 = por %p365, %p366
      %p368 = scmp.ne.s32.totalorder %s354, %s355
      %p369 = scmp.eq.s32.totalorder %s28, 11
      %p370 = por %p368, %p369
      %p372 = scmp.ne.s32.totalorder %s355, %s371
      %p373 = scmp.eq.s32.totalorder %s28, 0
      %p374 = por %p372, %p373
      %s375 = ssub.s32 %s29, %s41
      %p376 = scmp.eq.s32.totalorder %s375, 0
      %s378 = sadd.s32 %s377, 1
      %s379 = scalar_select %p376, %s377, %s378
      %p382 = pneg %p376
      %p383 = scmp.eq.s32.totalorder %s22, 11
      %p384 = por %p382, %p383
      %p385 = scmp.ne.s32.totalorder %s377, %s380
      %p386 = scmp.eq.s32.totalorder %s22, 0
      %p387 = por %p385, %p386
      %p388 = scmp.ne.s32.totalorder %s377, %s380
      %p389 = scmp.eq.s32.totalorder %s27, 11
      %p390 = por %p388, %p389
      %p391 = scmp.ne.s32.totalorder %s380, %s381
      %p392 = scmp.eq.s32.totalorder %s27, 0
      %p393 = por %p391, %p392
      %p394 = scmp.ne.s32.totalorder %s380, %s381
      %p395 = scmp.eq.s32.totalorder %s28, 11
      %p396 = por %p394, %p395
      %p398 = scmp.ne.s32.totalorder %s381, %s397
      %p399 = scmp.eq.s32.totalorder %s28, 0
      %p400 = por %p398, %p399
      %p401 = scmp.le.s32.totalorder 1, %s22
      %p402 = scmp.lt.s32.totalorder %s22, 13
      %p403 = pnand %p401, %p402
      %p404 = pneg %p403
      // Predicated region
      $region9: #{encoder_forward.1} parent=5 // pred_check
        _
      $region10: #{encoder_forward.1} parent=5 // pred_check_branch
        %406 = sbr.rel (%p403) target = $region12
      $region11: #{encoder_forward.1} parent=5 // pred_region
        %s407 = ssub.s32 %s22, 1
        // Predicated region
        $region13: #{encoder_forward.1} parent=11 // pred_check
          %p408 = pneg %p81
        $region14: #{encoder_forward.1} parent=11 // pred_check_branch
          %410 = sbr.rel (%p408) target = $region16
        $region15: #{encoder_forward.1} parent=11 // pred_region
          _
        $region16: #{encoder_forward.1} parent=11 // pred_fallthru
          _
      $region12: #{encoder_forward.1} parent=5 // pred_fallthru
        _
      %p411 = scmp.lt.s32.totalorder %s22, 12
      // Predicated region
      $region17: #{encoder_forward.1} parent=5 // pred_check
        %p412 = pneg %p411
      $region18: #{encoder_forward.1} parent=5 // pred_check_branch
        %414 = sbr.rel (%p412) target = $region20
      $region19: #{encoder_forward.1} parent=5 // pred_region
        // Predicated region
        $region21: #{encoder_forward.1} parent=19 // pred_check
          %p415 = pneg %p54
        $region22: #{encoder_forward.1} parent=19 // pred_check_branch
          %417 = sbr.rel (%p415) target = $region24
        $region23: #{encoder_forward.1} parent=19 // pred_region
          %p418 = scmp.lt.s32.totalorder %s29, 1
          %s419 = scalar_select %p418, %s29, 1
          %s420 = smul.addr %s419, 8
          %s421 = scalar_lea.vmem %s0, %s420
        $region24: #{encoder_forward.1} parent=19 // pred_fallthru
          _
        // Predicated region
        $region25: #{encoder_forward.1} parent=19 // pred_check
          %p422 = pneg %p101
        $region26: #{encoder_forward.1} parent=19 // pred_check_branch
          %424 = sbr.rel (%p422) target = $region28
        $region27: #{encoder_forward.1} parent=19 // pred_region
          %p425 = scmp.lt.s32.totalorder %s29, 63
          %s426 = scalar_select %p425, %s29, 63
          %s427 = scalar_lea.vmem %s2, %s426
        $region28: #{encoder_forward.1} parent=19 // pred_fallthru
          _
        // Predicated region
        $region29: #{encoder_forward.1} parent=19 // pred_check
          %p428 = pneg %p127
        $region30: #{encoder_forward.1} parent=19 // pred_check_branch
          %430 = sbr.rel (%p428) target = $region32
        $region31: #{encoder_forward.1} parent=19 // pred_region
          %p431 = scmp.lt.s32.totalorder %s30, 5
          %s432 = scalar_select %p431, %s30, 5
          %s433 = smul.addr %s432, 12
          %s434 = smul.addr %s433, 4
          %s435 = scalar_lea.vmem %s3, %s434
        $region32: #{encoder_forward.1} parent=19 // pred_fallthru
          _
        // Predicated region
        $region33: #{encoder_forward.1} parent=19 // pred_check
          %p436 = pneg %p153
        $region34: #{encoder_forward.1} parent=19 // pred_check_branch
          %438 = sbr.rel (%p436) target = $region36
        $region35: #{encoder_forward.1} parent=19 // pred_region
          %p439 = scmp.lt.s32.totalorder %s30, 5
          %s440 = scalar_select %p439, %s30, 5
          %s441 = smul.addr %s440, 4
          %s442 = smul.addr %s441, 4
          %s443 = scalar_lea.vmem %s4, %s442
        $region36: #{encoder_forward.1} parent=19 // pred_fallthru
          _
        // Predicated region
        $region37: #{encoder_forward.1} parent=19 // pred_check
          %p444 = pneg %p179
        $region38: #{encoder_forward.1} parent=19 // pred_check_branch
          %446 = sbr.rel (%p444) target = $region40
        $region39: #{encoder_forward.1} parent=19 // pred_region
          %p447 = scmp.lt.s32.totalorder %s30, 5
          %s448 = scalar_select %p447, %s30, 5
          %s449 = scalar_lea.vmem %s5, %s448
        $region40: #{encoder_forward.1} parent=19 // pred_fallthru
          _
        // Predicated region
        $region41: #{encoder_forward.1} parent=19 // pred_check
          %p450 = pneg %p205
        $region42: #{encoder_forward.1} parent=19 // pred_check_branch
          %452 = sbr.rel (%p450) target = $region44
        $region43: #{encoder_forward.1} parent=19 // pred_region
          %p453 = scmp.lt.s32.totalorder %s30, 5
          %s454 = scalar_select %p453, %s30, 5
          %s455 = scalar_lea.vmem %s6, %s454
        $region44: #{encoder_forward.1} parent=19 // pred_fallthru
          _
        // Predicated region
        $region45: #{encoder_forward.1} parent=19 // pred_check
          %p456 = pneg %p231
        $region46: #{encoder_forward.1} parent=19 // pred_check_branch
          %458 = sbr.rel (%p456) target = $region48
        $region47: #{encoder_forward.1} parent=19 // pred_region
          %p459 = scmp.lt.s32.totalorder %s30, 5
          %s460 = scalar_select %p459, %s30, 5
          %s461 = smul.addr %s460, 64
          %s462 = smul.addr %s461, 4
          %s463 = scalar_lea.vmem %s7, %s462
        $region48: #{encoder_forward.1} parent=19 // pred_fallthru
          _
        // Predicated region
        $region49: #{encoder_forward.1} parent=19 // pred_check
          %p464 = pneg %p257
        $region50: #{encoder_forward.1} parent=19 // pred_check_branch
          %466 = sbr.rel (%p464) target = $region52
        $region51: #{encoder_forward.1} parent=19 // pred_region
          %p467 = scmp.lt.s32.totalorder %s30, 5
          %s468 = scalar_select %p467, %s30, 5
          %s469 = smul.addr %s468, 16
          %s470 = scalar_lea.vmem %s8, %s469
        $region52: #{encoder_forward.1} parent=19 // pred_fallthru
          _
        // Predicated region
        $region53: #{encoder_forward.1} parent=19 // pred_check
          %p471 = pneg %p283
        $region54: #{encoder_forward.1} parent=19 // pred_check_branch
          %473 = sbr.rel (%p471) target = $region56
        $region55: #{encoder_forward.1} parent=19 // pred_region
          %p474 = scmp.lt.s32.totalorder %s30, 5
          %s475 = scalar_select %p474, %s30, 5
          %s476 = smul.addr %s475, 256
          %s477 = smul.addr %s476, 4
          %s478 = scalar_lea.vmem %s9, %s477
        $region56: #{encoder_forward.1} parent=19 // pred_fallthru
          _
        // Predicated region
        $region57: #{encoder_forward.1} parent=19 // pred_check
          %p479 = pneg %p309
        $region58: #{encoder_forward.1} parent=19 // pred_check_branch
          %481 = sbr.rel (%p479) target = $region60
        $region59: #{encoder_forward.1} parent=19 // pred_region
          %p482 = scmp.lt.s32.totalorder %s30, 5
          %s483 = scalar_select %p482, %s30, 5
          %s484 = scalar_lea.vmem %s10, %s483
        $region60: #{encoder_forward.1} parent=19 // pred_fallthru
          _
        // Predicated region
        $region61: #{encoder_forward.1} parent=19 // pred_check
          %p485 = pneg %p335
        $region62: #{encoder_forward.1} parent=19 // pred_check_branch
          %487 = sbr.rel (%p485) target = $region64
        $region63: #{encoder_forward.1} parent=19 // pred_region
          %p488 = scmp.lt.s32.totalorder %s30, 5
          %s489 = scalar_select %p488, %s30, 5
          %s490 = scalar_lea.vmem %s11, %s489
        $region64: #{encoder_forward.1} parent=19 // pred_fallthru
          _
        // Predicated region
        $region65: #{encoder_forward.1} parent=19 // pred_check
          %p491 = pneg %p361
        $region66: #{encoder_forward.1} parent=19 // pred_check_branch
          %493 = sbr.rel (%p491) target = $region68
        $region67: #{encoder_forward.1} parent=19 // pred_region
          %p494 = scmp.lt.s32.totalorder %s30, 5
          %s495 = scalar_select %p494, %s30, 5
          %s496 = scalar_lea.vmem %s12, %s495
        $region68: #{encoder_forward.1} parent=19 // pred_fallthru
          _
      $region20: #{encoder_forward.1} parent=5 // pred_fallthru
        _
      %p497 = scmp.le.s32.totalorder 1, %s22
      %p498 = scmp.lt.s32.totalorder %s22, 13
      %p499 = pnand %p497, %p498
      %p500 = pneg %p499
      // Predicated region
      $region69: #{encoder_forward.1} parent=5 // pred_check
        _
      $region70: #{encoder_forward.1} parent=5 // pred_check_branch
        %502 = sbr.rel (%p499) target = $region72
      $region71: #{encoder_forward.1} parent=5 // pred_region
        %s503 = ssub.s32 %s22, 1
        %p504 = scmp.lt.s32.totalorder %s31, 1
        %s505 = scalar_select %p504, %s31, 1
        %s506 = smul.addr %s505, 8
        %s507 = scalar_lea.vmem %s0, %s506
        %p508 = pneg %p60
        %p509 = pneg %p57
        %p510 = pneg %p81
        %p511 = pneg %p78
        %p512 = scmp.lt.s32.totalorder %s31, 63
        %s513 = scalar_select %p512, %s31, 63
        %s514 = scalar_lea.vmem %s2, %s513
        %p515 = pneg %p107
        %p516 = pneg %p104
        %p517 = scmp.lt.s32.totalorder %s32, 5
        %s518 = scalar_select %p517, %s32, 5
        %s519 = smul.addr %s518, 12
        %s520 = smul.addr %s519, 4
        %s521 = scalar_lea.vmem %s3, %s520
        %p522 = pneg %p133
        %p523 = pneg %p130
        %p524 = scmp.lt.s32.totalorder %s32, 5
        %s525 = scalar_select %p524, %s32, 5
        %s526 = smul.addr %s525, 4
        %s527 = smul.addr %s526, 4
        %s528 = scalar_lea.vmem %s4, %s527
        %p529 = pneg %p159
        %p530 = pneg %p156
        %p531 = scmp.lt.s32.totalorder %s32, 5
        %s532 = scalar_select %p531, %s32, 5
        %s533 = scalar_lea.vmem %s5, %s532
        %p534 = pneg %p185
        %p535 = pneg %p182
        %p536 = scmp.lt.s32.totalorder %s32, 5
        %s537 = scalar_select %p536, %s32, 5
        %s538 = scalar_lea.vmem %s6, %s537
        %p539 = pneg %p211
        %p540 = pneg %p208
        %p541 = scmp.lt.s32.totalorder %s32, 5
        %s542 = scalar_select %p541, %s32, 5
        %s543 = smul.addr %s542, 64
        %s544 = smul.addr %s543, 4
        %s545 = scalar_lea.vmem %s7, %s544
        %p546 = pneg %p237
        %p547 = pneg %p234
        %p548 = scmp.lt.s32.totalorder %s32, 5
        %s549 = scalar_select %p548, %s32, 5
        %s550 = smul.addr %s549, 16
        %s551 = scalar_lea.vmem %s8, %s550
        %p552 = pneg %p263
        %p553 = pneg %p260
        %p554 = scmp.lt.s32.totalorder %s32, 5
        %s555 = scalar_select %p554, %s32, 5
        %s556 = smul.addr %s555, 256
        %s557 = smul.addr %s556, 4
        %s558 = scalar_lea.vmem %s9, %s557
        %p559 = pneg %p289
        %p560 = pneg %p286
        %p561 = scmp.lt.s32.totalorder %s32, 5
        %s562 = scalar_select %p561, %s32, 5
        %s563 = scalar_lea.vmem %s10, %s562
        %p564 = pneg %p315
        %p565 = pneg %p312
        %p566 = scmp.lt.s32.totalorder %s32, 5
        %s567 = scalar_select %p566, %s32, 5
        %s568 = scalar_lea.vmem %s11, %s567
        %p569 = pneg %p341
        %p570 = pneg %p338
        %p571 = scmp.lt.s32.totalorder %s32, 5
        %s572 = scalar_select %p571, %s32, 5
        %s573 = scalar_lea.vmem %s12, %s572
        %p574 = pneg %p367
        %p575 = pneg %p364
        %p576 = pneg %p393
        %p577 = pneg %p390
        %s578 = sand.u32 %s380, 1
        %s579 = scalar_lea.sflag [#allocation4], %s578
        %s580 = sand.u32 %s380, 1
        %s581 = smul.addr %s580, 8
        %s582 = scalar_lea.vmem [#allocation3], %s581
        %p583 = scmp.lt.s32.totalorder %s31, 1
        %s584 = scalar_select %p583, %s31, 1
        %s585 = smul.addr %s584, 8
        %s586 = scalar_lea.vmem %s0, %s585
        %p587 = scmp.lt.s32.totalorder %s31, 63
        %s588 = scalar_select %p587, %s31, 63
        %s589 = scalar_lea.vmem %s2, %s588
        %p590 = scmp.lt.s32.totalorder %s32, 5
        %s591 = scalar_select %p590, %s32, 5
        %s592 = smul.addr %s591, 12
        %s593 = smul.addr %s592, 4
        %s594 = scalar_lea.vmem %s3, %s593
        %p595 = scmp.lt.s32.totalorder %s32, 5
        %s596 = scalar_select %p595, %s32, 5
        %s597 = smul.addr %s596, 4
        %s598 = smul.addr %s597, 4
        %s599 = scalar_lea.vmem %s4, %s598
        %p600 = scmp.lt.s32.totalorder %s32, 5
        %s601 = scalar_select %p600, %s32, 5
        %s602 = scalar_lea.vmem %s5, %s601
        %p603 = scmp.lt.s32.totalorder %s32, 5
        %s604 = scalar_select %p603, %s32, 5
        %s605 = scalar_lea.vmem %s6, %s604
        %p606 = scmp.lt.s32.totalorder %s32, 5
        %s607 = scalar_select %p606, %s32, 5
        %s608 = smul.addr %s607, 64
        %s609 = smul.addr %s608, 4
        %s610 = scalar_lea.vmem %s7, %s609
        %p611 = scmp.lt.s32.totalorder %s32, 5
        %s612 = scalar_select %p611, %s32, 5
        %s613 = smul.addr %s612, 16
        %s614 = scalar_lea.vmem %s8, %s613
        %p615 = scmp.lt.s32.totalorder %s32, 5
        %s616 = scalar_select %p615, %s32, 5
        %s617 = smul.addr %s616, 256
        %s618 = smul.addr %s617, 4
        %s619 = scalar_lea.vmem %s9, %s618
        %p620 = scmp.lt.s32.totalorder %s32, 5
        %s621 = scalar_select %p620, %s32, 5
        %s622 = scalar_lea.vmem %s10, %s621
        %p623 = scmp.lt.s32.totalorder %s32, 5
        %s624 = scalar_select %p623, %s32, 5
        %s625 = scalar_lea.vmem %s11, %s624
        %p626 = scmp.lt.s32.totalorder %s32, 5
        %s627 = scalar_select %p626, %s32, 5
        %s628 = scalar_lea.vmem %s12, %s627
        %p630 = scmp.eq.s32.totalorder %s32, 0
        // Predicated region
        $region73: #{encoder_forward.1} parent=71 // pred_check
          %p631 = pneg %p630
        $region74: #{encoder_forward.1} parent=71 // pred_check_branch
          %633 = sbr.rel (%p631) target = $region76
        $region75: #{encoder_forward.1} parent=71 // pred_region
          %v634 = vld [vmem:[%s586] sm:$0xff]
          %v635 = vlaneseq
          %v636 = vand.u32 %v635, 127
          %637 = vset.pattern.permute.xlu0 0
          %638 = vperm.xlu0 %637, %v634
          %v639 = vpop.permute.xlu0 %638
          %vm640 = vcmp.eq.s32.totalorder %v639, %v636
          %v641 = vsel %vm640, 1, 0
          %v642 = vcvt.s32.f32 %v641
          %v643 = vld [vmem:[%s1] sm:$0xff]
          %v644 = vld [vmem:[%s1 + $0x8] sm:$0xff]
          %v645 = vld [vmem:[%s1 + $0x10] sm:$0xff]
          %v646 = vld [vmem:[%s1 + $0x18] sm:$0xff]
          %v647 = vld [vmem:[%s1 + $0x20] sm:$0xff]
          %v648 = vld [vmem:[%s1 + $0x28] sm:$0xff]
          %v649 = vld [vmem:[%s1 + $0x30] sm:$0x3]
          %v650 = vld [vmem:[%s589] sm:$0x1]
          %v652 = vlaneseq
          %v653 = vshrl.u32 %v652, 7
          %v654 = vsub.s32 0, %v653
          %v655 = vrot.slane %v650, %v654
          %vm657 = vcmask 408576
          %v659 = vsel %vm657, %v642, 0
          %vm661 = vcmask 1041408
          %v663 = vsel %vm661, %v649, 0
          %665 = vmatprep.subr.mxu0 0.0
          %666 = vmatpush1.msra.mxu0 %v643
          %667 = vmatprep.subr.mxu0 0.0
          %668 = vmatpush1.msra.mxu0 %v644
          %669 = vmatprep.subr.mxu0 0.0
          %670 = vmatpush1.msra.mxu0 %v645
          %671 = vmatprep.subr.mxu0 0.0
          %672 = vmatpush1.msra.mxu0 %v646
          %673 = vmatprep.subr.mxu0 0.0
          %674 = vmatpush1.msra.mxu0 %v647
          %675 = vmatprep.subr.mxu0 0.0
          %676 = vmatpush1.msra.mxu0 %v648
          %677 = vmatprep.subr.mxu0 0.0
          %678 = vmatpush1.msra.mxu0 %v663
          %679 = vmatprep.subr.mxu0 0.0
          %680 = vmatpush1.msra.mxu0 0.0
          %681 = vmatprep.subr.mxu0 0.0
          %682 = vmatpush1.msra.mxu0 0.0
          %683 = vmatprep.subr.mxu0 0.0
          %684 = vmatpush1.msra.mxu0 0.0
          %685 = vmatprep.subr.mxu0 0.0
          %686 = vmatpush1.msra.mxu0 0.0
          %687 = vmatprep.subr.mxu0 0.0
          %688 = vmatpush1.msra.mxu0 0.0
          %689 = vmatprep.subr.mxu0 0.0
          %690 = vmatpush1.msra.mxu0 0.0
          %691 = vmatprep.subr.mxu0 0.0
          %692 = vmatpush1.msra.mxu0 0.0
          %693 = vmatprep.subr.mxu0 0.0
          %694 = vmatpush1.msra.mxu0 0.0
          %695 = vmatprep.subr.mxu0 0.0
          %696 = vmatpush1.msra.mxu0 0.0
          %697 = vmatprep.subr.mxu0 0.0
          %698 = vmatpush1.msra.mxu0 0.0
          %699 = vmatprep.subr.mxu0 0.0
          %700 = vmatpush1.msra.mxu0 0.0
          %701 = vmatprep.subr.mxu0 0.0
          %702 = vmatpush1.msra.mxu0 0.0
          %703 = vmatprep.subr.mxu0 0.0
          %704 = vmatpush1.msra.mxu0 0.0
          %705 = vmatprep.subr.mxu0 0.0
          %706 = vmatpush1.msra.mxu0 0.0
          %707 = vmatprep.subr.mxu0 0.0
          %708 = vmatpush1.msra.mxu0 0.0
          %709 = vmatprep.subr.mxu0 0.0
          %710 = vmatpush1.msra.mxu0 0.0
          %711 = vmatprep.subr.mxu0 0.0
          %712 = vmatpush1.msra.mxu0 0.0
          %713 = vmatprep.subr.mxu0 0.0
          %714 = vmatpush1.msra.mxu0 0.0
          %715 = vmatprep.subr.mxu0 0.0
          %716 = vmatpush1.msra.mxu0 0.0
          %717 = vmatprep.subr.mxu0 0.0
          %718 = vmatpush1.msra.mxu0 0.0
          %719 = vmatprep.subr.mxu0 0.0
          %720 = vmatpush1.msra.mxu0 0.0
          %721 = vmatprep.subr.mxu0 0.0
          %722 = vmatpush1.msra.mxu0 0.0
          %723 = vmatprep.subr.mxu0 0.0
          %724 = vmatpush1.msra.mxu0 0.0
          %725 = vmatprep.subr.mxu0 0.0
          %726 = vmatpush1.msra.mxu0 0.0
          %727 = vmatprep.subr.mxu0 0.0
          %728 = vmatpush1.msra.mxu0 0.0
          %729 = vmatprep.mubr.f32.mxu0 0.0
          %730 = vmatmul.mubr.f32.gmra.mrb[0].mxu0 %v659
          %v731 = vpop.f32.mrb[0].mxu0
          %v732 = vadd.f32 %v655, %v731
          %v733 = vpop.f32.mrb[0].mxu0
          %734 = vdwg.mxu0
          %vm735 = vcmask 261120
          %736 = vst.msk [vmem:[#allocation2] sm:$0xff] %vm735, %v732
        $region76: #{encoder_forward.1} parent=71 // pred_fallthru
          _
        %v737 = vld [vmem:[#allocation2] sm:$0xff]
        %v738 = vpack.c.bf16 %v737, %v737
        %v739 = vld [vmem:[%s594] sm:$0xf]
        %v740 = vld [vmem:[%s594 + $0x4] sm:$0xf]
        %v741 = vld [vmem:[%s594 + $0x8] sm:$0xf]
        %v742 = vld [vmem:[%s594 + $0xc] sm:$0xf]
        %s743 = scalar_lea.vmem %s594, 16
        %v744 = vld [vmem:[%s743] sm:$0xf]
        %v745 = vld [vmem:[%s743 + $0x4] sm:$0xf]
        %v746 = vld [vmem:[%s743 + $0x8] sm:$0xf]
        %v747 = vld [vmem:[%s743 + $0xc] sm:$0xf]
        %s748 = scalar_lea.vmem %s594, 32
        %v749 = vld [vmem:[%s748] sm:$0xf]
        %v750 = vld [vmem:[%s748 + $0x4] sm:$0xf]
        %v751 = vld [vmem:[%s748 + $0x8] sm:$0xf]
        %v752 = vld [vmem:[%s748 + $0xc] sm:$0xf]
        %v757 = vunpack.c.l.b16 %v739
        %v758 = vunpack.c.l.b16 %v740
        %v759 = vunpack.c.l.b16 %v741
        %v760 = vunpack.c.l.b16 %v742
        %v761 = vpack.c.b16 %v758, %v757
        %v762 = vpack.c.b16 %v760, %v759
        %vm765 = vcmask 261120
        %v767 = vsel %vm765, %v738, 0
        %769 = vmatprep.subr.bf16.mxu0 0
        %770 = vmatpush1.bf16.msra.mxu0 %v761
        %771 = vmatprep.subr.bf16.mxu0 0
        %772 = vmatpush1.bf16.msra.mxu0 %v762
        %773 = vmatprep.subr.bf16.mxu0 0
        %774 = vmatpush1.bf16.msra.mxu0 0
        %775 = vmatprep.subr.bf16.mxu0 0
        %776 = vmatpush1.bf16.msra.mxu0 0
        %777 = vmatprep.subr.bf16.mxu0 0
        %778 = vmatpush1.bf16.msra.mxu0 0
        %779 = vmatprep.subr.bf16.mxu0 0
        %780 = vmatpush1.bf16.msra.mxu0 0
        %781 = vmatprep.subr.bf16.mxu0 0
        %782 = vmatpush1.bf16.msra.mxu0 0
        %783 = vmatprep.subr.bf16.mxu0 0
        %784 = vmatpush1.bf16.msra.mxu0 0
        %785 = vmatprep.subr.bf16.mxu0 0
        %786 = vmatpush1.bf16.msra.mxu0 0
        %787 = vmatprep.subr.bf16.mxu0 0
        %788 = vmatpush1.bf16.msra.mxu0 0
        %789 = vmatprep.subr.bf16.mxu0 0
        %790 = vmatpush1.bf16.msra.mxu0 0
        %791 = vmatprep.subr.bf16.mxu0 0
        %792 = vmatpush1.bf16.msra.mxu0 0
        %793 = vmatprep.subr.bf16.mxu0 0
        %794 = vmatpush1.bf16.msra.mxu0 0
        %795 = vmatprep.subr.bf16.mxu0 0
        %796 = vmatpush1.bf16.msra.mxu0 0
        %797 = vmatprep.subr.bf16.mxu0 0
        %798 = vmatpush1.bf16.msra.mxu0 0
        %799 = vmatprep.subr.bf16.mxu0 0
        %800 = vmatpush1.bf16.msra.mxu0 0
        %801 = vmatprep.mubr.bf16.mxu0 0
        %802 = vmatmul.mubr.bf16.gmra.mrb[0].mxu0 %v767
        %v803 = vpop.f32.mrb[0].mxu0
        %v804 = vadd.f32 0.0, %v803
        %v805 = vpop.f32.mrb[0].mxu0
        %v806 = vpop.f32.mrb[0].mxu0
        %v807 = vpop.f32.mrb[0].mxu0
        %808 = vdwg.mxu0
        %v813 = vunpack.c.l.b16 %v744
        %v814 = vunpack.c.l.b16 %v745
        %v815 = vunpack.c.l.b16 %v746
        %v816 = vunpack.c.l.b16 %v747
        %v817 = vpack.c.b16 %v814, %v813
        %v818 = vpack.c.b16 %v816, %v815
        %821 = vmatprep.subr.bf16.mxu0 0
        %822 = vmatpush1.bf16.msra.mxu0 %v817
        %823 = vmatprep.subr.bf16.mxu0 0
        %824 = vmatpush1.bf16.msra.mxu0 %v818
        %825 = vmatprep.subr.bf16.mxu0 0
        %826 = vmatpush1.bf16.msra.mxu0 0
        %827 = vmatprep.subr.bf16.mxu0 0
        %828 = vmatpush1.bf16.msra.mxu0 0
        %829 = vmatprep.subr.bf16.mxu0 0
        %830 = vmatpush1.bf16.msra.mxu0 0
        %831 = vmatprep.subr.bf16.mxu0 0
        %832 = vmatpush1.bf16.msra.mxu0 0
        %833 = vmatprep.subr.bf16.mxu0 0
        %834 = vmatpush1.bf16.msra.mxu0 0
        %835 = vmatprep.subr.bf16.mxu0 0
        %836 = vmatpush1.bf16.msra.mxu0 0
        %837 = vmatprep.subr.bf16.mxu0 0
        %838 = vmatpush1.bf16.msra.mxu0 0
        %839 = vmatprep.subr.bf16.mxu0 0
        %840 = vmatpush1.bf16.msra.mxu0 0
        %841 = vmatprep.subr.bf16.mxu0 0
        %842 = vmatpush1.bf16.msra.mxu0 0
        %843 = vmatprep.subr.bf16.mxu0 0
        %844 = vmatpush1.bf16.msra.mxu0 0
        %845 = vmatprep.subr.bf16.mxu0 0
        %846 = vmatpush1.bf16.msra.mxu0 0
        %847 = vmatprep.subr.bf16.mxu0 0
        %848 = vmatpush1.bf16.msra.mxu0 0
        %849 = vmatprep.subr.bf16.mxu0 0
        %850 = vmatpush1.bf16.msra.mxu0 0
        %851 = vmatprep.subr.bf16.mxu0 0
        %852 = vmatpush1.bf16.msra.mxu0 0
        %853 = vmatprep.mubr.bf16.mxu0 0
        %854 = vmatmul.mubr.bf16.gmra.mrb[0].mxu0 %v767
        %v855 = vpop.f32.mrb[0].mxu0
        %v856 = vadd.f32 0.0, %v855
        %v857 = vpop.f32.mrb[0].mxu0
        %v858 = vpop.f32.mrb[0].mxu0
        %v859 = vpop.f32.mrb[0].mxu0
        %860 = vdwg.mxu0
        %v865 = vunpack.c.l.b16 %v749
        %v866 = vunpack.c.l.b16 %v750
        %v867 = vunpack.c.l.b16 %v751
        %v868 = vunpack.c.l.b16 %v752
        %v869 = vpack.c.b16 %v866, %v865
        %v870 = vpack.c.b16 %v868, %v867
        %873 = vmatprep.subr.bf16.mxu0 0
        %874 = vmatpush1.bf16.msra.mxu0 %v869
        %875 = vmatprep.subr.bf16.mxu0 0
        %876 = vmatpush1.bf16.msra.mxu0 %v870
        %877 = vmatprep.subr.bf16.mxu0 0
        %878 = vmatpush1.bf16.msra.mxu0 0
        %879 = vmatprep.subr.bf16.mxu0 0
        %880 = vmatpush1.bf16.msra.mxu0 0
        %881 = vmatprep.subr.bf16.mxu0 0
        %882 = vmatpush1.bf16.msra.mxu0 0
        %883 = vmatprep.subr.bf16.mxu0 0
        %884 = vmatpush1.bf16.msra.mxu0 0
        %885 = vmatprep.subr.bf16.mxu0 0
        %886 = vmatpush1.bf16.msra.mxu0 0
        %887 = vmatprep.subr.bf16.mxu0 0
        %888 = vmatpush1.bf16.msra.mxu0 0
        %889 = vmatprep.subr.bf16.mxu0 0
        %890 = vmatpush1.bf16.msra.mxu0 0
        %891 = vmatprep.subr.bf16.mxu0 0
        %892 = vmatpush1.bf16.msra.mxu0 0
        %893 = vmatprep.subr.bf16.mxu0 0
        %894 = vmatpush1.bf16.msra.mxu0 0
        %895 = vmatprep.subr.bf16.mxu0 0
        %896 = vmatpush1.bf16.msra.mxu0 0
        %897 = vmatprep.subr.bf16.mxu0 0
        %898 = vmatpush1.bf16.msra.mxu0 0
        %899 = vmatprep.subr.bf16.mxu0 0
        %900 = vmatpush1.bf16.msra.mxu0 0
        %901 = vmatprep.subr.bf16.mxu0 0
        %902 = vmatpush1.bf16.msra.mxu0 0
        %903 = vmatprep.subr.bf16.mxu0 0
        %904 = vmatpush1.bf16.msra.mxu0 0
        %905 = vmatprep.mubr.bf16.mxu0 0
        %906 = vmatmul.mubr.bf16.gmra.mrb[0].mxu0 %v767
        %v907 = vpop.f32.mrb[0].mxu0
        %v908 = vadd.f32 0.0, %v907
        %v909 = vpop.f32.mrb[0].mxu0
        %v910 = vpop.f32.mrb[0].mxu0
        %v911 = vpop.f32.mrb[0].mxu0
        %912 = vdwg.mxu0
        %v913 = vlaneseq
        %v914 = vand.u32 %v913, 127
        %v915 = vlaneseq
        %v916 = vshrl.u32 %v915, 7
        %v917 = vmul.u32 %v916, 8
        %vm918 = vcmp.ge.s32.totalorder %v914, %v917
        %v919 = vadd.s32 %v916, 1
        %v920 = vmul.u32 %v919, 8
        %vm921 = vcmp.lt.s32.totalorder %v914, %v920
        %vm922 = vmand %vm918, %vm921
        %v923 = vsel %vm922, 1, 0
        %v924 = vcvt.s32.f32 %v923
        %v925 = vpack.c.bf16 %v804, %v804
        %v926 = vpack.c.bf16 %v924, %v924
        %v929 = vunpack.c.l.s4 1966171168
        %v930 = vunpack.c.0.s8 %v929
        %v931 = vlaneseq
        %v932 = vshrl.u32 %v931, 7
        %v933 = vsub.s32 %v930, %v932
        %v934 = vrot.slane %v926, %v933
        %v935 = vcombine.high %v934, %v934
        %v937 = vunpack.c.l.s4 1966171168
        %v938 = vunpack.c.0.s8 %v937
        %v939 = vlaneseq
        %v940 = vshrl.u32 %v939, 7
        %v941 = vsub.s32 %v938, %v940
        %v942 = vrot.slane %v934, %v941
        %v944 = vunpack.c.l.s4 1966171168
        %v945 = vunpack.c.0.s8 %v944
        %v946 = vlaneseq
        %v947 = vshrl.u32 %v946, 7
        %v948 = vsub.s32 %v945, %v947
        %v949 = vrot.slane %v935, %v948
        %v950 = vunpack.i.l.s16 %v942
        %v951 = vunpack.i.h.s16 %v942
        %v952 = vunpack.i.l.s16 %v949
        %v953 = vunpack.i.h.s16 %v949
        %v954 = vpack.i.b16 %v950, %v950
        %v955 = vpack.i.b16 %v951, %v951
        %v956 = vpack.i.b16 %v952, %v952
        %v957 = vpack.i.b16 %v953, %v953
        %v958 = vlaneseq
        %v959 = vshrl.u32 %v958, 7
        %v960 = vsub.s32 0, %v959
        %v961 = vrot.slane %v954, %v960
        %v962 = vlaneseq
        %v963 = vshrl.u32 %v962, 7
        %v964 = vsub.s32 0, %v963
        %v965 = vrot.slane %v955, %v964
        %v966 = vlaneseq
        %v967 = vshrl.u32 %v966, 7
        %v968 = vsub.s32 0, %v967
        %v969 = vrot.slane %v956, %v968
        %v970 = vlaneseq
        %v971 = vshrl.u32 %v970, 7
        %v972 = vsub.s32 0, %v971
        %v973 = vrot.slane %v957, %v972
        %v975 = vpack.i.b16 %v961, %v961
        %v977 = vlaneseq
        %v978 = vshrl.u32 %v977, 7
        %v979 = vsub.s32 0, %v978
        %v980 = vrot.slane %v975, %v979
        %v982 = vpack.i.b16 %v965, %v965
        %v984 = vlaneseq
        %v985 = vshrl.u32 %v984, 7
        %v986 = vsub.s32 0, %v985
        %v987 = vrot.slane %v982, %v986
        %v989 = vpack.i.b16 %v969, %v969
        %v991 = vlaneseq
        %v992 = vshrl.u32 %v991, 7
        %v993 = vsub.s32 0, %v992
        %v994 = vrot.slane %v989, %v993
        %v996 = vpack.i.b16 %v973, %v973
        %v998 = vlaneseq
        %v999 = vshrl.u32 %v998, 7
        %v1000 = vsub.s32 0, %v999
        %v1001 = vrot.slane %v996, %v1000
        %v1002 = vmul.bf16 %v925, %v980
        %v1003 = vmul.bf16 %v925, %v987
        %v1004 = vmul.bf16 %v925, %v994
        %v1005 = vmul.bf16 %v925, %v1001
        %v1006 = vpack.c.bf16 %v856, %v856
        %v1007 = vpack.c.bf16 %v908, %v908
        %v1009 = vsel %vm765, %v1002, 0
        %v1012 = vsel %vm765, %v1006, 0
        %1014 = vmatprep.subr.bf16.mxu0 0
        %1015 = vmatpush1.bf16.xpose.msra.mxu0 %v1012
        %1016 = vmatprep.subr.bf16.mxu0 0
        %1017 = vmatpush1.bf16.xpose.msra.mxu0 0
        %1018 = vmatprep.subr.bf16.mxu0 0
        %1019 = vmatpush1.bf16.xpose.msra.mxu0 0
        %1020 = vmatprep.subr.bf16.mxu0 0
        %1021 = vmatpush1.bf16.xpose.msra.mxu0 0
        %1022 = vmatprep.subr.bf16.mxu0 0
        %1023 = vmatpush1.bf16.xpose.msra.mxu0 0
        %1024 = vmatprep.subr.bf16.mxu0 0
        %1025 = vmatpush1.bf16.xpose.msra.mxu0 0
        %1026 = vmatprep.subr.bf16.mxu0 0
        %1027 = vmatpush1.bf16.xpose.msra.mxu0 0
        %1028 = vmatprep.subr.bf16.mxu0 0
        %1029 = vmatpush1.bf16.xpose.msra.mxu0 0
        %1030 = vmatprep.subr.bf16.mxu0 0
        %1031 = vmatpush1.bf16.xpose.msra.mxu0 0
        %1032 = vmatprep.subr.bf16.mxu0 0
        %1033 = vmatpush1.bf16.xpose.msra.mxu0 0
        %1034 = vmatprep.subr.bf16.mxu0 0
        %1035 = vmatpush1.bf16.xpose.msra.mxu0 0
        %1036 = vmatprep.subr.bf16.mxu0 0
        %1037 = vmatpush1.bf16.xpose.msra.mxu0 0
        %1038 = vmatprep.subr.bf16.mxu0 0
        %1039 = vmatpush1.bf16.xpose.msra.mxu0 0
        %1040 = vmatprep.subr.bf16.mxu0 0
        %1041 = vmatpush1.bf16.xpose.msra.mxu0 0
        %1042 = vmatprep.subr.bf16.mxu0 0
        %1043 = vmatpush1.bf16.xpose.msra.mxu0 0
        %1044 = vmatprep.subr.bf16.mxu0 0
        %1045 = vmatpush1.bf16.xpose.msra.mxu0 0
        %1046 = vmatprep.mubr.bf16.mxu0 0
        %1047 = vmatmul.mubr.bf16.gmra.mrb[0].mxu0 %v1009
        %v1048 = vpop.f32.mrb[0].mxu0
        %v1049 = vadd.f32 0.0, %v1048
        %v1050 = vpop.f32.mrb[0].mxu0
        %v1051 = vpop.f32.mrb[0].mxu0
        %v1052 = vpop.f32.mrb[0].mxu0
        %1053 = vdwg.mxu0
        %v1055 = vsel %vm765, %v1003, 0
        %1057 = vmatprep.subr.bf16.mxu0 0
        %1058 = vmatpush1.bf16.xpose.msra.mxu0 %v1012
        %1059 = vmatprep.subr.bf16.mxu0 0
        %1060 = vmatpush1.bf16.xpose.msra.mxu0 0
        %1061 = vmatprep.subr.bf16.mxu0 0
        %1062 = vmatpush1.bf16.xpose.msra.mxu0 0
        %1063 = vmatprep.subr.bf16.mxu0 0
        %1064 = vmatpush1.bf16.xpose.msra.mxu0 0
        %1065 = vmatprep.subr.bf16.mxu0 0
        %1066 = vmatpush1.bf16.xpose.msra.mxu0 0
        %1067 = vmatprep.subr.bf16.mxu0 0
        %1068 = vmatpush1.bf16.xpose.msra.mxu0 0
        %1069 = vmatprep.subr.bf16.mxu0 0
        %1070 = vmatpush1.bf16.xpose.msra.mxu0 0
        %1071 = vmatprep.subr.bf16.mxu0 0
        %1072 = vmatpush1.bf16.xpose.msra.mxu0 0
        %1073 = vmatprep.subr.bf16.mxu0 0
        %1074 = vmatpush1.bf16.xpose.msra.mxu0 0
        %1075 = vmatprep.subr.bf16.mxu0 0
        %1076 = vmatpush1.bf16.xpose.msra.mxu0 0
        %1077 = vmatprep.subr.bf16.mxu0 0
        %1078 = vmatpush1.bf16.xpose.msra.mxu0 0
        %1079 = vmatprep.subr.bf16.mxu0 0
        %1080 = vmatpush1.bf16.xpose.msra.mxu0 0
        %1081 = vmatprep.subr.bf16.mxu0 0
        %1082 = vmatpush1.bf16.xpose.msra.mxu0 0
        %1083 = vmatprep.subr.bf16.mxu0 0
        %1084 = vmatpush1.bf16.xpose.msra.mxu0 0
        %1085 = vmatprep.subr.bf16.mxu0 0
        %1086 = vmatpush1.bf16.xpose.msra.mxu0 0
        %1087 = vmatprep.subr.bf16.mxu0 0
        %1088 = vmatpush1.bf16.xpose.msra.mxu0 0
        %1089 = vmatprep.mubr.bf16.mxu0 0
        %1090 = vmatmul.mubr.bf16.gmra.mrb[0].mxu0 %v1055
        %v1091 = vpop.f32.mrb[0].mxu0
        %v1092 = vadd.f32 0.0, %v1091
        %v1093 = vpop.f32.mrb[0].mxu0
        %v1094 = vpop.f32.mrb[0].mxu0
        %v1095 = vpop.f32.mrb[0].mxu0
        %1096 = vdwg.mxu0
        %v1098 = vsel %vm765, %v1004, 0
        %1100 = vmatprep.subr.bf16.mxu0 0
        %1101 = vmatpush1.bf16.xpose.msra.mxu0 %v1012
        %1102 = vmatprep.subr.bf16.mxu0 0
        %1103 = vmatpush1.bf16.xpose.msra.mxu0 0
        %1104 = vmatprep.subr.bf16.mxu0 0
        %1105 = vmatpush1.bf16.xpose.msra.mxu0 0
        %1106 = vmatprep.subr.bf16.mxu0 0
        %1107 = vmatpush1.bf16.xpose.msra.mxu0 0
        %1108 = vmatprep.subr.bf16.mxu0 0
        %1109 = vmatpush1.bf16.xpose.msra.mxu0 0
        %1110 = vmatprep.subr.bf16.mxu0 0
        %1111 = vmatpush1.bf16.xpose.msra.mxu0 0
        %1112 = vmatprep.subr.bf16.mxu0 0
        %1113 = vmatpush1.bf16.xpose.msra.mxu0 0
        %1114 = vmatprep.subr.bf16.mxu0 0
        %1115 = vmatpush1.bf16.xpose.msra.mxu0 0
        %1116 = vmatprep.subr.bf16.mxu0 0
        %1117 = vmatpush1.bf16.xpose.msra.mxu0 0
        %1118 = vmatprep.subr.bf16.mxu0 0
        %1119 = vmatpush1.bf16.xpose.msra.mxu0 0
        %1120 = vmatprep.subr.bf16.mxu0 0
        %1121 = vmatpush1.bf16.xpose.msra.mxu0 0
        %1122 = vmatprep.subr.bf16.mxu0 0
        %1123 = vmatpush1.bf16.xpose.msra.mxu0 0
        %1124 = vmatprep.subr.bf16.mxu0 0
        %1125 = vmatpush1.bf16.xpose.msra.mxu0 0
        %1126 = vmatprep.subr.bf16.mxu0 0
        %1127 = vmatpush1.bf16.xpose.msra.mxu0 0
        %1128 = vmatprep.subr.bf16.mxu0 0
        %1129 = vmatpush1.bf16.xpose.msra.mxu0 0
        %1130 = vmatprep.subr.bf16.mxu0 0
        %1131 = vmatpush1.bf16.xpose.msra.mxu0 0
        %1132 = vmatprep.mubr.bf16.mxu0 0
        %1133 = vmatmul.mubr.bf16.gmra.mrb[0].mxu0 %v1098
        %v1134 = vpop.f32.mrb[0].mxu0
        %v1135 = vadd.f32 0.0, %v1134
        %v1136 = vpop.f32.mrb[0].mxu0
        %v1137 = vpop.f32.mrb[0].mxu0
        %v1138 = vpop.f32.mrb[0].mxu0
        %1139 = vdwg.mxu0
        %v1141 = vsel %vm765, %v1005, 0
        %1143 = vmatprep.subr.bf16.mxu0 0
        %1144 = vmatpush1.bf16.xpose.msra.mxu0 %v1012
        %1145 = vmatprep.subr.bf16.mxu0 0
        %1146 = vmatpush1.bf16.xpose.msra.mxu0 0
        %1147 = vmatprep.subr.bf16.mxu0 0
        %1148 = vmatpush1.bf16.xpose.msra.mxu0 0
        %1149 = vmatprep.subr.bf16.mxu0 0
        %1150 = vmatpush1.bf16.xpose.msra.mxu0 0
        %1151 = vmatprep.subr.bf16.mxu0 0
        %1152 = vmatpush1.bf16.xpose.msra.mxu0 0
        %1153 = vmatprep.subr.bf16.mxu0 0
        %1154 = vmatpush1.bf16.xpose.msra.mxu0 0
        %1155 = vmatprep.subr.bf16.mxu0 0
        %1156 = vmatpush1.bf16.xpose.msra.mxu0 0
        %1157 = vmatprep.subr.bf16.mxu0 0
        %1158 = vmatpush1.bf16.xpose.msra.mxu0 0
        %1159 = vmatprep.subr.bf16.mxu0 0
        %1160 = vmatpush1.bf16.xpose.msra.mxu0 0
        %1161 = vmatprep.subr.bf16.mxu0 0
        %1162 = vmatpush1.bf16.xpose.msra.mxu0 0
        %1163 = vmatprep.subr.bf16.mxu0 0
        %1164 = vmatpush1.bf16.xpose.msra.mxu0 0
        %1165 = vmatprep.subr.bf16.mxu0 0
        %1166 = vmatpush1.bf16.xpose.msra.mxu0 0
        %1167 = vmatprep.subr.bf16.mxu0 0
        %1168 = vmatpush1.bf16.xpose.msra.mxu0 0
        %1169 = vmatprep.subr.bf16.mxu0 0
        %1170 = vmatpush1.bf16.xpose.msra.mxu0 0
        %1171 = vmatprep.subr.bf16.mxu0 0
        %1172 = vmatpush1.bf16.xpose.msra.mxu0 0
        %1173 = vmatprep.subr.bf16.mxu0 0
        %1174 = vmatpush1.bf16.xpose.msra.mxu0 0
        %1175 = vmatprep.mubr.bf16.mxu0 0
        %1176 = vmatmul.mubr.bf16.gmra.mrb[0].mxu0 %v1141
        %v1177 = vpop.f32.mrb[0].mxu0
        %v1178 = vadd.f32 0.0, %v1177
        %v1179 = vpop.f32.mrb[0].mxu0
        %v1180 = vpop.f32.mrb[0].mxu0
        %v1181 = vpop.f32.mrb[0].mxu0
        %1182 = vdwg.mxu0
        %v1183 = vmul.f32 %v1049, 0.35355338
        %v1184 = vmul.f32 %v1092, 0.35355338
        %v1185 = vmul.f32 %v1135, 0.35355338
        %v1186 = vmul.f32 %v1178, 0.35355338
        %vm1187 = vcmask 64512
        %v1188 = vsel %vm1187, %v1183, -inf
        %1189 = vmax.xlane.f32.xlu0 %v1188
        %v1190 = vpop.xlane.xlu0 %1189
        %v1191 = vsel %vm1187, %v1184, -inf
        %1192 = vmax.xlane.f32.xlu0 %v1191
        %v1193 = vpop.xlane.xlu0 %1192
        %v1194 = vsel %vm1187, %v1185, -inf
        %1195 = vmax.xlane.f32.xlu0 %v1194
        %v1196 = vpop.xlane.xlu0 %1195
        %v1197 = vsel %vm1187, %v1186, -inf
        %1198 = vmax.xlane.f32.xlu0 %v1197
        %v1199 = vpop.xlane.xlu0 %1198
        %v1200 = vsub.f32 %v1183, %v1190
        %v1201 = vsub.f32 %v1184, %v1193
        %v1202 = vsub.f32 %v1185, %v1196
        %v1203 = vsub.f32 %v1186, %v1199
        %v1204 = vmul.f32 %v1200, 1.442695
        %v1205 = vpow.pop %v1204
        %v1206 = vmul.f32 %v1201, 1.442695
        %v1207 = vpow.pop %v1206
        %v1208 = vmul.f32 %v1202, 1.442695
        %v1209 = vpow.pop %v1208
        %v1210 = vmul.f32 %v1203, 1.442695
        %v1211 = vpow.pop %v1210
        %v1212 = vsel %vm1187, %v1205, 0.0
        %1213 = vadd.xlane.f32.xlu0 %v1212
        %v1214 = vpop.xlane.xlu0 %1213
        %v1215 = vsel %vm1187, %v1207, 0.0
        %1216 = vadd.xlane.f32.xlu0 %v1215
        %v1217 = vpop.xlane.xlu0 %1216
        %v1218 = vsel %vm1187, %v1209, 0.0
        %1219 = vadd.xlane.f32.xlu0 %v1218
        %v1220 = vpop.xlane.xlu0 %1219
        %v1221 = vsel %vm1187, %v1211, 0.0
        %1222 = vadd.xlane.f32.xlu0 %v1221
        %v1223 = vpop.xlane.xlu0 %1222
        %v1224 = vrcp.pop %v1214
        %v1225 = vrcp.pop %v1217
        %v1226 = vrcp.pop %v1220
        %v1227 = vrcp.pop %v1223
        %v1228 = vmul.f32 %v1205, %v1224
        %v1229 = vmul.f32 %v1207, %v1225
        %v1230 = vmul.f32 %v1209, %v1226
        %v1231 = vmul.f32 %v1211, %v1227
        %v1232 = vpack.c.bf16 %v1228, %v1228
        %v1233 = vpack.c.bf16 %v1229, %v1229
        %v1234 = vpack.c.bf16 %v1230, %v1230
        %v1235 = vpack.c.bf16 %v1231, %v1231
        %v1237 = vsel %vm1187, %v1232, 0
        %vm1239 = vcmask 1043456
        %v1241 = vsel %vm1239, %v1007, 0
        %1243 = vmatprep.subr.bf16.mxu0 0
        %1244 = vmatpush1.bf16.msra.mxu0 %v1241
        %1245 = vmatprep.subr.bf16.mxu0 0
        %1246 = vmatpush1.bf16.msra.mxu0 0
        %1247 = vmatprep.subr.bf16.mxu0 0
        %1248 = vmatpush1.bf16.msra.mxu0 0
        %1249 = vmatprep.subr.bf16.mxu0 0
        %1250 = vmatpush1.bf16.msra.mxu0 0
        %1251 = vmatprep.subr.bf16.mxu0 0
        %1252 = vmatpush1.bf16.msra.mxu0 0
        %1253 = vmatprep.subr.bf16.mxu0 0
        %1254 = vmatpush1.bf16.msra.mxu0 0
        %1255 = vmatprep.subr.bf16.mxu0 0
        %1256 = vmatpush1.bf16.msra.mxu0 0
        %1257 = vmatprep.subr.bf16.mxu0 0
        %1258 = vmatpush1.bf16.msra.mxu0 0
        %1259 = vmatprep.subr.bf16.mxu0 0
        %1260 = vmatpush1.bf16.msra.mxu0 0
        %1261 = vmatprep.subr.bf16.mxu0 0
        %1262 = vmatpush1.bf16.msra.mxu0 0
        %1263 = vmatprep.subr.bf16.mxu0 0
        %1264 = vmatpush1.bf16.msra.mxu0 0
        %1265 = vmatprep.subr.bf16.mxu0 0
        %1266 = vmatpush1.bf16.msra.mxu0 0
        %1267 = vmatprep.subr.bf16.mxu0 0
        %1268 = vmatpush1.bf16.msra.mxu0 0
        %1269 = vmatprep.subr.bf16.mxu0 0
        %1270 = vmatpush1.bf16.msra.mxu0 0
        %1271 = vmatprep.subr.bf16.mxu0 0
        %1272 = vmatpush1.bf16.msra.mxu0 0
        %1273 = vmatprep.subr.bf16.mxu0 0
        %1274 = vmatpush1.bf16.msra.mxu0 0
        %1275 = vmatprep.mubr.bf16.mxu0 0
        %1276 = vmatmul.mubr.bf16.gmra.mrb[0].mxu0 %v1237
        %v1277 = vpop.f32.mrb[0].mxu0
        %v1278 = vadd.f32 0.0, %v1277
        %v1279 = vpop.f32.mrb[0].mxu0
        %v1280 = vpop.f32.mrb[0].mxu0
        %v1281 = vpop.f32.mrb[0].mxu0
        %1282 = vdwg.mxu0
        %v1284 = vsel %vm1187, %v1233, 0
        %1286 = vmatprep.subr.bf16.mxu0 0
        %1287 = vmatpush1.bf16.msra.mxu0 %v1241
        %1288 = vmatprep.subr.bf16.mxu0 0
        %1289 = vmatpush1.bf16.msra.mxu0 0
        %1290 = vmatprep.subr.bf16.mxu0 0
        %1291 = vmatpush1.bf16.msra.mxu0 0
        %1292 = vmatprep.subr.bf16.mxu0 0
        %1293 = vmatpush1.bf16.msra.mxu0 0
        %1294 = vmatprep.subr.bf16.mxu0 0
        %1295 = vmatpush1.bf16.msra.mxu0 0
        %1296 = vmatprep.subr.bf16.mxu0 0
        %1297 = vmatpush1.bf16.msra.mxu0 0
        %1298 = vmatprep.subr.bf16.mxu0 0
        %1299 = vmatpush1.bf16.msra.mxu0 0
        %1300 = vmatprep.subr.bf16.mxu0 0
        %1301 = vmatpush1.bf16.msra.mxu0 0
        %1302 = vmatprep.subr.bf16.mxu0 0
        %1303 = vmatpush1.bf16.msra.mxu0 0
        %1304 = vmatprep.subr.bf16.mxu0 0
        %1305 = vmatpush1.bf16.msra.mxu0 0
        %1306 = vmatprep.subr.bf16.mxu0 0
        %1307 = vmatpush1.bf16.msra.mxu0 0
        %1308 = vmatprep.subr.bf16.mxu0 0
        %1309 = vmatpush1.bf16.msra.mxu0 0
        %1310 = vmatprep.subr.bf16.mxu0 0
        %1311 = vmatpush1.bf16.msra.mxu0 0
        %1312 = vmatprep.subr.bf16.mxu0 0
        %1313 = vmatpush1.bf16.msra.mxu0 0
        %1314 = vmatprep.subr.bf16.mxu0 0
        %1315 = vmatpush1.bf16.msra.mxu0 0
        %1316 = vmatprep.subr.bf16.mxu0 0
        %1317 = vmatpush1.bf16.msra.mxu0 0
        %1318 = vmatprep.mubr.bf16.mxu0 0
        %1319 = vmatmul.mubr.bf16.gmra.mrb[0].mxu0 %v1284
        %v1320 = vpop.f32.mrb[0].mxu0
        %v1321 = vadd.f32 0.0, %v1320
        %v1322 = vpop.f32.mrb[0].mxu0
        %v1323 = vpop.f32.mrb[0].mxu0
        %v1324 = vpop.f32.mrb[0].mxu0
        %1325 = vdwg.mxu0
        %v1327 = vsel %vm1187, %v1234, 0
        %1329 = vmatprep.subr.bf16.mxu0 0
        %1330 = vmatpush1.bf16.msra.mxu0 %v1241
        %1331 = vmatprep.subr.bf16.mxu0 0
        %1332 = vmatpush1.bf16.msra.mxu0 0
        %1333 = vmatprep.subr.bf16.mxu0 0
        %1334 = vmatpush1.bf16.msra.mxu0 0
        %1335 = vmatprep.subr.bf16.mxu0 0
        %1336 = vmatpush1.bf16.msra.mxu0 0
        %1337 = vmatprep.subr.bf16.mxu0 0
        %1338 = vmatpush1.bf16.msra.mxu0 0
        %1339 = vmatprep.subr.bf16.mxu0 0
        %1340 = vmatpush1.bf16.msra.mxu0 0
        %1341 = vmatprep.subr.bf16.mxu0 0
        %1342 = vmatpush1.bf16.msra.mxu0 0
        %1343 = vmatprep.subr.bf16.mxu0 0
        %1344 = vmatpush1.bf16.msra.mxu0 0
        %1345 = vmatprep.subr.bf16.mxu0 0
        %1346 = vmatpush1.bf16.msra.mxu0 0
        %1347 = vmatprep.subr.bf16.mxu0 0
        %1348 = vmatpush1.bf16.msra.mxu0 0
        %1349 = vmatprep.subr.bf16.mxu0 0
        %1350 = vmatpush1.bf16.msra.mxu0 0
        %1351 = vmatprep.subr.bf16.mxu0 0
        %1352 = vmatpush1.bf16.msra.mxu0 0
        %1353 = vmatprep.subr.bf16.mxu0 0
        %1354 = vmatpush1.bf16.msra.mxu0 0
        %1355 = vmatprep.subr.bf16.mxu0 0
        %1356 = vmatpush1.bf16.msra.mxu0 0
        %1357 = vmatprep.subr.bf16.mxu0 0
        %1358 = vmatpush1.bf16.msra.mxu0 0
        %1359 = vmatprep.subr.bf16.mxu0 0
        %1360 = vmatpush1.bf16.msra.mxu0 0
        %1361 = vmatprep.mubr.bf16.mxu0 0
        %1362 = vmatmul.mubr.bf16.gmra.mrb[0].mxu0 %v1327
        %v1363 = vpop.f32.mrb[0].mxu0
        %v1364 = vadd.f32 0.0, %v1363
        %v1365 = vpop.f32.mrb[0].mxu0
        %v1366 = vpop.f32.mrb[0].mxu0
        %v1367 = vpop.f32.mrb[0].mxu0
        %1368 = vdwg.mxu0
        %v1370 = vsel %vm1187, %v1235, 0
        %1372 = vmatprep.subr.bf16.mxu0 0
        %1373 = vmatpush1.bf16.msra.mxu0 %v1241
        %1374 = vmatprep.subr.bf16.mxu0 0
        %1375 = vmatpush1.bf16.msra.mxu0 0
        %1376 = vmatprep.subr.bf16.mxu0 0
        %1377 = vmatpush1.bf16.msra.mxu0 0
        %1378 = vmatprep.subr.bf16.mxu0 0
        %1379 = vmatpush1.bf16.msra.mxu0 0
        %1380 = vmatprep.subr.bf16.mxu0 0
        %1381 = vmatpush1.bf16.msra.mxu0 0
        %1382 = vmatprep.subr.bf16.mxu0 0
        %1383 = vmatpush1.bf16.msra.mxu0 0
        %1384 = vmatprep.subr.bf16.mxu0 0
        %1385 = vmatpush1.bf16.msra.mxu0 0
        %1386 = vmatprep.subr.bf16.mxu0 0
        %1387 = vmatpush1.bf16.msra.mxu0 0
        %1388 = vmatprep.subr.bf16.mxu0 0
        %1389 = vmatpush1.bf16.msra.mxu0 0
        %1390 = vmatprep.subr.bf16.mxu0 0
        %1391 = vmatpush1.bf16.msra.mxu0 0
        %1392 = vmatprep.subr.bf16.mxu0 0
        %1393 = vmatpush1.bf16.msra.mxu0 0
        %1394 = vmatprep.subr.bf16.mxu0 0
        %1395 = vmatpush1.bf16.msra.mxu0 0
        %1396 = vmatprep.subr.bf16.mxu0 0
        %1397 = vmatpush1.bf16.msra.mxu0 0
        %1398 = vmatprep.subr.bf16.mxu0 0
        %1399 = vmatpush1.bf16.msra.mxu0 0
        %1400 = vmatprep.subr.bf16.mxu0 0
        %1401 = vmatpush1.bf16.msra.mxu0 0
        %1402 = vmatprep.subr.bf16.mxu0 0
        %1403 = vmatpush1.bf16.msra.mxu0 0
        %1404 = vmatprep.mubr.bf16.mxu0 0
        %1405 = vmatmul.mubr.bf16.gmra.mrb[0].mxu0 %v1370
        %v1406 = vpop.f32.mrb[0].mxu0
        %v1407 = vadd.f32 0.0, %v1406
        %v1408 = vpop.f32.mrb[0].mxu0
        %v1409 = vpop.f32.mrb[0].mxu0
        %v1410 = vpop.f32.mrb[0].mxu0
        %1411 = vdwg.mxu0
        %v1414 = vunpack.c.l.s4 1966171168
        %v1415 = vunpack.c.0.s8 %v1414
        %v1416 = vlaneseq
        %v1417 = vshrl.u32 %v1416, 7
        %v1418 = vsub.s32 %v1415, %v1417
        %v1419 = vrot.slane %v924, %v1418
        %v1420 = vcombine.high %v1419, %v1419
        %v1422 = vunpack.c.l.s4 1966171168
        %v1423 = vunpack.c.0.s8 %v1422
        %v1424 = vlaneseq
        %v1425 = vshrl.u32 %v1424, 7
        %v1426 = vsub.s32 %v1423, %v1425
        %v1427 = vrot.slane %v1419, %v1426
        %v1429 = vunpack.c.l.s4 1966171168
        %v1430 = vunpack.c.0.s8 %v1429
        %v1431 = vlaneseq
        %v1432 = vshrl.u32 %v1431, 7
        %v1433 = vsub.s32 %v1430, %v1432
        %v1434 = vrot.slane %v1420, %v1433
        %v1435 = vcombine.high %v1427, %v1427
        %v1436 = vcombine.high %v1434, %v1434
        %v1437 = vlaneseq
        %v1438 = vshrl.u32 %v1437, 7
        %v1439 = vsub.s32 0, %v1438
        %v1440 = vrot.slane %v1427, %v1439
        %v1441 = vlaneseq
        %v1442 = vshrl.u32 %v1441, 7
        %v1443 = vsub.s32 0, %v1442
        %v1444 = vrot.slane %v1434, %v1443
        %v1445 = vlaneseq
        %v1446 = vshrl.u32 %v1445, 7
        %v1447 = vsub.s32 0, %v1446
        %v1448 = vrot.slane %v1435, %v1447
        %v1449 = vlaneseq
        %v1450 = vshrl.u32 %v1449, 7
        %v1451 = vsub.s32 0, %v1450
        %v1452 = vrot.slane %v1436, %v1451
        %v1457 = vmul.f32 %v1278, %v1440
        %v1458 = vmul.f32 %v1321, %v1444
        %v1459 = vmul.f32 %v1364, %v1448
        %v1460 = vmul.f32 %v1407, %v1452
        %v1461 = vsel %vm765, %v1457, 0.0
        %v1462 = vsel %vm765, %v1458, 0.0
        %v1463 = vadd.f32 %v1461, %v1462
        %v1464 = vsel %vm765, %v1459, 0.0
        %v1465 = vadd.f32 %v1463, %v1464
        %v1466 = vsel %vm765, %v1460, 0.0
        %v1467 = vadd.f32 %v1465, %v1466
        %v1468 = vpack.c.bf16 %v1467, %v1467
        %v1469 = vld [vmem:[%s599] sm:$0xf]
        %v1470 = vld [vmem:[%s599 + $0x4] sm:$0xf]
        %v1471 = vld [vmem:[%s599 + $0x8] sm:$0xf]
        %v1472 = vld [vmem:[%s599 + $0xc] sm:$0xf]
        %v1477 = vunpack.c.l.b16 %v1469
        %v1478 = vunpack.c.l.b16 %v1470
        %v1479 = vunpack.c.l.b16 %v1471
        %v1480 = vunpack.c.l.b16 %v1472
        %v1481 = vpack.c.b16 %v1478, %v1477
        %v1482 = vpack.c.b16 %v1480, %v1479
        %v1486 = vsel %vm765, %v1468, 0
        %1488 = vmatprep.subr.bf16.mxu0 0
        %1489 = vmatpush1.bf16.msra.mxu0 %v1481
        %1490 = vmatprep.subr.bf16.mxu0 0
        %1491 = vmatpush1.bf16.msra.mxu0 %v1482
        %1492 = vmatprep.subr.bf16.mxu0 0
        %1493 = vmatpush1.bf16.msra.mxu0 0
        %1494 = vmatprep.subr.bf16.mxu0 0
        %1495 = vmatpush1.bf16.msra.mxu0 0
        %1496 = vmatprep.subr.bf16.mxu0 0
        %1497 = vmatpush1.bf16.msra.mxu0 0
        %1498 = vmatprep.subr.bf16.mxu0 0
        %1499 = vmatpush1.bf16.msra.mxu0 0
        %1500 = vmatprep.subr.bf16.mxu0 0
        %1501 = vmatpush1.bf16.msra.mxu0 0
        %1502 = vmatprep.subr.bf16.mxu0 0
        %1503 = vmatpush1.bf16.msra.mxu0 0
        %1504 = vmatprep.subr.bf16.mxu0 0
        %1505 = vmatpush1.bf16.msra.mxu0 0
        %1506 = vmatprep.subr.bf16.mxu0 0
        %1507 = vmatpush1.bf16.msra.mxu0 0
        %1508 = vmatprep.subr.bf16.mxu0 0
        %1509 = vmatpush1.bf16.msra.mxu0 0
        %1510 = vmatprep.subr.bf16.mxu0 0
        %1511 = vmatpush1.bf16.msra.mxu0 0
        %1512 = vmatprep.subr.bf16.mxu0 0
        %1513 = vmatpush1.bf16.msra.mxu0 0
        %1514 = vmatprep.subr.bf16.mxu0 0
        %1515 = vmatpush1.bf16.msra.mxu0 0
        %1516 = vmatprep.subr.bf16.mxu0 0
        %1517 = vmatpush1.bf16.msra.mxu0 0
        %1518 = vmatprep.subr.bf16.mxu0 0
        %1519 = vmatpush1.bf16.msra.mxu0 0
        %1520 = vmatprep.mubr.bf16.mxu0 0
        %1521 = vmatmul.mubr.bf16.gmra.mrb[0].mxu0 %v1486
        %v1522 = vpop.f32.mrb[0].mxu0
        %v1523 = vadd.f32 %v737, %v1522
        %v1524 = vpop.f32.mrb[0].mxu0
        %v1525 = vpop.f32.mrb[0].mxu0
        %v1526 = vpop.f32.mrb[0].mxu0
        %1527 = vdwg.mxu0
        %v1528 = vld [vmem:[%s602] sm:$0x1]
        %v1529 = vld [vmem:[%s605] sm:$0x1]
        %v1530 = vsel %vm765, %v1523, 0.0
        %1531 = vadd.xlane.f32.xlu0 %v1530
        %v1532 = vpop.xlane.xlu0 %1531
        %v1533 = vrcp.pop 32.0
        %v1534 = vmul.f32 %v1532, %v1533
        %v1535 = vsub.f32 %v1523, %v1534
        %v1536 = vmul.f32 %v1535, %v1535
        %v1537 = vsel %vm765, %v1536, 0.0
        %1538 = vadd.xlane.f32.xlu0 %v1537
        %v1539 = vpop.xlane.xlu0 %1538
        %v1540 = vmul.f32 %v1539, %v1533
        %v1541 = vadd.f32 %v1540, 1e-05
        %v1542 = vrsqrt.pop %v1541
        %v1543 = vmul.f32 %v1535, %v1542
        %v1545 = vlaneseq
        %v1546 = vshrl.u32 %v1545, 7
        %v1547 = vsub.s32 0, %v1546
        %v1548 = vrot.slane %v1528, %v1547
        %v1550 = vmul.f32 %v1543, %v1548
        %v1552 = vlaneseq
        %v1553 = vshrl.u32 %v1552, 7
        %v1554 = vsub.s32 0, %v1553
        %v1555 = vrot.slane %v1529, %v1554
        %v1557 = vadd.f32 %v1550, %v1555
        %v1558 = vpack.c.bf16 %v1557, %v1557
        %v1559 = vld [vmem:[%s610] sm:$0xff]
        %v1560 = vld [vmem:[%s610 + $0x8] sm:$0xff]
        %v1561 = vld [vmem:[%s610 + $0x10] sm:$0xff]
        %v1562 = vld [vmem:[%s610 + $0x18] sm:$0xff]
        %v1563 = vld [vmem:[%s610 + $0x20] sm:$0xff]
        %v1564 = vld [vmem:[%s610 + $0x28] sm:$0xff]
        %v1565 = vld [vmem:[%s610 + $0x30] sm:$0xff]
        %v1566 = vld [vmem:[%s610 + $0x38] sm:$0xff]
        %v1567 = vld [vmem:[%s610 + $0x40] sm:$0xff]
        %v1568 = vld [vmem:[%s610 + $0x48] sm:$0xff]
        %v1569 = vld [vmem:[%s610 + $0x50] sm:$0xff]
        %v1570 = vld [vmem:[%s610 + $0x58] sm:$0xff]
        %v1571 = vld [vmem:[%s610 + $0x60] sm:$0xff]
        %v1572 = vld [vmem:[%s610 + $0x68] sm:$0xff]
        %v1573 = vld [vmem:[%s610 + $0x70] sm:$0xff]
        %v1574 = vld [vmem:[%s610 + $0x78] sm:$0xff]
        %v1575 = vld [vmem:[%s610 + $0x80] sm:$0xff]
        %v1576 = vld [vmem:[%s610 + $0x88] sm:$0xff]
        %v1577 = vld [vmem:[%s610 + $0x90] sm:$0xff]
        %v1578 = vld [vmem:[%s610 + $0x98] sm:$0xff]
        %v1579 = vld [vmem:[%s610 + $0xa0] sm:$0xff]
        %v1580 = vld [vmem:[%s610 + $0xa8] sm:$0xff]
        %v1581 = vld [vmem:[%s610 + $0xb0] sm:$0xff]
        %v1582 = vld [vmem:[%s610 + $0xb8] sm:$0xff]
        %v1583 = vld [vmem:[%s610 + $0xc0] sm:$0xff]
        %v1584 = vld [vmem:[%s610 + $0xc8] sm:$0xff]
        %v1585 = vld [vmem:[%s610 + $0xd0] sm:$0xff]
        %v1586 = vld [vmem:[%s610 + $0xd8] sm:$0xff]
        %v1587 = vld [vmem:[%s610 + $0xe0] sm:$0xff]
        %v1588 = vld [vmem:[%s610 + $0xe8] sm:$0xff]
        %v1589 = vld [vmem:[%s610 + $0xf0] sm:$0xff]
        %v1590 = vld [vmem:[%s610 + $0xf8] sm:$0xff]
        %v1591 = vld [vmem:[%s614] sm:$0xff]
        %v1592 = vld [vmem:[%s614 + $0x8] sm:$0xff]
        %v1595 = vlaneseq
        %v1596 = vshrl.u32 %v1595, 7
        %v1597 = vsub.s32 0, %v1596
        %v1598 = vrot.slane %v1591, %v1597
        %v1599 = vlaneseq
        %v1600 = vshrl.u32 %v1599, 7
        %v1601 = vsub.s32 1, %v1600
        %v1602 = vrot.slane %v1591, %v1601
        %v1603 = vlaneseq
        %v1604 = vshrl.u32 %v1603, 7
        %v1605 = vsub.s32 2, %v1604
        %v1606 = vrot.slane %v1591, %v1605
        %v1607 = vlaneseq
        %v1608 = vshrl.u32 %v1607, 7
        %v1609 = vsub.s32 3, %v1608
        %v1610 = vrot.slane %v1591, %v1609
        %v1611 = vlaneseq
        %v1612 = vshrl.u32 %v1611, 7
        %v1613 = vsub.s32 4, %v1612
        %v1614 = vrot.slane %v1591, %v1613
        %v1615 = vlaneseq
        %v1616 = vshrl.u32 %v1615, 7
        %v1617 = vsub.s32 5, %v1616
        %v1618 = vrot.slane %v1591, %v1617
        %v1619 = vlaneseq
        %v1620 = vshrl.u32 %v1619, 7
        %v1621 = vsub.s32 6, %v1620
        %v1622 = vrot.slane %v1591, %v1621
        %v1623 = vlaneseq
        %v1624 = vshrl.u32 %v1623, 7
        %v1625 = vsub.s32 7, %v1624
        %v1626 = vrot.slane %v1591, %v1625
        %v1627 = vlaneseq
        %v1628 = vshrl.u32 %v1627, 7
        %v1629 = vsub.s32 0, %v1628
        %v1630 = vrot.slane %v1592, %v1629
        %v1631 = vlaneseq
        %v1632 = vshrl.u32 %v1631, 7
        %v1633 = vsub.s32 1, %v1632
        %v1634 = vrot.slane %v1592, %v1633
        %v1635 = vlaneseq
        %v1636 = vshrl.u32 %v1635, 7
        %v1637 = vsub.s32 2, %v1636
        %v1638 = vrot.slane %v1592, %v1637
        %v1639 = vlaneseq
        %v1640 = vshrl.u32 %v1639, 7
        %v1641 = vsub.s32 3, %v1640
        %v1642 = vrot.slane %v1592, %v1641
        %v1643 = vlaneseq
        %v1644 = vshrl.u32 %v1643, 7
        %v1645 = vsub.s32 4, %v1644
        %v1646 = vrot.slane %v1592, %v1645
        %v1647 = vlaneseq
        %v1648 = vshrl.u32 %v1647, 7
        %v1649 = vsub.s32 5, %v1648
        %v1650 = vrot.slane %v1592, %v1649
        %v1651 = vlaneseq
        %v1652 = vshrl.u32 %v1651, 7
        %v1653 = vsub.s32 6, %v1652
        %v1654 = vrot.slane %v1592, %v1653
        %v1655 = vlaneseq
        %v1656 = vshrl.u32 %v1655, 7
        %v1657 = vsub.s32 7, %v1656
        %v1658 = vrot.slane %v1592, %v1657
        %v1707 = vunpack.c.l.b16 %v1559
        %v1708 = vunpack.c.h.b16 %v1559
        %v1709 = vunpack.c.l.b16 %v1560
        %v1710 = vunpack.c.h.b16 %v1560
        %v1711 = vunpack.c.l.b16 %v1561
        %v1712 = vunpack.c.h.b16 %v1561
        %v1713 = vunpack.c.l.b16 %v1562
        %v1714 = vunpack.c.h.b16 %v1562
        %v1715 = vunpack.c.l.b16 %v1563
        %v1716 = vunpack.c.h.b16 %v1563
        %v1717 = vunpack.c.l.b16 %v1564
        %v1718 = vunpack.c.h.b16 %v1564
        %v1719 = vunpack.c.l.b16 %v1565
        %v1720 = vunpack.c.h.b16 %v1565
        %v1721 = vunpack.c.l.b16 %v1566
        %v1722 = vunpack.c.h.b16 %v1566
        %v1723 = vunpack.c.l.b16 %v1567
        %v1724 = vunpack.c.h.b16 %v1567
        %v1725 = vunpack.c.l.b16 %v1568
        %v1726 = vunpack.c.h.b16 %v1568
        %v1727 = vunpack.c.l.b16 %v1569
        %v1728 = vunpack.c.h.b16 %v1569
        %v1729 = vunpack.c.l.b16 %v1570
        %v1730 = vunpack.c.h.b16 %v1570
        %v1731 = vunpack.c.l.b16 %v1571
        %v1732 = vunpack.c.h.b16 %v1571
        %v1733 = vunpack.c.l.b16 %v1572
        %v1734 = vunpack.c.h.b16 %v1572
        %v1735 = vunpack.c.l.b16 %v1573
        %v1736 = vunpack.c.h.b16 %v1573
        %v1737 = vunpack.c.l.b16 %v1574
        %v1738 = vunpack.c.h.b16 %v1574
        %v1739 = vunpack.c.l.b16 %v1575
        %v1740 = vunpack.c.h.b16 %v1575
        %v1741 = vunpack.c.l.b16 %v1576
        %v1742 = vunpack.c.h.b16 %v1576
        %v1743 = vunpack.c.l.b16 %v1577
        %v1744 = vunpack.c.h.b16 %v1577
        %v1745 = vunpack.c.l.b16 %v1578
        %v1746 = vunpack.c.h.b16 %v1578
        %v1747 = vunpack.c.l.b16 %v1579
        %v1748 = vunpack.c.h.b16 %v1579
        %v1749 = vunpack.c.l.b16 %v1580
        %v1750 = vunpack.c.h.b16 %v1580
        %v1751 = vunpack.c.l.b16 %v1581
        %v1752 = vunpack.c.h.b16 %v1581
        %v1753 = vunpack.c.l.b16 %v1582
        %v1754 = vunpack.c.h.b16 %v1582
        %v1755 = vunpack.c.l.b16 %v1583
        %v1756 = vunpack.c.h.b16 %v1583
        %v1757 = vunpack.c.l.b16 %v1584
        %v1758 = vunpack.c.h.b16 %v1584
        %v1759 = vunpack.c.l.b16 %v1585
        %v1760 = vunpack.c.h.b16 %v1585
        %v1761 = vunpack.c.l.b16 %v1586
        %v1762 = vunpack.c.h.b16 %v1586
        %v1763 = vunpack.c.l.b16 %v1587
        %v1764 = vunpack.c.h.b16 %v1587
        %v1765 = vunpack.c.l.b16 %v1588
        %v1766 = vunpack.c.h.b16 %v1588
        %v1767 = vunpack.c.l.b16 %v1589
        %v1768 = vunpack.c.h.b16 %v1589
        %v1769 = vunpack.c.l.b16 %v1590
        %v1770 = vunpack.c.h.b16 %v1590
        %v1771 = vpack.c.b16 %v1723, %v1707
        %v1772 = vpack.c.b16 %v1724, %v1708
        %v1773 = vpack.c.b16 %v1725, %v1709
        %v1774 = vpack.c.b16 %v1726, %v1710
        %v1775 = vpack.c.b16 %v1727, %v1711
        %v1776 = vpack.c.b16 %v1728, %v1712
        %v1777 = vpack.c.b16 %v1729, %v1713
        %v1778 = vpack.c.b16 %v1730, %v1714
        %v1779 = vpack.c.b16 %v1731, %v1715
        %v1780 = vpack.c.b16 %v1732, %v1716
        %v1781 = vpack.c.b16 %v1733, %v1717
        %v1782 = vpack.c.b16 %v1734, %v1718
        %v1783 = vpack.c.b16 %v1735, %v1719
        %v1784 = vpack.c.b16 %v1736, %v1720
        %v1785 = vpack.c.b16 %v1737, %v1721
        %v1786 = vpack.c.b16 %v1738, %v1722
        %v1787 = vpack.c.b16 %v1755, %v1739
        %v1788 = vpack.c.b16 %v1756, %v1740
        %v1789 = vpack.c.b16 %v1757, %v1741
        %v1790 = vpack.c.b16 %v1758, %v1742
        %v1791 = vpack.c.b16 %v1759, %v1743
        %v1792 = vpack.c.b16 %v1760, %v1744
        %v1793 = vpack.c.b16 %v1761, %v1745
        %v1794 = vpack.c.b16 %v1762, %v1746
        %v1795 = vpack.c.b16 %v1763, %v1747
        %v1796 = vpack.c.b16 %v1764, %v1748
        %v1797 = vpack.c.b16 %v1765, %v1749
        %v1798 = vpack.c.b16 %v1766, %v1750
        %v1799 = vpack.c.b16 %v1767, %v1751
        %v1800 = vpack.c.b16 %v1768, %v1752
        %v1801 = vpack.c.b16 %v1769, %v1753
        %v1802 = vpack.c.b16 %v1770, %v1754
        %v1836 = vsel %vm765, %v1558, 0
        %1838 = vmatprep.subr.bf16.mxu0 %v1772
        %1839 = vmatpush1.bf16.msra.mxu0 %v1771
        %1840 = vmatprep.subr.bf16.mxu0 %v1788
        %1841 = vmatpush1.bf16.msra.mxu0 %v1787
        %1842 = vmatprep.subr.bf16.mxu0 0
        %1843 = vmatpush1.bf16.msra.mxu0 0
        %1844 = vmatprep.subr.bf16.mxu0 0
        %1845 = vmatpush1.bf16.msra.mxu0 0
        %1846 = vmatprep.subr.bf16.mxu0 0
        %1847 = vmatpush1.bf16.msra.mxu0 0
        %1848 = vmatprep.subr.bf16.mxu0 0
        %1849 = vmatpush1.bf16.msra.mxu0 0
        %1850 = vmatprep.subr.bf16.mxu0 0
        %1851 = vmatpush1.bf16.msra.mxu0 0
        %1852 = vmatprep.subr.bf16.mxu0 0
        %1853 = vmatpush1.bf16.msra.mxu0 0
        %1854 = vmatprep.subr.bf16.mxu0 0
        %1855 = vmatpush1.bf16.msra.mxu0 0
        %1856 = vmatprep.subr.bf16.mxu0 0
        %1857 = vmatpush1.bf16.msra.mxu0 0
        %1858 = vmatprep.subr.bf16.mxu0 0
        %1859 = vmatpush1.bf16.msra.mxu0 0
        %1860 = vmatprep.subr.bf16.mxu0 0
        %1861 = vmatpush1.bf16.msra.mxu0 0
        %1862 = vmatprep.subr.bf16.mxu0 0
        %1863 = vmatpush1.bf16.msra.mxu0 0
        %1864 = vmatprep.subr.bf16.mxu0 0
        %1865 = vmatpush1.bf16.msra.mxu0 0
        %1866 = vmatprep.subr.bf16.mxu0 0
        %1867 = vmatpush1.bf16.msra.mxu0 0
        %1868 = vmatprep.subr.bf16.mxu0 0
        %1869 = vmatpush1.bf16.msra.mxu0 0
        %1870 = vmatprep.mubr.bf16.mxu0 0
        %1871 = vmatmul.mubr.bf16.gmra.mrb[0].mxu0 %v1836
        %v1872 = vpop.f32.mrb[0].mxu0
        %v1873 = vadd.f32 %v1598, %v1872
        %v1874 = vpop.f32.mrb[0].mxu0
        %v1875 = vadd.f32 %v1602, %v1874
        %v1876 = vpop.f32.mrb[0].mxu0
        %v1877 = vpop.f32.mrb[0].mxu0
        %1878 = vdwg.mxu0
        %1879 = vmatprep.subr.bf16.mxu0 %v1774
        %1880 = vmatpush1.bf16.msra.mxu0 %v1773
        %1881 = vmatprep.subr.bf16.mxu0 %v1790
        %1882 = vmatpush1.bf16.msra.mxu0 %v1789
        %1883 = vmatprep.subr.bf16.mxu0 0
        %1884 = vmatpush1.bf16.msra.mxu0 0
        %1885 = vmatprep.subr.bf16.mxu0 0
        %1886 = vmatpush1.bf16.msra.mxu0 0
        %1887 = vmatprep.subr.bf16.mxu0 0
        %1888 = vmatpush1.bf16.msra.mxu0 0
        %1889 = vmatprep.subr.bf16.mxu0 0
        %1890 = vmatpush1.bf16.msra.mxu0 0
        %1891 = vmatprep.subr.bf16.mxu0 0
        %1892 = vmatpush1.bf16.msra.mxu0 0
        %1893 = vmatprep.subr.bf16.mxu0 0
        %1894 = vmatpush1.bf16.msra.mxu0 0
        %1895 = vmatprep.subr.bf16.mxu0 0
        %1896 = vmatpush1.bf16.msra.mxu0 0
        %1897 = vmatprep.subr.bf16.mxu0 0
        %1898 = vmatpush1.bf16.msra.mxu0 0
        %1899 = vmatprep.subr.bf16.mxu0 0
        %1900 = vmatpush1.bf16.msra.mxu0 0
        %1901 = vmatprep.subr.bf16.mxu0 0
        %1902 = vmatpush1.bf16.msra.mxu0 0
        %1903 = vmatprep.subr.bf16.mxu0 0
        %1904 = vmatpush1.bf16.msra.mxu0 0
        %1905 = vmatprep.subr.bf16.mxu0 0
        %1906 = vmatpush1.bf16.msra.mxu0 0
        %1907 = vmatprep.subr.bf16.mxu0 0
        %1908 = vmatpush1.bf16.msra.mxu0 0
        %1909 = vmatprep.subr.bf16.mxu0 0
        %1910 = vmatpush1.bf16.msra.mxu0 0
        %1911 = vmatprep.mubr.bf16.mxu0 0
        %1912 = vmatmul.mubr.bf16.gmra.mrb[0].mxu0 %v1836
        %v1913 = vpop.f32.mrb[0].mxu0
        %v1914 = vadd.f32 %v1606, %v1913
        %v1915 = vpop.f32.mrb[0].mxu0
        %v1916 = vadd.f32 %v1610, %v1915
        %v1917 = vpop.f32.mrb[0].mxu0
        %v1918 = vpop.f32.mrb[0].mxu0
        %1919 = vdwg.mxu0
        %1920 = vmatprep.subr.bf16.mxu0 %v1776
        %1921 = vmatpush1.bf16.msra.mxu0 %v1775
        %1922 = vmatprep.subr.bf16.mxu0 %v1792
        %1923 = vmatpush1.bf16.msra.mxu0 %v1791
        %1924 = vmatprep.subr.bf16.mxu0 0
        %1925 = vmatpush1.bf16.msra.mxu0 0
        %1926 = vmatprep.subr.bf16.mxu0 0
        %1927 = vmatpush1.bf16.msra.mxu0 0
        %1928 = vmatprep.subr.bf16.mxu0 0
        %1929 = vmatpush1.bf16.msra.mxu0 0
        %1930 = vmatprep.subr.bf16.mxu0 0
        %1931 = vmatpush1.bf16.msra.mxu0 0
        %1932 = vmatprep.subr.bf16.mxu0 0
        %1933 = vmatpush1.bf16.msra.mxu0 0
        %1934 = vmatprep.subr.bf16.mxu0 0
        %1935 = vmatpush1.bf16.msra.mxu0 0
        %1936 = vmatprep.subr.bf16.mxu0 0
        %1937 = vmatpush1.bf16.msra.mxu0 0
        %1938 = vmatprep.subr.bf16.mxu0 0
        %1939 = vmatpush1.bf16.msra.mxu0 0
        %1940 = vmatprep.subr.bf16.mxu0 0
        %1941 = vmatpush1.bf16.msra.mxu0 0
        %1942 = vmatprep.subr.bf16.mxu0 0
        %1943 = vmatpush1.bf16.msra.mxu0 0
        %1944 = vmatprep.subr.bf16.mxu0 0
        %1945 = vmatpush1.bf16.msra.mxu0 0
        %1946 = vmatprep.subr.bf16.mxu0 0
        %1947 = vmatpush1.bf16.msra.mxu0 0
        %1948 = vmatprep.subr.bf16.mxu0 0
        %1949 = vmatpush1.bf16.msra.mxu0 0
        %1950 = vmatprep.subr.bf16.mxu0 0
        %1951 = vmatpush1.bf16.msra.mxu0 0
        %1952 = vmatprep.mubr.bf16.mxu0 0
        %1953 = vmatmul.mubr.bf16.gmra.mrb[0].mxu0 %v1836
        %v1954 = vpop.f32.mrb[0].mxu0
        %v1955 = vadd.f32 %v1614, %v1954
        %v1956 = vpop.f32.mrb[0].mxu0
        %v1957 = vadd.f32 %v1618, %v1956
        %v1958 = vpop.f32.mrb[0].mxu0
        %v1959 = vpop.f32.mrb[0].mxu0
        %1960 = vdwg.mxu0
        %1961 = vmatprep.subr.bf16.mxu0 %v1778
        %1962 = vmatpush1.bf16.msra.mxu0 %v1777
        %1963 = vmatprep.subr.bf16.mxu0 %v1794
        %1964 = vmatpush1.bf16.msra.mxu0 %v1793
        %1965 = vmatprep.subr.bf16.mxu0 0
        %1966 = vmatpush1.bf16.msra.mxu0 0
        %1967 = vmatprep.subr.bf16.mxu0 0
        %1968 = vmatpush1.bf16.msra.mxu0 0
        %1969 = vmatprep.subr.bf16.mxu0 0
        %1970 = vmatpush1.bf16.msra.mxu0 0
        %1971 = vmatprep.subr.bf16.mxu0 0
        %1972 = vmatpush1.bf16.msra.mxu0 0
        %1973 = vmatprep.subr.bf16.mxu0 0
        %1974 = vmatpush1.bf16.msra.mxu0 0
        %1975 = vmatprep.subr.bf16.mxu0 0
        %1976 = vmatpush1.bf16.msra.mxu0 0
        %1977 = vmatprep.subr.bf16.mxu0 0
        %1978 = vmatpush1.bf16.msra.mxu0 0
        %1979 = vmatprep.subr.bf16.mxu0 0
        %1980 = vmatpush1.bf16.msra.mxu0 0
        %1981 = vmatprep.subr.bf16.mxu0 0
        %1982 = vmatpush1.bf16.msra.mxu0 0
        %1983 = vmatprep.subr.bf16.mxu0 0
        %1984 = vmatpush1.bf16.msra.mxu0 0
        %1985 = vmatprep.subr.bf16.mxu0 0
        %1986 = vmatpush1.bf16.msra.mxu0 0
        %1987 = vmatprep.subr.bf16.mxu0 0
        %1988 = vmatpush1.bf16.msra.mxu0 0
        %1989 = vmatprep.subr.bf16.mxu0 0
        %1990 = vmatpush1.bf16.msra.mxu0 0
        %1991 = vmatprep.subr.bf16.mxu0 0
        %1992 = vmatpush1.bf16.msra.mxu0 0
        %1993 = vmatprep.mubr.bf16.mxu0 0
        %1994 = vmatmul.mubr.bf16.gmra.mrb[0].mxu0 %v1836
        %v1995 = vpop.f32.mrb[0].mxu0
        %v1996 = vadd.f32 %v1622, %v1995
        %v1997 = vpop.f32.mrb[0].mxu0
        %v1998 = vadd.f32 %v1626, %v1997
        %v1999 = vpop.f32.mrb[0].mxu0
        %v2000 = vpop.f32.mrb[0].mxu0
        %2001 = vdwg.mxu0
        %2002 = vmatprep.subr.bf16.mxu0 %v1780
        %2003 = vmatpush1.bf16.msra.mxu0 %v1779
        %2004 = vmatprep.subr.bf16.mxu0 %v1796
        %2005 = vmatpush1.bf16.msra.mxu0 %v1795
        %2006 = vmatprep.subr.bf16.mxu0 0
        %2007 = vmatpush1.bf16.msra.mxu0 0
        %2008 = vmatprep.subr.bf16.mxu0 0
        %2009 = vmatpush1.bf16.msra.mxu0 0
        %2010 = vmatprep.subr.bf16.mxu0 0
        %2011 = vmatpush1.bf16.msra.mxu0 0
        %2012 = vmatprep.subr.bf16.mxu0 0
        %2013 = vmatpush1.bf16.msra.mxu0 0
        %2014 = vmatprep.subr.bf16.mxu0 0
        %2015 = vmatpush1.bf16.msra.mxu0 0
        %2016 = vmatprep.subr.bf16.mxu0 0
        %2017 = vmatpush1.bf16.msra.mxu0 0
        %2018 = vmatprep.subr.bf16.mxu0 0
        %2019 = vmatpush1.bf16.msra.mxu0 0
        %2020 = vmatprep.subr.bf16.mxu0 0
        %2021 = vmatpush1.bf16.msra.mxu0 0
        %2022 = vmatprep.subr.bf16.mxu0 0
        %2023 = vmatpush1.bf16.msra.mxu0 0
        %2024 = vmatprep.subr.bf16.mxu0 0
        %2025 = vmatpush1.bf16.msra.mxu0 0
        %2026 = vmatprep.subr.bf16.mxu0 0
        %2027 = vmatpush1.bf16.msra.mxu0 0
        %2028 = vmatprep.subr.bf16.mxu0 0
        %2029 = vmatpush1.bf16.msra.mxu0 0
        %2030 = vmatprep.subr.bf16.mxu0 0
        %2031 = vmatpush1.bf16.msra.mxu0 0
        %2032 = vmatprep.subr.bf16.mxu0 0
        %2033 = vmatpush1.bf16.msra.mxu0 0
        %2034 = vmatprep.mubr.bf16.mxu0 0
        %2035 = vmatmul.mubr.bf16.gmra.mrb[0].mxu0 %v1836
        %v2036 = vpop.f32.mrb[0].mxu0
        %v2037 = vadd.f32 %v1630, %v2036
        %v2038 = vpop.f32.mrb[0].mxu0
        %v2039 = vadd.f32 %v1634, %v2038
        %v2040 = vpop.f32.mrb[0].mxu0
        %v2041 = vpop.f32.mrb[0].mxu0
        %2042 = vdwg.mxu0
        %2043 = vmatprep.subr.bf16.mxu0 %v1782
        %2044 = vmatpush1.bf16.msra.mxu0 %v1781
        %2045 = vmatprep.subr.bf16.mxu0 %v1798
        %2046 = vmatpush1.bf16.msra.mxu0 %v1797
        %2047 = vmatprep.subr.bf16.mxu0 0
        %2048 = vmatpush1.bf16.msra.mxu0 0
        %2049 = vmatprep.subr.bf16.mxu0 0
        %2050 = vmatpush1.bf16.msra.mxu0 0
        %2051 = vmatprep.subr.bf16.mxu0 0
        %2052 = vmatpush1.bf16.msra.mxu0 0
        %2053 = vmatprep.subr.bf16.mxu0 0
        %2054 = vmatpush1.bf16.msra.mxu0 0
        %2055 = vmatprep.subr.bf16.mxu0 0
        %2056 = vmatpush1.bf16.msra.mxu0 0
        %2057 = vmatprep.subr.bf16.mxu0 0
        %2058 = vmatpush1.bf16.msra.mxu0 0
        %2059 = vmatprep.subr.bf16.mxu0 0
        %2060 = vmatpush1.bf16.msra.mxu0 0
        %2061 = vmatprep.subr.bf16.mxu0 0
        %2062 = vmatpush1.bf16.msra.mxu0 0
        %2063 = vmatprep.subr.bf16.mxu0 0
        %2064 = vmatpush1.bf16.msra.mxu0 0
        %2065 = vmatprep.subr.bf16.mxu0 0
        %2066 = vmatpush1.bf16.msra.mxu0 0
        %2067 = vmatprep.subr.bf16.mxu0 0
        %2068 = vmatpush1.bf16.msra.mxu0 0
        %2069 = vmatprep.subr.bf16.mxu0 0
        %2070 = vmatpush1.bf16.msra.mxu0 0
        %2071 = vmatprep.subr.bf16.mxu0 0
        %2072 = vmatpush1.bf16.msra.mxu0 0
        %2073 = vmatprep.subr.bf16.mxu0 0
        %2074 = vmatpush1.bf16.msra.mxu0 0
        %2075 = vmatprep.mubr.bf16.mxu0 0
        %2076 = vmatmul.mubr.bf16.gmra.mrb[0].mxu0 %v1836
        %v2077 = vpop.f32.mrb[0].mxu0
        %v2078 = vadd.f32 %v1638, %v2077
        %v2079 = vpop.f32.mrb[0].mxu0
        %v2080 = vadd.f32 %v1642, %v2079
        %v2081 = vpop.f32.mrb[0].mxu0
        %v2082 = vpop.f32.mrb[0].mxu0
        %2083 = vdwg.mxu0
        %2084 = vmatprep.subr.bf16.mxu0 %v1784
        %2085 = vmatpush1.bf16.msra.mxu0 %v1783
        %2086 = vmatprep.subr.bf16.mxu0 %v1800
        %2087 = vmatpush1.bf16.msra.mxu0 %v1799
        %2088 = vmatprep.subr.bf16.mxu0 0
        %2089 = vmatpush1.bf16.msra.mxu0 0
        %2090 = vmatprep.subr.bf16.mxu0 0
        %2091 = vmatpush1.bf16.msra.mxu0 0
        %2092 = vmatprep.subr.bf16.mxu0 0
        %2093 = vmatpush1.bf16.msra.mxu0 0
        %2094 = vmatprep.subr.bf16.mxu0 0
        %2095 = vmatpush1.bf16.msra.mxu0 0
        %2096 = vmatprep.subr.bf16.mxu0 0
        %2097 = vmatpush1.bf16.msra.mxu0 0
        %2098 = vmatprep.subr.bf16.mxu0 0
        %2099 = vmatpush1.bf16.msra.mxu0 0
        %2100 = vmatprep.subr.bf16.mxu0 0
        %2101 = vmatpush1.bf16.msra.mxu0 0
        %2102 = vmatprep.subr.bf16.mxu0 0
        %2103 = vmatpush1.bf16.msra.mxu0 0
        %2104 = vmatprep.subr.bf16.mxu0 0
        %2105 = vmatpush1.bf16.msra.mxu0 0
        %2106 = vmatprep.subr.bf16.mxu0 0
        %2107 = vmatpush1.bf16.msra.mxu0 0
        %2108 = vmatprep.subr.bf16.mxu0 0
        %2109 = vmatpush1.bf16.msra.mxu0 0
        %2110 = vmatprep.subr.bf16.mxu0 0
        %2111 = vmatpush1.bf16.msra.mxu0 0
        %2112 = vmatprep.subr.bf16.mxu0 0
        %2113 = vmatpush1.bf16.msra.mxu0 0
        %2114 = vmatprep.subr.bf16.mxu0 0
        %2115 = vmatpush1.bf16.msra.mxu0 0
        %2116 = vmatprep.mubr.bf16.mxu0 0
        %2117 = vmatmul.mubr.bf16.gmra.mrb[0].mxu0 %v1836
        %v2118 = vpop.f32.mrb[0].mxu0
        %v2119 = vadd.f32 %v1646, %v2118
        %v2120 = vpop.f32.mrb[0].mxu0
        %v2121 = vadd.f32 %v1650, %v2120
        %v2122 = vpop.f32.mrb[0].mxu0
        %v2123 = vpop.f32.mrb[0].mxu0
        %2124 = vdwg.mxu0
        %2125 = vmatprep.subr.bf16.mxu0 %v1786
        %2126 = vmatpush1.bf16.msra.mxu0 %v1785
        %2127 = vmatprep.subr.bf16.mxu0 %v1802
        %2128 = vmatpush1.bf16.msra.mxu0 %v1801
        %2129 = vmatprep.subr.bf16.mxu0 0
        %2130 = vmatpush1.bf16.msra.mxu0 0
        %2131 = vmatprep.subr.bf16.mxu0 0
        %2132 = vmatpush1.bf16.msra.mxu0 0
        %2133 = vmatprep.subr.bf16.mxu0 0
        %2134 = vmatpush1.bf16.msra.mxu0 0
        %2135 = vmatprep.subr.bf16.mxu0 0
        %2136 = vmatpush1.bf16.msra.mxu0 0
        %2137 = vmatprep.subr.bf16.mxu0 0
        %2138 = vmatpush1.bf16.msra.mxu0 0
        %2139 = vmatprep.subr.bf16.mxu0 0
        %2140 = vmatpush1.bf16.msra.mxu0 0
        %2141 = vmatprep.subr.bf16.mxu0 0
        %2142 = vmatpush1.bf16.msra.mxu0 0
        %2143 = vmatprep.subr.bf16.mxu0 0
        %2144 = vmatpush1.bf16.msra.mxu0 0
        %2145 = vmatprep.subr.bf16.mxu0 0
        %2146 = vmatpush1.bf16.msra.mxu0 0
        %2147 = vmatprep.subr.bf16.mxu0 0
        %2148 = vmatpush1.bf16.msra.mxu0 0
        %2149 = vmatprep.subr.bf16.mxu0 0
        %2150 = vmatpush1.bf16.msra.mxu0 0
        %2151 = vmatprep.subr.bf16.mxu0 0
        %2152 = vmatpush1.bf16.msra.mxu0 0
        %2153 = vmatprep.subr.bf16.mxu0 0
        %2154 = vmatpush1.bf16.msra.mxu0 0
        %2155 = vmatprep.subr.bf16.mxu0 0
        %2156 = vmatpush1.bf16.msra.mxu0 0
        %2157 = vmatprep.mubr.bf16.mxu0 0
        %2158 = vmatmul.mubr.bf16.gmra.mrb[0].mxu0 %v1836
        %v2159 = vpop.f32.mrb[0].mxu0
        %v2160 = vadd.f32 %v1654, %v2159
        %v2161 = vpop.f32.mrb[0].mxu0
        %v2162 = vadd.f32 %v1658, %v2161
        %v2163 = vpop.f32.mrb[0].mxu0
        %v2164 = vpop.f32.mrb[0].mxu0
        %2165 = vdwg.mxu0
        %v2166 = vmax.f32 %v1873, 0.0
        %v2167 = vmax.f32 %v1875, 0.0
        %v2168 = vmax.f32 %v1914, 0.0
        %v2169 = vmax.f32 %v1916, 0.0
        %v2170 = vmax.f32 %v1955, 0.0
        %v2171 = vmax.f32 %v1957, 0.0
        %v2172 = vmax.f32 %v1996, 0.0
        %v2173 = vmax.f32 %v1998, 0.0
        %v2174 = vmax.f32 %v2037, 0.0
        %v2175 = vmax.f32 %v2039, 0.0
        %v2176 = vmax.f32 %v2078, 0.0
        %v2177 = vmax.f32 %v2080, 0.0
        %v2178 = vmax.f32 %v2119, 0.0
        %v2179 = vmax.f32 %v2121, 0.0
        %v2180 = vmax.f32 %v2160, 0.0
        %v2181 = vmax.f32 %v2162, 0.0
        %v2182 = vpack.c.bf16 %v2166, %v2166
        %v2183 = vpack.c.bf16 %v2167, %v2167
        %v2184 = vpack.c.bf16 %v2168, %v2168
        %v2185 = vpack.c.bf16 %v2169, %v2169
        %v2186 = vpack.c.bf16 %v2170, %v2170
        %v2187 = vpack.c.bf16 %v2171, %v2171
        %v2188 = vpack.c.bf16 %v2172, %v2172
        %v2189 = vpack.c.bf16 %v2173, %v2173
        %v2190 = vpack.c.bf16 %v2174, %v2174
        %v2191 = vpack.c.bf16 %v2175, %v2175
        %v2192 = vpack.c.bf16 %v2176, %v2176
        %v2193 = vpack.c.bf16 %v2177, %v2177
        %v2194 = vpack.c.bf16 %v2178, %v2178
        %v2195 = vpack.c.bf16 %v2179, %v2179
        %v2196 = vpack.c.bf16 %v2180, %v2180
        %v2197 = vpack.c.bf16 %v2181, %v2181
        %v2198 = vld [vmem:[%s619] sm:$0xf]
        %v2199 = vld [vmem:[%s619 + $0x4] sm:$0xf]
        %v2200 = vld [vmem:[%s619 + $0x8] sm:$0xf]
        %v2201 = vld [vmem:[%s619 + $0xc] sm:$0xf]
        %v2202 = vld [vmem:[%s619 + $0x10] sm:$0xf]
        %v2203 = vld [vmem:[%s619 + $0x14] sm:$0xf]
        %v2204 = vld [vmem:[%s619 + $0x18] sm:$0xf]
        %v2205 = vld [vmem:[%s619 + $0x1c] sm:$0xf]
        %v2206 = vld [vmem:[%s619 + $0x20] sm:$0xf]
        %v2207 = vld [vmem:[%s619 + $0x24] sm:$0xf]
        %v2208 = vld [vmem:[%s619 + $0x28] sm:$0xf]
        %v2209 = vld [vmem:[%s619 + $0x2c] sm:$0xf]
        %v2210 = vld [vmem:[%s619 + $0x30] sm:$0xf]
        %v2211 = vld [vmem:[%s619 + $0x34] sm:$0xf]
        %v2212 = vld [vmem:[%s619 + $0x38] sm:$0xf]
        %v2213 = vld [vmem:[%s619 + $0x3c] sm:$0xf]
        %v2214 = vld [vmem:[%s619 + $0x40] sm:$0xf]
        %v2215 = vld [vmem:[%s619 + $0x44] sm:$0xf]
        %v2216 = vld [vmem:[%s619 + $0x48] sm:$0xf]
        %v2217 = vld [vmem:[%s619 + $0x4c] sm:$0xf]
        %v2218 = vld [vmem:[%s619 + $0x50] sm:$0xf]
        %v2219 = vld [vmem:[%s619 + $0x54] sm:$0xf]
        %v2220 = vld [vmem:[%s619 + $0x58] sm:$0xf]
        %v2221 = vld [vmem:[%s619 + $0x5c] sm:$0xf]
        %v2222 = vld [vmem:[%s619 + $0x60] sm:$0xf]
        %v2223 = vld [vmem:[%s619 + $0x64] sm:$0xf]
        %v2224 = vld [vmem:[%s619 + $0x68] sm:$0xf]
        %v2225 = vld [vmem:[%s619 + $0x6c] sm:$0xf]
        %v2226 = vld [vmem:[%s619 + $0x70] sm:$0xf]
        %v2227 = vld [vmem:[%s619 + $0x74] sm:$0xf]
        %v2228 = vld [vmem:[%s619 + $0x78] sm:$0xf]
        %v2229 = vld [vmem:[%s619 + $0x7c] sm:$0xf]
        %v2230 = vld [vmem:[%s619 + $0x80] sm:$0xf]
        %v2231 = vld [vmem:[%s619 + $0x84] sm:$0xf]
        %v2232 = vld [vmem:[%s619 + $0x88] sm:$0xf]
        %v2233 = vld [vmem:[%s619 + $0x8c] sm:$0xf]
        %v2234 = vld [vmem:[%s619 + $0x90] sm:$0xf]
        %v2235 = vld [vmem:[%s619 + $0x94] sm:$0xf]
        %v2236 = vld [vmem:[%s619 + $0x98] sm:$0xf]
        %v2237 = vld [vmem:[%s619 + $0x9c] sm:$0xf]
        %v2238 = vld [vmem:[%s619 + $0xa0] sm:$0xf]
        %v2239 = vld [vmem:[%s619 + $0xa4] sm:$0xf]
        %v2240 = vld [vmem:[%s619 + $0xa8] sm:$0xf]
        %v2241 = vld [vmem:[%s619 + $0xac] sm:$0xf]
        %v2242 = vld [vmem:[%s619 + $0xb0] sm:$0xf]
        %v2243 = vld [vmem:[%s619 + $0xb4] sm:$0xf]
        %v2244 = vld [vmem:[%s619 + $0xb8] sm:$0xf]
        %v2245 = vld [vmem:[%s619 + $0xbc] sm:$0xf]
        %v2246 = vld [vmem:[%s619 + $0xc0] sm:$0xf]
        %v2247 = vld [vmem:[%s619 + $0xc4] sm:$0xf]
        %v2248 = vld [vmem:[%s619 + $0xc8] sm:$0xf]
        %v2249 = vld [vmem:[%s619 + $0xcc] sm:$0xf]
        %v2250 = vld [vmem:[%s619 + $0xd0] sm:$0xf]
        %v2251 = vld [vmem:[%s619 + $0xd4] sm:$0xf]
        %v2252 = vld [vmem:[%s619 + $0xd8] sm:$0xf]
        %v2253 = vld [vmem:[%s619 + $0xdc] sm:$0xf]
        %v2254 = vld [vmem:[%s619 + $0xe0] sm:$0xf]
        %v2255 = vld [vmem:[%s619 + $0xe4] sm:$0xf]
        %v2256 = vld [vmem:[%s619 + $0xe8] sm:$0xf]
        %v2257 = vld [vmem:[%s619 + $0xec] sm:$0xf]
        %v2258 = vld [vmem:[%s619 + $0xf0] sm:$0xf]
        %v2259 = vld [vmem:[%s619 + $0xf4] sm:$0xf]
        %v2260 = vld [vmem:[%s619 + $0xf8] sm:$0xf]
        %v2261 = vld [vmem:[%s619 + $0xfc] sm:$0xf]
        %v2262 = vld [vmem:[%s619 + $0x100] sm:$0xf]
        %v2263 = vld [vmem:[%s619 + $0x104] sm:$0xf]
        %v2264 = vld [vmem:[%s619 + $0x108] sm:$0xf]
        %v2265 = vld [vmem:[%s619 + $0x10c] sm:$0xf]
        %v2266 = vld [vmem:[%s619 + $0x110] sm:$0xf]
        %v2267 = vld [vmem:[%s619 + $0x114] sm:$0xf]
        %v2268 = vld [vmem:[%s619 + $0x118] sm:$0xf]
        %v2269 = vld [vmem:[%s619 + $0x11c] sm:$0xf]
        %v2270 = vld [vmem:[%s619 + $0x120] sm:$0xf]
        %v2271 = vld [vmem:[%s619 + $0x124] sm:$0xf]
        %v2272 = vld [vmem:[%s619 + $0x128] sm:$0xf]
        %v2273 = vld [vmem:[%s619 + $0x12c] sm:$0xf]
        %v2274 = vld [vmem:[%s619 + $0x130] sm:$0xf]
        %v2275 = vld [vmem:[%s619 + $0x134] sm:$0xf]
        %v2276 = vld [vmem:[%s619 + $0x138] sm:$0xf]
        %v2277 = vld [vmem:[%s619 + $0x13c] sm:$0xf]
        %v2278 = vld [vmem:[%s619 + $0x140] sm:$0xf]
        %v2279 = vld [vmem:[%s619 + $0x144] sm:$0xf]
        %v2280 = vld [vmem:[%s619 + $0x148] sm:$0xf]
        %v2281 = vld [vmem:[%s619 + $0x14c] sm:$0xf]
        %v2282 = vld [vmem:[%s619 + $0x150] sm:$0xf]
        %v2283 = vld [vmem:[%s619 + $0x154] sm:$0xf]
        %v2284 = vld [vmem:[%s619 + $0x158] sm:$0xf]
        %v2285 = vld [vmem:[%s619 + $0x15c] sm:$0xf]
        %v2286 = vld [vmem:[%s619 + $0x160] sm:$0xf]
        %v2287 = vld [vmem:[%s619 + $0x164] sm:$0xf]
        %v2288 = vld [vmem:[%s619 + $0x168] sm:$0xf]
        %v2289 = vld [vmem:[%s619 + $0x16c] sm:$0xf]
        %v2290 = vld [vmem:[%s619 + $0x170] sm:$0xf]
        %v2291 = vld [vmem:[%s619 + $0x174] sm:$0xf]
        %v2292 = vld [vmem:[%s619 + $0x178] sm:$0xf]
        %v2293 = vld [vmem:[%s619 + $0x17c] sm:$0xf]
        %v2294 = vld [vmem:[%s619 + $0x180] sm:$0xf]
        %v2295 = vld [vmem:[%s619 + $0x184] sm:$0xf]
        %v2296 = vld [vmem:[%s619 + $0x188] sm:$0xf]
        %v2297 = vld [vmem:[%s619 + $0x18c] sm:$0xf]
        %v2298 = vld [vmem:[%s619 + $0x190] sm:$0xf]
        %v2299 = vld [vmem:[%s619 + $0x194] sm:$0xf]
        %v2300 = vld [vmem:[%s619 + $0x198] sm:$0xf]
        %v2301 = vld [vmem:[%s619 + $0x19c] sm:$0xf]
        %v2302 = vld [vmem:[%s619 + $0x1a0] sm:$0xf]
        %v2303 = vld [vmem:[%s619 + $0x1a4] sm:$0xf]
        %v2304 = vld [vmem:[%s619 + $0x1a8] sm:$0xf]
        %v2305 = vld [vmem:[%s619 + $0x1ac] sm:$0xf]
        %v2306 = vld [vmem:[%s619 + $0x1b0] sm:$0xf]
        %v2307 = vld [vmem:[%s619 + $0x1b4] sm:$0xf]
        %v2308 = vld [vmem:[%s619 + $0x1b8] sm:$0xf]
        %v2309 = vld [vmem:[%s619 + $0x1bc] sm:$0xf]
        %v2310 = vld [vmem:[%s619 + $0x1c0] sm:$0xf]
        %v2311 = vld [vmem:[%s619 + $0x1c4] sm:$0xf]
        %v2312 = vld [vmem:[%s619 + $0x1c8] sm:$0xf]
        %v2313 = vld [vmem:[%s619 + $0x1cc] sm:$0xf]
        %v2314 = vld [vmem:[%s619 + $0x1d0] sm:$0xf]
        %v2315 = vld [vmem:[%s619 + $0x1d4] sm:$0xf]
        %v2316 = vld [vmem:[%s619 + $0x1d8] sm:$0xf]
        %v2317 = vld [vmem:[%s619 + $0x1dc] sm:$0xf]
        %v2318 = vld [vmem:[%s619 + $0x1e0] sm:$0xf]
        %v2319 = vld [vmem:[%s619 + $0x1e4] sm:$0xf]
        %v2320 = vld [vmem:[%s619 + $0x1e8] sm:$0xf]
        %v2321 = vld [vmem:[%s619 + $0x1ec] sm:$0xf]
        %v2322 = vld [vmem:[%s619 + $0x1f0] sm:$0xf]
        %v2323 = vld [vmem:[%s619 + $0x1f4] sm:$0xf]
        %v2324 = vld [vmem:[%s619 + $0x1f8] sm:$0xf]
        %v2325 = vld [vmem:[%s619 + $0x1fc] sm:$0xf]
        %v2326 = vld [vmem:[%s619 + $0x200] sm:$0xf]
        %v2327 = vld [vmem:[%s619 + $0x204] sm:$0xf]
        %v2328 = vld [vmem:[%s619 + $0x208] sm:$0xf]
        %v2329 = vld [vmem:[%s619 + $0x20c] sm:$0xf]
        %v2330 = vld [vmem:[%s619 + $0x210] sm:$0xf]
        %v2331 = vld [vmem:[%s619 + $0x214] sm:$0xf]
        %v2332 = vld [vmem:[%s619 + $0x218] sm:$0xf]
        %v2333 = vld [vmem:[%s619 + $0x21c] sm:$0xf]
        %v2334 = vld [vmem:[%s619 + $0x220] sm:$0xf]
        %v2335 = vld [vmem:[%s619 + $0x224] sm:$0xf]
        %v2336 = vld [vmem:[%s619 + $0x228] sm:$0xf]
        %v2337 = vld [vmem:[%s619 + $0x22c] sm:$0xf]
        %v2338 = vld [vmem:[%s619 + $0x230] sm:$0xf]
        %v2339 = vld [vmem:[%s619 + $0x234] sm:$0xf]
        %v2340 = vld [vmem:[%s619 + $0x238] sm:$0xf]
        %v2341 = vld [vmem:[%s619 + $0x23c] sm:$0xf]
        %v2342 = vld [vmem:[%s619 + $0x240] sm:$0xf]
        %v2343 = vld [vmem:[%s619 + $0x244] sm:$0xf]
        %v2344 = vld [vmem:[%s619 + $0x248] sm:$0xf]
        %v2345 = vld [vmem:[%s619 + $0x24c] sm:$0xf]
        %v2346 = vld [vmem:[%s619 + $0x250] sm:$0xf]
        %v2347 = vld [vmem:[%s619 + $0x254] sm:$0xf]
        %v2348 = vld [vmem:[%s619 + $0x258] sm:$0xf]
        %v2349 = vld [vmem:[%s619 + $0x25c] sm:$0xf]
        %v2350 = vld [vmem:[%s619 + $0x260] sm:$0xf]
        %v2351 = vld [vmem:[%s619 + $0x264] sm:$0xf]
        %v2352 = vld [vmem:[%s619 + $0x268] sm:$0xf]
        %v2353 = vld [vmem:[%s619 + $0x26c] sm:$0xf]
        %v2354 = vld [vmem:[%s619 + $0x270] sm:$0xf]
        %v2355 = vld [vmem:[%s619 + $0x274] sm:$0xf]
        %v2356 = vld [vmem:[%s619 + $0x278] sm:$0xf]
        %v2357 = vld [vmem:[%s619 + $0x27c] sm:$0xf]
        %v2358 = vld [vmem:[%s619 + $0x280] sm:$0xf]
        %v2359 = vld [vmem:[%s619 + $0x284] sm:$0xf]
        %v2360 = vld [vmem:[%s619 + $0x288] sm:$0xf]
        %v2361 = vld [vmem:[%s619 + $0x28c] sm:$0xf]
        %v2362 = vld [vmem:[%s619 + $0x290] sm:$0xf]
        %v2363 = vld [vmem:[%s619 + $0x294] sm:$0xf]
        %v2364 = vld [vmem:[%s619 + $0x298] sm:$0xf]
        %v2365 = vld [vmem:[%s619 + $0x29c] sm:$0xf]
        %v2366 = vld [vmem:[%s619 + $0x2a0] sm:$0xf]
        %v2367 = vld [vmem:[%s619 + $0x2a4] sm:$0xf]
        %v2368 = vld [vmem:[%s619 + $0x2a8] sm:$0xf]
        %v2369 = vld [vmem:[%s619 + $0x2ac] sm:$0xf]
        %v2370 = vld [vmem:[%s619 + $0x2b0] sm:$0xf]
        %v2371 = vld [vmem:[%s619 + $0x2b4] sm:$0xf]
        %v2372 = vld [vmem:[%s619 + $0x2b8] sm:$0xf]
        %v2373 = vld [vmem:[%s619 + $0x2bc] sm:$0xf]
        %v2374 = vld [vmem:[%s619 + $0x2c0] sm:$0xf]
        %v2375 = vld [vmem:[%s619 + $0x2c4] sm:$0xf]
        %v2376 = vld [vmem:[%s619 + $0x2c8] sm:$0xf]
        %v2377 = vld [vmem:[%s619 + $0x2cc] sm:$0xf]
        %v2378 = vld [vmem:[%s619 + $0x2d0] sm:$0xf]
        %v2379 = vld [vmem:[%s619 + $0x2d4] sm:$0xf]
        %v2380 = vld [vmem:[%s619 + $0x2d8] sm:$0xf]
        %v2381 = vld [vmem:[%s619 + $0x2dc] sm:$0xf]
        %v2382 = vld [vmem:[%s619 + $0x2e0] sm:$0xf]
        %v2383 = vld [vmem:[%s619 + $0x2e4] sm:$0xf]
        %v2384 = vld [vmem:[%s619 + $0x2e8] sm:$0xf]
        %v2385 = vld [vmem:[%s619 + $0x2ec] sm:$0xf]
        %v2386 = vld [vmem:[%s619 + $0x2f0] sm:$0xf]
        %v2387 = vld [vmem:[%s619 + $0x2f4] sm:$0xf]
        %v2388 = vld [vmem:[%s619 + $0x2f8] sm:$0xf]
        %v2389 = vld [vmem:[%s619 + $0x2fc] sm:$0xf]
        %v2390 = vld [vmem:[%s619 + $0x300] sm:$0xf]
        %v2391 = vld [vmem:[%s619 + $0x304] sm:$0xf]
        %v2392 = vld [vmem:[%s619 + $0x308] sm:$0xf]
        %v2393 = vld [vmem:[%s619 + $0x30c] sm:$0xf]
        %v2394 = vld [vmem:[%s619 + $0x310] sm:$0xf]
        %v2395 = vld [vmem:[%s619 + $0x314] sm:$0xf]
        %v2396 = vld [vmem:[%s619 + $0x318] sm:$0xf]
        %v2397 = vld [vmem:[%s619 + $0x31c] sm:$0xf]
        %v2398 = vld [vmem:[%s619 + $0x320] sm:$0xf]
        %v2399 = vld [vmem:[%s619 + $0x324] sm:$0xf]
        %v2400 = vld [vmem:[%s619 + $0x328] sm:$0xf]
        %v2401 = vld [vmem:[%s619 + $0x32c] sm:$0xf]
        %v2402 = vld [vmem:[%s619 + $0x330] sm:$0xf]
        %v2403 = vld [vmem:[%s619 + $0x334] sm:$0xf]
        %v2404 = vld [vmem:[%s619 + $0x338] sm:$0xf]
        %v2405 = vld [vmem:[%s619 + $0x33c] sm:$0xf]
        %v2406 = vld [vmem:[%s619 + $0x340] sm:$0xf]
        %v2407 = vld [vmem:[%s619 + $0x344] sm:$0xf]
        %v2408 = vld [vmem:[%s619 + $0x348] sm:$0xf]
        %v2409 = vld [vmem:[%s619 + $0x34c] sm:$0xf]
        %v2410 = vld [vmem:[%s619 + $0x350] sm:$0xf]
        %v2411 = vld [vmem:[%s619 + $0x354] sm:$0xf]
        %v2412 = vld [vmem:[%s619 + $0x358] sm:$0xf]
        %v2413 = vld [vmem:[%s619 + $0x35c] sm:$0xf]
        %v2414 = vld [vmem:[%s619 + $0x360] sm:$0xf]
        %v2415 = vld [vmem:[%s619 + $0x364] sm:$0xf]
        %v2416 = vld [vmem:[%s619 + $0x368] sm:$0xf]
        %v2417 = vld [vmem:[%s619 + $0x36c] sm:$0xf]
        %v2418 = vld [vmem:[%s619 + $0x370] sm:$0xf]
        %v2419 = vld [vmem:[%s619 + $0x374] sm:$0xf]
        %v2420 = vld [vmem:[%s619 + $0x378] sm:$0xf]
        %v2421 = vld [vmem:[%s619 + $0x37c] sm:$0xf]
        %v2422 = vld [vmem:[%s619 + $0x380] sm:$0xf]
        %v2423 = vld [vmem:[%s619 + $0x384] sm:$0xf]
        %v2424 = vld [vmem:[%s619 + $0x388] sm:$0xf]
        %v2425 = vld [vmem:[%s619 + $0x38c] sm:$0xf]
        %v2426 = vld [vmem:[%s619 + $0x390] sm:$0xf]
        %v2427 = vld [vmem:[%s619 + $0x394] sm:$0xf]
        %v2428 = vld [vmem:[%s619 + $0x398] sm:$0xf]
        %v2429 = vld [vmem:[%s619 + $0x39c] sm:$0xf]
        %v2430 = vld [vmem:[%s619 + $0x3a0] sm:$0xf]
        %v2431 = vld [vmem:[%s619 + $0x3a4] sm:$0xf]
        %v2432 = vld [vmem:[%s619 + $0x3a8] sm:$0xf]
        %v2433 = vld [vmem:[%s619 + $0x3ac] sm:$0xf]
        %v2434 = vld [vmem:[%s619 + $0x3b0] sm:$0xf]
        %v2435 = vld [vmem:[%s619 + $0x3b4] sm:$0xf]
        %v2436 = vld [vmem:[%s619 + $0x3b8] sm:$0xf]
        %v2437 = vld [vmem:[%s619 + $0x3bc] sm:$0xf]
        %v2438 = vld [vmem:[%s619 + $0x3c0] sm:$0xf]
        %v2439 = vld [vmem:[%s619 + $0x3c4] sm:$0xf]
        %v2440 = vld [vmem:[%s619 + $0x3c8] sm:$0xf]
        %v2441 = vld [vmem:[%s619 + $0x3cc] sm:$0xf]
        %v2442 = vld [vmem:[%s619 + $0x3d0] sm:$0xf]
        %v2443 = vld [vmem:[%s619 + $0x3d4] sm:$0xf]
        %v2444 = vld [vmem:[%s619 + $0x3d8] sm:$0xf]
        %v2445 = vld [vmem:[%s619 + $0x3dc] sm:$0xf]
        %v2446 = vld [vmem:[%s619 + $0x3e0] sm:$0xf]
        %v2447 = vld [vmem:[%s619 + $0x3e4] sm:$0xf]
        %v2448 = vld [vmem:[%s619 + $0x3e8] sm:$0xf]
        %v2449 = vld [vmem:[%s619 + $0x3ec] sm:$0xf]
        %v2450 = vld [vmem:[%s619 + $0x3f0] sm:$0xf]
        %v2451 = vld [vmem:[%s619 + $0x3f4] sm:$0xf]
        %v2452 = vld [vmem:[%s619 + $0x3f8] sm:$0xf]
        %v2453 = vld [vmem:[%s619 + $0x3fc] sm:$0xf]
        %v2454 = vld [vmem:[%s622] sm:$0x1]
        %v2456 = vlaneseq
        %v2457 = vshrl.u32 %v2456, 7
        %v2458 = vsub.s32 0, %v2457
        %v2459 = vrot.slane %v2454, %v2458
        %v2717 = vunpack.c.l.b16 %v2198
        %v2718 = vunpack.c.l.b16 %v2199
        %v2719 = vunpack.c.l.b16 %v2200
        %v2720 = vunpack.c.l.b16 %v2201
        %v2721 = vunpack.c.l.b16 %v2202
        %v2722 = vunpack.c.l.b16 %v2203
        %v2723 = vunpack.c.l.b16 %v2204
        %v2724 = vunpack.c.l.b16 %v2205
        %v2725 = vunpack.c.l.b16 %v2206
        %v2726 = vunpack.c.l.b16 %v2207
        %v2727 = vunpack.c.l.b16 %v2208
        %v2728 = vunpack.c.l.b16 %v2209
        %v2729 = vunpack.c.l.b16 %v2210
        %v2730 = vunpack.c.l.b16 %v2211
        %v2731 = vunpack.c.l.b16 %v2212
        %v2732 = vunpack.c.l.b16 %v2213
        %v2733 = vunpack.c.l.b16 %v2214
        %v2734 = vunpack.c.l.b16 %v2215
        %v2735 = vunpack.c.l.b16 %v2216
        %v2736 = vunpack.c.l.b16 %v2217
        %v2737 = vunpack.c.l.b16 %v2218
        %v2738 = vunpack.c.l.b16 %v2219
        %v2739 = vunpack.c.l.b16 %v2220
        %v2740 = vunpack.c.l.b16 %v2221
        %v2741 = vunpack.c.l.b16 %v2222
        %v2742 = vunpack.c.l.b16 %v2223
        %v2743 = vunpack.c.l.b16 %v2224
        %v2744 = vunpack.c.l.b16 %v2225
        %v2745 = vunpack.c.l.b16 %v2226
        %v2746 = vunpack.c.l.b16 %v2227
        %v2747 = vunpack.c.l.b16 %v2228
        %v2748 = vunpack.c.l.b16 %v2229
        %v2749 = vunpack.c.l.b16 %v2230
        %v2750 = vunpack.c.l.b16 %v2231
        %v2751 = vunpack.c.l.b16 %v2232
        %v2752 = vunpack.c.l.b16 %v2233
        %v2753 = vunpack.c.l.b16 %v2234
        %v2754 = vunpack.c.l.b16 %v2235
        %v2755 = vunpack.c.l.b16 %v2236
        %v2756 = vunpack.c.l.b16 %v2237
        %v2757 = vunpack.c.l.b16 %v2238
        %v2758 = vunpack.c.l.b16 %v2239
        %v2759 = vunpack.c.l.b16 %v2240
        %v2760 = vunpack.c.l.b16 %v2241
        %v2761 = vunpack.c.l.b16 %v2242
        %v2762 = vunpack.c.l.b16 %v2243
        %v2763 = vunpack.c.l.b16 %v2244
        %v2764 = vunpack.c.l.b16 %v2245
        %v2765 = vunpack.c.l.b16 %v2246
        %v2766 = vunpack.c.l.b16 %v2247
        %v2767 = vunpack.c.l.b16 %v2248
        %v2768 = vunpack.c.l.b16 %v2249
        %v2769 = vunpack.c.l.b16 %v2250
        %v2770 = vunpack.c.l.b16 %v2251
        %v2771 = vunpack.c.l.b16 %v2252
        %v2772 = vunpack.c.l.b16 %v2253
        %v2773 = vunpack.c.l.b16 %v2254
        %v2774 = vunpack.c.l.b16 %v2255
        %v2775 = vunpack.c.l.b16 %v2256
        %v2776 = vunpack.c.l.b16 %v2257
        %v2777 = vunpack.c.l.b16 %v2258
        %v2778 = vunpack.c.l.b16 %v2259
        %v2779 = vunpack.c.l.b16 %v2260
        %v2780 = vunpack.c.l.b16 %v2261
        %v2781 = vunpack.c.l.b16 %v2262
        %v2782 = vunpack.c.l.b16 %v2263
        %v2783 = vunpack.c.l.b16 %v2264
        %v2784 = vunpack.c.l.b16 %v2265
        %v2785 = vunpack.c.l.b16 %v2266
        %v2786 = vunpack.c.l.b16 %v2267
        %v2787 = vunpack.c.l.b16 %v2268
        %v2788 = vunpack.c.l.b16 %v2269
        %v2789 = vunpack.c.l.b16 %v2270
        %v2790 = vunpack.c.l.b16 %v2271
        %v2791 = vunpack.c.l.b16 %v2272
        %v2792 = vunpack.c.l.b16 %v2273
        %v2793 = vunpack.c.l.b16 %v2274
        %v2794 = vunpack.c.l.b16 %v2275
        %v2795 = vunpack.c.l.b16 %v2276
        %v2796 = vunpack.c.l.b16 %v2277
        %v2797 = vunpack.c.l.b16 %v2278
        %v2798 = vunpack.c.l.b16 %v2279
        %v2799 = vunpack.c.l.b16 %v2280
        %v2800 = vunpack.c.l.b16 %v2281
        %v2801 = vunpack.c.l.b16 %v2282
        %v2802 = vunpack.c.l.b16 %v2283
        %v2803 = vunpack.c.l.b16 %v2284
        %v2804 = vunpack.c.l.b16 %v2285
        %v2805 = vunpack.c.l.b16 %v2286
        %v2806 = vunpack.c.l.b16 %v2287
        %v2807 = vunpack.c.l.b16 %v2288
        %v2808 = vunpack.c.l.b16 %v2289
        %v2809 = vunpack.c.l.b16 %v2290
        %v2810 = vunpack.c.l.b16 %v2291
        %v2811 = vunpack.c.l.b16 %v2292
        %v2812 = vunpack.c.l.b16 %v2293
        %v2813 = vunpack.c.l.b16 %v2294
        %v2814 = vunpack.c.l.b16 %v2295
        %v2815 = vunpack.c.l.b16 %v2296
        %v2816 = vunpack.c.l.b16 %v2297
        %v2817 = vunpack.c.l.b16 %v2298
        %v2818 = vunpack.c.l.b16 %v2299
        %v2819 = vunpack.c.l.b16 %v2300
        %v2820 = vunpack.c.l.b16 %v2301
        %v2821 = vunpack.c.l.b16 %v2302
        %v2822 = vunpack.c.l.b16 %v2303
        %v2823 = vunpack.c.l.b16 %v2304
        %v2824 = vunpack.c.l.b16 %v2305
        %v2825 = vunpack.c.l.b16 %v2306
        %v2826 = vunpack.c.l.b16 %v2307
        %v2827 = vunpack.c.l.b16 %v2308
        %v2828 = vunpack.c.l.b16 %v2309
        %v2829 = vunpack.c.l.b16 %v2310
        %v2830 = vunpack.c.l.b16 %v2311
        %v2831 = vunpack.c.l.b16 %v2312
        %v2832 = vunpack.c.l.b16 %v2313
        %v2833 = vunpack.c.l.b16 %v2314
        %v2834 = vunpack.c.l.b16 %v2315
        %v2835 = vunpack.c.l.b16 %v2316
        %v2836 = vunpack.c.l.b16 %v2317
        %v2837 = vunpack.c.l.b16 %v2318
        %v2838 = vunpack.c.l.b16 %v2319
        %v2839 = vunpack.c.l.b16 %v2320
        %v2840 = vunpack.c.l.b16 %v2321
        %v2841 = vunpack.c.l.b16 %v2322
        %v2842 = vunpack.c.l.b16 %v2323
        %v2843 = vunpack.c.l.b16 %v2324
        %v2844 = vunpack.c.l.b16 %v2325
        %v2845 = vunpack.c.l.b16 %v2326
        %v2846 = vunpack.c.l.b16 %v2327
        %v2847 = vunpack.c.l.b16 %v2328
        %v2848 = vunpack.c.l.b16 %v2329
        %v2849 = vunpack.c.l.b16 %v2330
        %v2850 = vunpack.c.l.b16 %v2331
        %v2851 = vunpack.c.l.b16 %v2332
        %v2852 = vunpack.c.l.b16 %v2333
        %v2853 = vunpack.c.l.b16 %v2334
        %v2854 = vunpack.c.l.b16 %v2335
        %v2855 = vunpack.c.l.b16 %v2336
        %v2856 = vunpack.c.l.b16 %v2337
        %v2857 = vunpack.c.l.b16 %v2338
        %v2858 = vunpack.c.l.b16 %v2339
        %v2859 = vunpack.c.l.b16 %v2340
        %v2860 = vunpack.c.l.b16 %v2341
        %v2861 = vunpack.c.l.b16 %v2342
        %v2862 = vunpack.c.l.b16 %v2343
        %v2863 = vunpack.c.l.b16 %v2344
        %v2864 = vunpack.c.l.b16 %v2345
        %v2865 = vunpack.c.l.b16 %v2346
        %v2866 = vunpack.c.l.b16 %v2347
        %v2867 = vunpack.c.l.b16 %v2348
        %v2868 = vunpack.c.l.b16 %v2349
        %v2869 = vunpack.c.l.b16 %v2350
        %v2870 = vunpack.c.l.b16 %v2351
        %v2871 = vunpack.c.l.b16 %v2352
        %v2872 = vunpack.c.l.b16 %v2353
        %v2873 = vunpack.c.l.b16 %v2354
        %v2874 = vunpack.c.l.b16 %v2355
        %v2875 = vunpack.c.l.b16 %v2356
        %v2876 = vunpack.c.l.b16 %v2357
        %v2877 = vunpack.c.l.b16 %v2358
        %v2878 = vunpack.c.l.b16 %v2359
        %v2879 = vunpack.c.l.b16 %v2360
        %v2880 = vunpack.c.l.b16 %v2361
        %v2881 = vunpack.c.l.b16 %v2362
        %v2882 = vunpack.c.l.b16 %v2363
        %v2883 = vunpack.c.l.b16 %v2364
        %v2884 = vunpack.c.l.b16 %v2365
        %v2885 = vunpack.c.l.b16 %v2366
        %v2886 = vunpack.c.l.b16 %v2367
        %v2887 = vunpack.c.l.b16 %v2368
        %v2888 = vunpack.c.l.b16 %v2369
        %v2889 = vunpack.c.l.b16 %v2370
        %v2890 = vunpack.c.l.b16 %v2371
        %v2891 = vunpack.c.l.b16 %v2372
        %v2892 = vunpack.c.l.b16 %v2373
        %v2893 = vunpack.c.l.b16 %v2374
        %v2894 = vunpack.c.l.b16 %v2375
        %v2895 = vunpack.c.l.b16 %v2376
        %v2896 = vunpack.c.l.b16 %v2377
        %v2897 = vunpack.c.l.b16 %v2378
        %v2898 = vunpack.c.l.b16 %v2379
        %v2899 = vunpack.c.l.b16 %v2380
        %v2900 = vunpack.c.l.b16 %v2381
        %v2901 = vunpack.c.l.b16 %v2382
        %v2902 = vunpack.c.l.b16 %v2383
        %v2903 = vunpack.c.l.b16 %v2384
        %v2904 = vunpack.c.l.b16 %v2385
        %v2905 = vunpack.c.l.b16 %v2386
        %v2906 = vunpack.c.l.b16 %v2387
        %v2907 = vunpack.c.l.b16 %v2388
        %v2908 = vunpack.c.l.b16 %v2389
        %v2909 = vunpack.c.l.b16 %v2390
        %v2910 = vunpack.c.l.b16 %v2391
        %v2911 = vunpack.c.l.b16 %v2392
        %v2912 = vunpack.c.l.b16 %v2393
        %v2913 = vunpack.c.l.b16 %v2394
        %v2914 = vunpack.c.l.b16 %v2395
        %v2915 = vunpack.c.l.b16 %v2396
        %v2916 = vunpack.c.l.b16 %v2397
        %v2917 = vunpack.c.l.b16 %v2398
        %v2918 = vunpack.c.l.b16 %v2399
        %v2919 = vunpack.c.l.b16 %v2400
        %v2920 = vunpack.c.l.b16 %v2401
        %v2921 = vunpack.c.l.b16 %v2402
        %v2922 = vunpack.c.l.b16 %v2403
        %v2923 = vunpack.c.l.b16 %v2404
        %v2924 = vunpack.c.l.b16 %v2405
        %v2925 = vunpack.c.l.b16 %v2406
        %v2926 = vunpack.c.l.b16 %v2407
        %v2927 = vunpack.c.l.b16 %v2408
        %v2928 = vunpack.c.l.b16 %v2409
        %v2929 = vunpack.c.l.b16 %v2410
        %v2930 = vunpack.c.l.b16 %v2411
        %v2931 = vunpack.c.l.b16 %v2412
        %v2932 = vunpack.c.l.b16 %v2413
        %v2933 = vunpack.c.l.b16 %v2414
        %v2934 = vunpack.c.l.b16 %v2415
        %v2935 = vunpack.c.l.b16 %v2416
        %v2936 = vunpack.c.l.b16 %v2417
        %v2937 = vunpack.c.l.b16 %v2418
        %v2938 = vunpack.c.l.b16 %v2419
        %v2939 = vunpack.c.l.b16 %v2420
        %v2940 = vunpack.c.l.b16 %v2421
        %v2941 = vunpack.c.l.b16 %v2422
        %v2942 = vunpack.c.l.b16 %v2423
        %v2943 = vunpack.c.l.b16 %v2424
        %v2944 = vunpack.c.l.b16 %v2425
        %v2945 = vunpack.c.l.b16 %v2426
        %v2946 = vunpack.c.l.b16 %v2427
        %v2947 = vunpack.c.l.b16 %v2428
        %v2948 = vunpack.c.l.b16 %v2429
        %v2949 = vunpack.c.l.b16 %v2430
        %v2950 = vunpack.c.l.b16 %v2431
        %v2951 = vunpack.c.l.b16 %v2432
        %v2952 = vunpack.c.l.b16 %v2433
        %v2953 = vunpack.c.l.b16 %v2434
        %v2954 = vunpack.c.l.b16 %v2435
        %v2955 = vunpack.c.l.b16 %v2436
        %v2956 = vunpack.c.l.b16 %v2437
        %v2957 = vunpack.c.l.b16 %v2438
        %v2958 = vunpack.c.l.b16 %v2439
        %v2959 = vunpack.c.l.b16 %v2440
        %v2960 = vunpack.c.l.b16 %v2441
        %v2961 = vunpack.c.l.b16 %v2442
        %v2962 = vunpack.c.l.b16 %v2443
        %v2963 = vunpack.c.l.b16 %v2444
        %v2964 = vunpack.c.l.b16 %v2445
        %v2965 = vunpack.c.l.b16 %v2446
        %v2966 = vunpack.c.l.b16 %v2447
        %v2967 = vunpack.c.l.b16 %v2448
        %v2968 = vunpack.c.l.b16 %v2449
        %v2969 = vunpack.c.l.b16 %v2450
        %v2970 = vunpack.c.l.b16 %v2451
        %v2971 = vunpack.c.l.b16 %v2452
        %v2972 = vunpack.c.l.b16 %v2453
        %v2973 = vpack.c.b16 %v2718, %v2717
        %v2974 = vpack.c.b16 %v2720, %v2719
        %v2975 = vpack.c.b16 %v2722, %v2721
        %v2976 = vpack.c.b16 %v2724, %v2723
        %v2977 = vpack.c.b16 %v2726, %v2725
        %v2978 = vpack.c.b16 %v2728, %v2727
        %v2979 = vpack.c.b16 %v2730, %v2729
        %v2980 = vpack.c.b16 %v2732, %v2731
        %v2981 = vpack.c.b16 %v2734, %v2733
        %v2982 = vpack.c.b16 %v2736, %v2735
        %v2983 = vpack.c.b16 %v2738, %v2737
        %v2984 = vpack.c.b16 %v2740, %v2739
        %v2985 = vpack.c.b16 %v2742, %v2741
        %v2986 = vpack.c.b16 %v2744, %v2743
        %v2987 = vpack.c.b16 %v2746, %v2745
        %v2988 = vpack.c.b16 %v2748, %v2747
        %v2989 = vpack.c.b16 %v2750, %v2749
        %v2990 = vpack.c.b16 %v2752, %v2751
        %v2991 = vpack.c.b16 %v2754, %v2753
        %v2992 = vpack.c.b16 %v2756, %v2755
        %v2993 = vpack.c.b16 %v2758, %v2757
        %v2994 = vpack.c.b16 %v2760, %v2759
        %v2995 = vpack.c.b16 %v2762, %v2761
        %v2996 = vpack.c.b16 %v2764, %v2763
        %v2997 = vpack.c.b16 %v2766, %v2765
        %v2998 = vpack.c.b16 %v2768, %v2767
        %v2999 = vpack.c.b16 %v2770, %v2769
        %v3000 = vpack.c.b16 %v2772, %v2771
        %v3001 = vpack.c.b16 %v2774, %v2773
        %v3002 = vpack.c.b16 %v2776, %v2775
        %v3003 = vpack.c.b16 %v2778, %v2777
        %v3004 = vpack.c.b16 %v2780, %v2779
        %v3005 = vpack.c.b16 %v2782, %v2781
        %v3006 = vpack.c.b16 %v2784, %v2783
        %v3007 = vpack.c.b16 %v2786, %v2785
        %v3008 = vpack.c.b16 %v2788, %v2787
        %v3009 = vpack.c.b16 %v2790, %v2789
        %v3010 = vpack.c.b16 %v2792, %v2791
        %v3011 = vpack.c.b16 %v2794, %v2793
        %v3012 = vpack.c.b16 %v2796, %v2795
        %v3013 = vpack.c.b16 %v2798, %v2797
        %v3014 = vpack.c.b16 %v2800, %v2799
        %v3015 = vpack.c.b16 %v2802, %v2801
        %v3016 = vpack.c.b16 %v2804, %v2803
        %v3017 = vpack.c.b16 %v2806, %v2805
        %v3018 = vpack.c.b16 %v2808, %v2807
        %v3019 = vpack.c.b16 %v2810, %v2809
        %v3020 = vpack.c.b16 %v2812, %v2811
        %v3021 = vpack.c.b16 %v2814, %v2813
        %v3022 = vpack.c.b16 %v2816, %v2815
        %v3023 = vpack.c.b16 %v2818, %v2817
        %v3024 = vpack.c.b16 %v2820, %v2819
        %v3025 = vpack.c.b16 %v2822, %v2821
        %v3026 = vpack.c.b16 %v2824, %v2823
        %v3027 = vpack.c.b16 %v2826, %v2825
        %v3028 = vpack.c.b16 %v2828, %v2827
        %v3029 = vpack.c.b16 %v2830, %v2829
        %v3030 = vpack.c.b16 %v2832, %v2831
        %v3031 = vpack.c.b16 %v2834, %v2833
        %v3032 = vpack.c.b16 %v2836, %v2835
        %v3033 = vpack.c.b16 %v2838, %v2837
        %v3034 = vpack.c.b16 %v2840, %v2839
        %v3035 = vpack.c.b16 %v2842, %v2841
        %v3036 = vpack.c.b16 %v2844, %v2843
        %v3037 = vpack.c.b16 %v2846, %v2845
        %v3038 = vpack.c.b16 %v2848, %v2847
        %v3039 = vpack.c.b16 %v2850, %v2849
        %v3040 = vpack.c.b16 %v2852, %v2851
        %v3041 = vpack.c.b16 %v2854, %v2853
        %v3042 = vpack.c.b16 %v2856, %v2855
        %v3043 = vpack.c.b16 %v2858, %v2857
        %v3044 = vpack.c.b16 %v2860, %v2859
        %v3045 = vpack.c.b16 %v2862, %v2861
        %v3046 = vpack.c.b16 %v2864, %v2863
        %v3047 = vpack.c.b16 %v2866, %v2865
        %v3048 = vpack.c.b16 %v2868, %v2867
        %v3049 = vpack.c.b16 %v2870, %v2869
        %v3050 = vpack.c.b16 %v2872, %v2871
        %v3051 = vpack.c.b16 %v2874, %v2873
        %v3052 = vpack.c.b16 %v2876, %v2875
        %v3053 = vpack.c.b16 %v2878, %v2877
        %v3054 = vpack.c.b16 %v2880, %v2879
        %v3055 = vpack.c.b16 %v2882, %v2881
        %v3056 = vpack.c.b16 %v2884, %v2883
        %v3057 = vpack.c.b16 %v2886, %v2885
        %v3058 = vpack.c.b16 %v2888, %v2887
        %v3059 = vpack.c.b16 %v2890, %v2889
        %v3060 = vpack.c.b16 %v2892, %v2891
        %v3061 = vpack.c.b16 %v2894, %v2893
        %v3062 = vpack.c.b16 %v2896, %v2895
        %v3063 = vpack.c.b16 %v2898, %v2897
        %v3064 = vpack.c.b16 %v2900, %v2899
        %v3065 = vpack.c.b16 %v2902, %v2901
        %v3066 = vpack.c.b16 %v2904, %v2903
        %v3067 = vpack.c.b16 %v2906, %v2905
        %v3068 = vpack.c.b16 %v2908, %v2907
        %v3069 = vpack.c.b16 %v2910, %v2909
        %v3070 = vpack.c.b16 %v2912, %v2911
        %v3071 = vpack.c.b16 %v2914, %v2913
        %v3072 = vpack.c.b16 %v2916, %v2915
        %v3073 = vpack.c.b16 %v2918, %v2917
        %v3074 = vpack.c.b16 %v2920, %v2919
        %v3075 = vpack.c.b16 %v2922, %v2921
        %v3076 = vpack.c.b16 %v2924, %v2923
        %v3077 = vpack.c.b16 %v2926, %v2925
        %v3078 = vpack.c.b16 %v2928, %v2927
        %v3079 = vpack.c.b16 %v2930, %v2929
        %v3080 = vpack.c.b16 %v2932, %v2931
        %v3081 = vpack.c.b16 %v2934, %v2933
        %v3082 = vpack.c.b16 %v2936, %v2935
        %v3083 = vpack.c.b16 %v2938, %v2937
        %v3084 = vpack.c.b16 %v2940, %v2939
        %v3085 = vpack.c.b16 %v2942, %v2941
        %v3086 = vpack.c.b16 %v2944, %v2943
        %v3087 = vpack.c.b16 %v2946, %v2945
        %v3088 = vpack.c.b16 %v2948, %v2947
        %v3089 = vpack.c.b16 %v2950, %v2949
        %v3090 = vpack.c.b16 %v2952, %v2951
        %v3091 = vpack.c.b16 %v2954, %v2953
        %v3092 = vpack.c.b16 %v2956, %v2955
        %v3093 = vpack.c.b16 %v2958, %v2957
        %v3094 = vpack.c.b16 %v2960, %v2959
        %v3095 = vpack.c.b16 %v2962, %v2961
        %v3096 = vpack.c.b16 %v2964, %v2963
        %v3097 = vpack.c.b16 %v2966, %v2965
        %v3098 = vpack.c.b16 %v2968, %v2967
        %v3099 = vpack.c.b16 %v2970, %v2969
        %v3100 = vpack.c.b16 %v2972, %v2971
        %3229 = vmatprep.subr.bf16.mxu0 0
        %3230 = vmatpush1.bf16.msra.mxu0 %v2973
        %3231 = vmatprep.subr.bf16.mxu0 0
        %3232 = vmatpush1.bf16.msra.mxu0 %v2974
        %3233 = vmatprep.subr.bf16.mxu0 0
        %3234 = vmatpush1.bf16.msra.mxu0 %v2975
        %3235 = vmatprep.subr.bf16.mxu0 0
        %3236 = vmatpush1.bf16.msra.mxu0 %v2976
        %3237 = vmatprep.subr.bf16.mxu0 0
        %3238 = vmatpush1.bf16.msra.mxu0 %v2977
        %3239 = vmatprep.subr.bf16.mxu0 0
        %3240 = vmatpush1.bf16.msra.mxu0 %v2978
        %3241 = vmatprep.subr.bf16.mxu0 0
        %3242 = vmatpush1.bf16.msra.mxu0 %v2979
        %3243 = vmatprep.subr.bf16.mxu0 0
        %3244 = vmatpush1.bf16.msra.mxu0 %v2980
        %3245 = vmatprep.subr.bf16.mxu0 0
        %3246 = vmatpush1.bf16.msra.mxu0 %v2981
        %3247 = vmatprep.subr.bf16.mxu0 0
        %3248 = vmatpush1.bf16.msra.mxu0 %v2982
        %3249 = vmatprep.subr.bf16.mxu0 0
        %3250 = vmatpush1.bf16.msra.mxu0 %v2983
        %3251 = vmatprep.subr.bf16.mxu0 0
        %3252 = vmatpush1.bf16.msra.mxu0 %v2984
        %3253 = vmatprep.subr.bf16.mxu0 0
        %3254 = vmatpush1.bf16.msra.mxu0 %v2985
        %3255 = vmatprep.subr.bf16.mxu0 0
        %3256 = vmatpush1.bf16.msra.mxu0 %v2986
        %3257 = vmatprep.subr.bf16.mxu0 0
        %3258 = vmatpush1.bf16.msra.mxu0 %v2987
        %3259 = vmatprep.subr.bf16.mxu0 0
        %3260 = vmatpush1.bf16.msra.mxu0 %v2988
        %3261 = vmatprep.mubr.bf16.mxu0 %v2183
        %3262 = vmatmul.mubr.bf16.gmra.mrb[0].mxu0 %v2182
        %v3263 = vpop.f32.mrb[0].mxu0
        %v3264 = vadd.f32 %v2459, %v3263
        %v3265 = vpop.f32.mrb[0].mxu0
        %v3266 = vpop.f32.mrb[0].mxu0
        %v3267 = vpop.f32.mrb[0].mxu0
        %3268 = vdwg.mxu0
        %3269 = vmatprep.subr.bf16.mxu0 0
        %3270 = vmatpush1.bf16.msra.mxu0 %v2989
        %3271 = vmatprep.subr.bf16.mxu0 0
        %3272 = vmatpush1.bf16.msra.mxu0 %v2990
        %3273 = vmatprep.subr.bf16.mxu0 0
        %3274 = vmatpush1.bf16.msra.mxu0 %v2991
        %3275 = vmatprep.subr.bf16.mxu0 0
        %3276 = vmatpush1.bf16.msra.mxu0 %v2992
        %3277 = vmatprep.subr.bf16.mxu0 0
        %3278 = vmatpush1.bf16.msra.mxu0 %v2993
        %3279 = vmatprep.subr.bf16.mxu0 0
        %3280 = vmatpush1.bf16.msra.mxu0 %v2994
        %3281 = vmatprep.subr.bf16.mxu0 0
        %3282 = vmatpush1.bf16.msra.mxu0 %v2995
        %3283 = vmatprep.subr.bf16.mxu0 0
        %3284 = vmatpush1.bf16.msra.mxu0 %v2996
        %3285 = vmatprep.subr.bf16.mxu0 0
        %3286 = vmatpush1.bf16.msra.mxu0 %v2997
        %3287 = vmatprep.subr.bf16.mxu0 0
        %3288 = vmatpush1.bf16.msra.mxu0 %v2998
        %3289 = vmatprep.subr.bf16.mxu0 0
        %3290 = vmatpush1.bf16.msra.mxu0 %v2999
        %3291 = vmatprep.subr.bf16.mxu0 0
        %3292 = vmatpush1.bf16.msra.mxu0 %v3000
        %3293 = vmatprep.subr.bf16.mxu0 0
        %3294 = vmatpush1.bf16.msra.mxu0 %v3001
        %3295 = vmatprep.subr.bf16.mxu0 0
        %3296 = vmatpush1.bf16.msra.mxu0 %v3002
        %3297 = vmatprep.subr.bf16.mxu0 0
        %3298 = vmatpush1.bf16.msra.mxu0 %v3003
        %3299 = vmatprep.subr.bf16.mxu0 0
        %3300 = vmatpush1.bf16.msra.mxu0 %v3004
        %3301 = vmatprep.mubr.bf16.mxu0 %v2185
        %3302 = vmatmul.mubr.bf16.gmra.mrb[0].mxu0 %v2184
        %v3303 = vpop.f32.mrb[0].mxu0
        %v3304 = vadd.f32 %v3264, %v3303
        %v3305 = vpop.f32.mrb[0].mxu0
        %v3306 = vpop.f32.mrb[0].mxu0
        %v3307 = vpop.f32.mrb[0].mxu0
        %3308 = vdwg.mxu0
        %3309 = vmatprep.subr.bf16.mxu0 0
        %3310 = vmatpush1.bf16.msra.mxu0 %v3005
        %3311 = vmatprep.subr.bf16.mxu0 0
        %3312 = vmatpush1.bf16.msra.mxu0 %v3006
        %3313 = vmatprep.subr.bf16.mxu0 0
        %3314 = vmatpush1.bf16.msra.mxu0 %v3007
        %3315 = vmatprep.subr.bf16.mxu0 0
        %3316 = vmatpush1.bf16.msra.mxu0 %v3008
        %3317 = vmatprep.subr.bf16.mxu0 0
        %3318 = vmatpush1.bf16.msra.mxu0 %v3009
        %3319 = vmatprep.subr.bf16.mxu0 0
        %3320 = vmatpush1.bf16.msra.mxu0 %v3010
        %3321 = vmatprep.subr.bf16.mxu0 0
        %3322 = vmatpush1.bf16.msra.mxu0 %v3011
        %3323 = vmatprep.subr.bf16.mxu0 0
        %3324 = vmatpush1.bf16.msra.mxu0 %v3012
        %3325 = vmatprep.subr.bf16.mxu0 0
        %3326 = vmatpush1.bf16.msra.mxu0 %v3013
        %3327 = vmatprep.subr.bf16.mxu0 0
        %3328 = vmatpush1.bf16.msra.mxu0 %v3014
        %3329 = vmatprep.subr.bf16.mxu0 0
        %3330 = vmatpush1.bf16.msra.mxu0 %v3015
        %3331 = vmatprep.subr.bf16.mxu0 0
        %3332 = vmatpush1.bf16.msra.mxu0 %v3016
        %3333 = vmatprep.subr.bf16.mxu0 0
        %3334 = vmatpush1.bf16.msra.mxu0 %v3017
        %3335 = vmatprep.subr.bf16.mxu0 0
        %3336 = vmatpush1.bf16.msra.mxu0 %v3018
        %3337 = vmatprep.subr.bf16.mxu0 0
        %3338 = vmatpush1.bf16.msra.mxu0 %v3019
        %3339 = vmatprep.subr.bf16.mxu0 0
        %3340 = vmatpush1.bf16.msra.mxu0 %v3020
        %3341 = vmatprep.mubr.bf16.mxu0 %v2187
        %3342 = vmatmul.mubr.bf16.gmra.mrb[0].mxu0 %v2186
        %v3343 = vpop.f32.mrb[0].mxu0
        %v3344 = vadd.f32 %v3304, %v3343
        %v3345 = vpop.f32.mrb[0].mxu0
        %v3346 = vpop.f32.mrb[0].mxu0
        %v3347 = vpop.f32.mrb[0].mxu0
        %3348 = vdwg.mxu0
        %3349 = vmatprep.subr.bf16.mxu0 0
        %3350 = vmatpush1.bf16.msra.mxu0 %v3021
        %3351 = vmatprep.subr.bf16.mxu0 0
        %3352 = vmatpush1.bf16.msra.mxu0 %v3022
        %3353 = vmatprep.subr.bf16.mxu0 0
        %3354 = vmatpush1.bf16.msra.mxu0 %v3023
        %3355 = vmatprep.subr.bf16.mxu0 0
        %3356 = vmatpush1.bf16.msra.mxu0 %v3024
        %3357 = vmatprep.subr.bf16.mxu0 0
        %3358 = vmatpush1.bf16.msra.mxu0 %v3025
        %3359 = vmatprep.subr.bf16.mxu0 0
        %3360 = vmatpush1.bf16.msra.mxu0 %v3026
        %3361 = vmatprep.subr.bf16.mxu0 0
        %3362 = vmatpush1.bf16.msra.mxu0 %v3027
        %3363 = vmatprep.subr.bf16.mxu0 0
        %3364 = vmatpush1.bf16.msra.mxu0 %v3028
        %3365 = vmatprep.subr.bf16.mxu0 0
        %3366 = vmatpush1.bf16.msra.mxu0 %v3029
        %3367 = vmatprep.subr.bf16.mxu0 0
        %3368 = vmatpush1.bf16.msra.mxu0 %v3030
        %3369 = vmatprep.subr.bf16.mxu0 0
        %3370 = vmatpush1.bf16.msra.mxu0 %v3031
        %3371 = vmatprep.subr.bf16.mxu0 0
        %3372 = vmatpush1.bf16.msra.mxu0 %v3032
        %3373 = vmatprep.subr.bf16.mxu0 0
        %3374 = vmatpush1.bf16.msra.mxu0 %v3033
        %3375 = vmatprep.subr.bf16.mxu0 0
        %3376 = vmatpush1.bf16.msra.mxu0 %v3034
        %3377 = vmatprep.subr.bf16.mxu0 0
        %3378 = vmatpush1.bf16.msra.mxu0 %v3035
        %3379 = vmatprep.subr.bf16.mxu0 0
        %3380 = vmatpush1.bf16.msra.mxu0 %v3036
        %3381 = vmatprep.mubr.bf16.mxu0 %v2189
        %3382 = vmatmul.mubr.bf16.gmra.mrb[0].mxu0 %v2188
        %v3383 = vpop.f32.mrb[0].mxu0
        %v3384 = vadd.f32 %v3344, %v3383
        %v3385 = vpop.f32.mrb[0].mxu0
        %v3386 = vpop.f32.mrb[0].mxu0
        %v3387 = vpop.f32.mrb[0].mxu0
        %3388 = vdwg.mxu0
        %3389 = vmatprep.subr.bf16.mxu0 0
        %3390 = vmatpush1.bf16.msra.mxu0 %v3037
        %3391 = vmatprep.subr.bf16.mxu0 0
        %3392 = vmatpush1.bf16.msra.mxu0 %v3038
        %3393 = vmatprep.subr.bf16.mxu0 0
        %3394 = vmatpush1.bf16.msra.mxu0 %v3039
        %3395 = vmatprep.subr.bf16.mxu0 0
        %3396 = vmatpush1.bf16.msra.mxu0 %v3040
        %3397 = vmatprep.subr.bf16.mxu0 0
        %3398 = vmatpush1.bf16.msra.mxu0 %v3041
        %3399 = vmatprep.subr.bf16.mxu0 0
        %3400 = vmatpush1.bf16.msra.mxu0 %v3042
        %3401 = vmatprep.subr.bf16.mxu0 0
        %3402 = vmatpush1.bf16.msra.mxu0 %v3043
        %3403 = vmatprep.subr.bf16.mxu0 0
        %3404 = vmatpush1.bf16.msra.mxu0 %v3044
        %3405 = vmatprep.subr.bf16.mxu0 0
        %3406 = vmatpush1.bf16.msra.mxu0 %v3045
        %3407 = vmatprep.subr.bf16.mxu0 0
        %3408 = vmatpush1.bf16.msra.mxu0 %v3046
        %3409 = vmatprep.subr.bf16.mxu0 0
        %3410 = vmatpush1.bf16.msra.mxu0 %v3047
        %3411 = vmatprep.subr.bf16.mxu0 0
        %3412 = vmatpush1.bf16.msra.mxu0 %v3048
        %3413 = vmatprep.subr.bf16.mxu0 0
        %3414 = vmatpush1.bf16.msra.mxu0 %v3049
        %3415 = vmatprep.subr.bf16.mxu0 0
        %3416 = vmatpush1.bf16.msra.mxu0 %v3050
        %3417 = vmatprep.subr.bf16.mxu0 0
        %3418 = vmatpush1.bf16.msra.mxu0 %v3051
        %3419 = vmatprep.subr.bf16.mxu0 0
        %3420 = vmatpush1.bf16.msra.mxu0 %v3052
        %3421 = vmatprep.mubr.bf16.mxu0 %v2191
        %3422 = vmatmul.mubr.bf16.gmra.mrb[0].mxu0 %v2190
        %v3423 = vpop.f32.mrb[0].mxu0
        %v3424 = vadd.f32 %v3384, %v3423
        %v3425 = vpop.f32.mrb[0].mxu0
        %v3426 = vpop.f32.mrb[0].mxu0
        %v3427 = vpop.f32.mrb[0].mxu0
        %3428 = vdwg.mxu0
        %3429 = vmatprep.subr.bf16.mxu0 0
        %3430 = vmatpush1.bf16.msra.mxu0 %v3053
        %3431 = vmatprep.subr.bf16.mxu0 0
        %3432 = vmatpush1.bf16.msra.mxu0 %v3054
        %3433 = vmatprep.subr.bf16.mxu0 0
        %3434 = vmatpush1.bf16.msra.mxu0 %v3055
        %3435 = vmatprep.subr.bf16.mxu0 0
        %3436 = vmatpush1.bf16.msra.mxu0 %v3056
        %3437 = vmatprep.subr.bf16.mxu0 0
        %3438 = vmatpush1.bf16.msra.mxu0 %v3057
        %3439 = vmatprep.subr.bf16.mxu0 0
        %3440 = vmatpush1.bf16.msra.mxu0 %v3058
        %3441 = vmatprep.subr.bf16.mxu0 0
        %3442 = vmatpush1.bf16.msra.mxu0 %v3059
        %3443 = vmatprep.subr.bf16.mxu0 0
        %3444 = vmatpush1.bf16.msra.mxu0 %v3060
        %3445 = vmatprep.subr.bf16.mxu0 0
        %3446 = vmatpush1.bf16.msra.mxu0 %v3061
        %3447 = vmatprep.subr.bf16.mxu0 0
        %3448 = vmatpush1.bf16.msra.mxu0 %v3062
        %3449 = vmatprep.subr.bf16.mxu0 0
        %3450 = vmatpush1.bf16.msra.mxu0 %v3063
        %3451 = vmatprep.subr.bf16.mxu0 0
        %3452 = vmatpush1.bf16.msra.mxu0 %v3064
        %3453 = vmatprep.subr.bf16.mxu0 0
        %3454 = vmatpush1.bf16.msra.mxu0 %v3065
        %3455 = vmatprep.subr.bf16.mxu0 0
        %3456 = vmatpush1.bf16.msra.mxu0 %v3066
        %3457 = vmatprep.subr.bf16.mxu0 0
        %3458 = vmatpush1.bf16.msra.mxu0 %v3067
        %3459 = vmatprep.subr.bf16.mxu0 0
        %3460 = vmatpush1.bf16.msra.mxu0 %v3068
        %3461 = vmatprep.mubr.bf16.mxu0 %v2193
        %3462 = vmatmul.mubr.bf16.gmra.mrb[0].mxu0 %v2192
        %v3463 = vpop.f32.mrb[0].mxu0
        %v3464 = vadd.f32 %v3424, %v3463
        %v3465 = vpop.f32.mrb[0].mxu0
        %v3466 = vpop.f32.mrb[0].mxu0
        %v3467 = vpop.f32.mrb[0].mxu0
        %3468 = vdwg.mxu0
        %3469 = vmatprep.subr.bf16.mxu0 0
        %3470 = vmatpush1.bf16.msra.mxu0 %v3069
        %3471 = vmatprep.subr.bf16.mxu0 0
        %3472 = vmatpush1.bf16.msra.mxu0 %v3070
        %3473 = vmatprep.subr.bf16.mxu0 0
        %3474 = vmatpush1.bf16.msra.mxu0 %v3071
        %3475 = vmatprep.subr.bf16.mxu0 0
        %3476 = vmatpush1.bf16.msra.mxu0 %v3072
        %3477 = vmatprep.subr.bf16.mxu0 0
        %3478 = vmatpush1.bf16.msra.mxu0 %v3073
        %3479 = vmatprep.subr.bf16.mxu0 0
        %3480 = vmatpush1.bf16.msra.mxu0 %v3074
        %3481 = vmatprep.subr.bf16.mxu0 0
        %3482 = vmatpush1.bf16.msra.mxu0 %v3075
        %3483 = vmatprep.subr.bf16.mxu0 0
        %3484 = vmatpush1.bf16.msra.mxu0 %v3076
        %3485 = vmatprep.subr.bf16.mxu0 0
        %3486 = vmatpush1.bf16.msra.mxu0 %v3077
        %3487 = vmatprep.subr.bf16.mxu0 0
        %3488 = vmatpush1.bf16.msra.mxu0 %v3078
        %3489 = vmatprep.subr.bf16.mxu0 0
        %3490 = vmatpush1.bf16.msra.mxu0 %v3079
        %3491 = vmatprep.subr.bf16.mxu0 0
        %3492 = vmatpush1.bf16.msra.mxu0 %v3080
        %3493 = vmatprep.subr.bf16.mxu0 0
        %3494 = vmatpush1.bf16.msra.mxu0 %v3081
        %3495 = vmatprep.subr.bf16.mxu0 0
        %3496 = vmatpush1.bf16.msra.mxu0 %v3082
        %3497 = vmatprep.subr.bf16.mxu0 0
        %3498 = vmatpush1.bf16.msra.mxu0 %v3083
        %3499 = vmatprep.subr.bf16.mxu0 0
        %3500 = vmatpush1.bf16.msra.mxu0 %v3084
        %3501 = vmatprep.mubr.bf16.mxu0 %v2195
        %3502 = vmatmul.mubr.bf16.gmra.mrb[0].mxu0 %v2194
        %v3503 = vpop.f32.mrb[0].mxu0
        %v3504 = vadd.f32 %v3464, %v3503
        %v3505 = vpop.f32.mrb[0].mxu0
        %v3506 = vpop.f32.mrb[0].mxu0
        %v3507 = vpop.f32.mrb[0].mxu0
        %3508 = vdwg.mxu0
        %3509 = vmatprep.subr.bf16.mxu0 0
        %3510 = vmatpush1.bf16.msra.mxu0 %v3085
        %3511 = vmatprep.subr.bf16.mxu0 0
        %3512 = vmatpush1.bf16.msra.mxu0 %v3086
        %3513 = vmatprep.subr.bf16.mxu0 0
        %3514 = vmatpush1.bf16.msra.mxu0 %v3087
        %3515 = vmatprep.subr.bf16.mxu0 0
        %3516 = vmatpush1.bf16.msra.mxu0 %v3088
        %3517 = vmatprep.subr.bf16.mxu0 0
        %3518 = vmatpush1.bf16.msra.mxu0 %v3089
        %3519 = vmatprep.subr.bf16.mxu0 0
        %3520 = vmatpush1.bf16.msra.mxu0 %v3090
        %3521 = vmatprep.subr.bf16.mxu0 0
        %3522 = vmatpush1.bf16.msra.mxu0 %v3091
        %3523 = vmatprep.subr.bf16.mxu0 0
        %3524 = vmatpush1.bf16.msra.mxu0 %v3092
        %3525 = vmatprep.subr.bf16.mxu0 0
        %3526 = vmatpush1.bf16.msra.mxu0 %v3093
        %3527 = vmatprep.subr.bf16.mxu0 0
        %3528 = vmatpush1.bf16.msra.mxu0 %v3094
        %3529 = vmatprep.subr.bf16.mxu0 0
        %3530 = vmatpush1.bf16.msra.mxu0 %v3095
        %3531 = vmatprep.subr.bf16.mxu0 0
        %3532 = vmatpush1.bf16.msra.mxu0 %v3096
        %3533 = vmatprep.subr.bf16.mxu0 0
        %3534 = vmatpush1.bf16.msra.mxu0 %v3097
        %3535 = vmatprep.subr.bf16.mxu0 0
        %3536 = vmatpush1.bf16.msra.mxu0 %v3098
        %3537 = vmatprep.subr.bf16.mxu0 0
        %3538 = vmatpush1.bf16.msra.mxu0 %v3099
        %3539 = vmatprep.subr.bf16.mxu0 0
        %3540 = vmatpush1.bf16.msra.mxu0 %v3100
        %3541 = vmatprep.mubr.bf16.mxu0 %v2197
        %3542 = vmatmul.mubr.bf16.gmra.mrb[0].mxu0 %v2196
        %v3543 = vpop.f32.mrb[0].mxu0
        %v3544 = vadd.f32 %v3504, %v3543
        %v3545 = vpop.f32.mrb[0].mxu0
        %v3546 = vpop.f32.mrb[0].mxu0
        %v3547 = vpop.f32.mrb[0].mxu0
        %3548 = vdwg.mxu0
        %v3549 = vadd.f32 %v3544, %v1557
        %v3550 = vld [vmem:[%s625] sm:$0x1]
        %v3551 = vld [vmem:[%s628] sm:$0x1]
        %v3552 = vsel %vm765, %v3549, 0.0
        %3553 = vadd.xlane.f32.xlu0 %v3552
        %v3554 = vpop.xlane.xlu0 %3553
        %v3555 = vmul.f32 %v3554, %v1533
        %v3556 = vsub.f32 %v3549, %v3555
        %v3557 = vmul.f32 %v3556, %v3556
        %v3558 = vsel %vm765, %v3557, 0.0
        %3559 = vadd.xlane.f32.xlu0 %v3558
        %v3560 = vpop.xlane.xlu0 %3559
        %v3561 = vmul.f32 %v3560, %v1533
        %v3562 = vadd.f32 %v3561, 1e-05
        %v3563 = vrsqrt.pop %v3562
        %v3564 = vmul.f32 %v3556, %v3563
        %v3566 = vlaneseq
        %v3567 = vshrl.u32 %v3566, 7
        %v3568 = vsub.s32 0, %v3567
        %v3569 = vrot.slane %v3550, %v3568
        %v3571 = vmul.f32 %v3564, %v3569
        %v3573 = vlaneseq
        %v3574 = vshrl.u32 %v3573, 7
        %v3575 = vsub.s32 0, %v3574
        %v3576 = vrot.slane %v3551, %v3575
        %v3578 = vadd.f32 %v3571, %v3576
        %3579 = vst.msk [vmem:[#allocation2] sm:$0xff] %vm765, %v3578
        %p3580 = scmp.eq.s32.totalorder %s32, 5
        // Predicated region
        $region77: #{encoder_forward.1} parent=71 // pred_check
          %p3581 = pneg %p3580
        $region78: #{encoder_forward.1} parent=71 // pred_check_branch
          %3583 = sbr.rel (%p3581) target = $region80
        $region79: #{encoder_forward.1} parent=71 // pred_region
          %3584 = vst.msk [vmem:[%s582] sm:$0xff] %vm765, %v3578
        $region80: #{encoder_forward.1} parent=71 // pred_fallthru
          _
        %s3585 = sand.u32 %s380, 1
        %s3586 = scalar_lea.sflag [#allocation4], %s3585
        %s3587 = sand.u32 %s380, 1
        %s3588 = smul.addr %s3587, 8
        %s3589 = scalar_lea.vmem [#allocation3], %s3588
        // Predicated region
        $region81: #{encoder_forward.1} parent=71 // pred_check
          %p3590 = pneg %p390
        $region82: #{encoder_forward.1} parent=71 // pred_check_branch
          %3592 = sbr.rel (%p3590) target = $region84
        $region83: #{encoder_forward.1} parent=71 // pred_region
          %s3594 = ssub.s32 128, 128
          %3595 = vsyncadd %s3586, %s3594
          %s3596 = smul.addr %s31, 128
          %s3597 = scalar_lea.hbm %s13, %s3596
          %s3599 = sshll.u32 %s3589, 4
          %s3600 = int_to_ptr.vmem [resolvable:$true] %s3599
          %3602 = dma.vmem_to_hbm [thread:$0]  %s3600, 128, %s3597, %s3586
        $region84: #{encoder_forward.1} parent=71 // pred_fallthru
          _
      $region72: #{encoder_forward.1} parent=5 // pred_fallthru
        _
      %p3603 = scmp.le.s32.totalorder 2, %s22
      // Predicated region
      $region85: #{encoder_forward.1} parent=5 // pred_check
        %p3604 = pneg %p3603
      $region86: #{encoder_forward.1} parent=5 // pred_check_branch
        %3606 = sbr.rel (%p3604) target = $region88
      $region87: #{encoder_forward.1} parent=5 // pred_region
        %s3607 = ssub.s32 %s22, 2
        // Predicated region
        $region89: #{encoder_forward.1} parent=87 // pred_check
          %p3608 = pneg %p396
        $region90: #{encoder_forward.1} parent=87 // pred_check_branch
          %3610 = sbr.rel (%p3608) target = $region92
        $region91: #{encoder_forward.1} parent=87 // pred_region
          %s3611 = sand.u32 %s381, 1
          %s3612 = scalar_lea.sflag [#allocation4], %s3611
          %s3613 = sand.u32 %s381, 1
          %s3614 = smul.addr %s3613, 8
          %s3615 = scalar_lea.vmem [#allocation3], %s3614
          %3616 = dma.done %s3612, 128
        $region92: #{encoder_forward.1} parent=87 // pred_fallthru
          _
      $region88: #{encoder_forward.1} parent=5 // pred_fallthru
        _
    $region6: #{encoder_forward.1} parent=1 // loop_footer
      %s26 = sadd.s32 1, %s22
    $region7: #{encoder_forward.1} parent=1 // loop_footer_branch
      %21 = sbr.rel target = $region3
    $region8: #{encoder_forward.1} parent=1 // loop_exit
      _
    %3617 = vsyncpa [#allocation4], 1
    %s3618 = scalar_lea.sflag [#allocation4], 1
    %3619 = vsyncpa %s3618, 1

</llo_original>
